<compile_context>
chip_gen: v5e
topology: v5e:2x2
jax: 0.10.0
libtpu: 0.0.40
codegen_flags: <defaults>
</compile_context>

<pallas_src>
import functools

import jax
import jax.numpy as jnp
from jax.experimental import pallas as pl
from jax.experimental.pallas import tpu as pltpu

SCALE = 4.0            # InputEmbedding scale (folded into the embedding weight)
NAN = float("nan")
NORMAL_PAD = 128       # lane-dense width for the Hidden2Normal output (sliced to 5 outside)


def _round_up(x, m):
    return (x + m - 1) // m * m


# ----------------------------------------------------------------------------
# Fused Pallas kernel: encoder loop -> adding_noise -> decoder loop
# ----------------------------------------------------------------------------
def _fused_kernel(observed_ref, primary_ref, zpad_ref,
                  wemb_ref, bemb_ref,
                  enc_wih_ref, enc_whh_ref, enc_b_ref,
                  dec_wih_ref, dec_whh_ref, dec_b_ref,
                  wm_ref, bm_ref, wn_ref, bn_ref,
                  normal_out_ref, pos_out_ref, feat_out_ref,
                  *, obs_length, n_predict, hidden_pad, no_noise):
    Hp = hidden_pad
    obs = observed_ref[...]                              # [T_obs, N, 2]
    num_tracks = obs.shape[1]

    def lstm_step(obs1, obs2, h, c, wih_ref, whh_ref, b_ref):
        # track_mask = ~(isnan(obs1[:,0]) | isnan(obs2[:,0]))
        mask = jnp.logical_not(jnp.logical_or(jnp.isnan(obs1[:, 0:1]),
                                              jnp.isnan(obs2[:, 0:1])))   # [N, 1]
        vel = obs2 - obs1
        # InputEmbedding (scale already folded into wemb)
        x = jnp.maximum(
            jnp.dot(vel, wemb_ref[...], preferred_element_type=jnp.float32)
            + bemb_ref[...], 0.0)                                          # [N, E]
        # LSTMCell gates (i, f, g, o); bih + bhh merged into b
        gates = (jnp.dot(x, wih_ref[...], preferred_element_type=jnp.float32)
                 + jnp.dot(h, whh_ref[...], preferred_element_type=jnp.float32)
                 + b_ref[...])                                             # [N, 4*Hp]
        i_g = jax.nn.sigmoid(gates[:, 0 * Hp:1 * Hp])
        f_g = jax.nn.sigmoid(gates[:, 1 * Hp:2 * Hp])
        g_g = jnp.tanh(gates[:, 2 * Hp:3 * Hp])
        o_g = jax.nn.sigmoid(gates[:, 3 * Hp:4 * Hp])
        c_new = f_g * c + i_g * g_g
        h_new = o_g * jnp.tanh(c_new)
        # Hidden2Normal (lane-dense: 128-wide, only cols 0..4 are meaningful)
        raw = (jnp.dot(h_new, wn_ref[...], preferred_element_type=jnp.float32)
               + bn_ref[...])                                              # [N, 128]
        col = jax.lax.broadcasted_iota(jnp.int32, raw.shape, 1)
        sig = jax.nn.sigmoid(raw)
        normal = jnp.where(col < 2, raw,
                           jnp.where(col < 4, 0.01 + 0.2 * sig, 0.7 * sig))
        # masked tracks keep previous hidden/cell state and output NaN
        h_out = jnp.where(mask, h_new, h)
        c_out = jnp.where(mask, c_new, c)
        normal_out = jnp.where(mask, normal, jnp.full_like(normal, NAN))
        return h_out, c_out, normal_out

    h = jnp.zeros((num_tracks, Hp), jnp.float32)
    c = jnp.zeros((num_tracks, Hp), jnp.float32)

    positions = []          # traced [N, 2] values for the position recurrence
    pos_idx = 0
    if obs_length == 2:
        positions.append(obs[obs_length - 1])
        pos_out_ref[pos_idx] = positions[-1]
        pos_idx += 1

    # -------------------- encoder --------------------
    t_out = 0
    for t in range(obs_length - 1):
        h, c, normal = lstm_step(obs[t], obs[t + 1], h, c,
                                 enc_wih_ref, enc_whh_ref, enc_b_ref)
        pos = obs[t + 1] + normal[:, 0:2]
        positions.append(pos)
        normal_out_ref[t_out] = normal
        pos_out_ref[pos_idx] = pos
        t_out += 1
        pos_idx += 1

    # -------------------- adding_noise --------------------
    # new_h = [ ReLU(h @ Wm + bm) (cols 0..H-nd-1) | z (cols H-nd..H-1) | 0 padding ]
    if not no_noise:
        ctx = jnp.maximum(
            jnp.dot(h, wm_ref[...], preferred_element_type=jnp.float32)
            + bm_ref[...], 0.0)                          # [N, Hp]; zero outside first H-nd cols
        h = ctx + zpad_ref[...]                          # same noise broadcast to all tracks

    feat_out_ref[0] = h

    # -------------------- decoder --------------------
    primary = primary_ref[...]                           # [N, 1] in {0, 1}
    for k in range(n_predict - 1):
        if k == 0:
            # obs1 = observed[-1] with primary pedestrians replaced by own predictions
            obs1 = jnp.where(primary > 0.0, positions[-2], obs[obs_length - 1])
        else:
            obs1 = positions[-2]
        obs2 = positions[-1]
        h, c, normal = lstm_step(obs1, obs2, h, c,
                                 dec_wih_ref, dec_whh_ref, dec_b_ref)
        pos = obs2 + normal[:, 0:2]
        positions.append(pos)
        normal_out_ref[t_out] = normal
        pos_out_ref[pos_idx] = pos
        feat_out_ref[k + 1] = h
        t_out += 1
        pos_idx += 1


def make_generator_fn(obs_length, num_tracks, embedding_dim, hidden_dim,
                      noise_dim, n_predict, no_noise=False):
    del noise_dim
    Hp = _round_up(hidden_dim, 128)
    E = embedding_dim
    N = num_tracks
    t_total = (obs_length - 1) + (n_predict - 1)
    t_pos = t_total + (1 if obs_length == 2 else 0)

    vmem = pl.BlockSpec(memory_space=pltpu.MemorySpace.VMEM)
    kernel = functools.partial(_fused_kernel, obs_length=obs_length,
                               n_predict=n_predict, hidden_pad=Hp,
                               no_noise=bool(no_noise))

    # rough cost estimate for XLA scheduling hints
    flops = (t_total * 2 * N * (2 * E + E * 4 * Hp + Hp * 4 * Hp + Hp * NORMAL_PAD)
             + 2 * N * Hp * Hp)
    transcendentals = t_total * N * (5 * Hp + NORMAL_PAD)
    weight_bytes = 4 * (2 * E + E
                        + 2 * (E * 4 * Hp + Hp * 4 * Hp + 4 * Hp)
                        + Hp * Hp + Hp + Hp * NORMAL_PAD + NORMAL_PAD)
    io_bytes = 4 * (obs_length * N * 2 + N + Hp
                    + t_total * N * NORMAL_PAD + t_pos * N * 2 + n_predict * N * Hp)

    return pl.pallas_call(
        kernel,
        out_shape=(jax.ShapeDtypeStruct((t_total, N, NORMAL_PAD), jnp.float32),
                   jax.ShapeDtypeStruct((t_pos, N, 2), jnp.float32),
                   jax.ShapeDtypeStruct((n_predict, N, Hp), jnp.float32)),
        in_specs=[vmem] * 15,
        out_specs=(vmem, vmem, vmem),
        compiler_params=pltpu.CompilerParams(vmem_limit_bytes=32 * 1024 * 1024),
        cost_estimate=pl.CostEstimate(flops=int(flops),
                                      transcendentals=int(transcendentals),
                                      bytes_accessed=int(weight_bytes + io_bytes)),
    )


# ----------------------------------------------------------------------------
# Parameter initialization (deterministic, synthetic) and lane-aligned packing
# ----------------------------------------------------------------------------
def init_params(key, embedding_dim=32, hidden_dim=64, noise_dim=8, no_noise=False):
    E, H, nd = embedding_dim, hidden_dim, noise_dim
    ks = jax.random.split(key, 14)

    def w(k, shape, scale=0.1):
        return (scale * jax.random.normal(k, shape)).astype(jnp.float32)

    return {
        "embedding_dim": E, "hidden_dim": H, "noise_dim": nd, "no_noise": no_noise,
        # InputEmbedding Linear(2, E): stored transposed [2, E], bias [1, E]
        "wemb": w(ks[0], (2, E)), "bemb": w(ks[1], (1, E)),
        # Hidden2Normal Linear(H, 5): stored transposed [H, 5], bias [1, 5]
        "wn": w(ks[2], (H, 5)), "bn": w(ks[3], (1, 5)),
        # mlp_decoder_context Linear(H, H - nd): transposed [H, H-nd], bias [1, H-nd]
        "wm": w(ks[4], (H, H - nd)), "bm": w(ks[5], (1, H - nd)),
        # encoder / decoder LSTMCells: W_ih.T [E, 4H], W_hh.T [H, 4H] (gate order i,f,g,o)
        "encoder": {"wih": w(ks[6], (E, 4 * H)), "whh": w(ks[7], (H, 4 * H)),
                    "bih": w(ks[8], (1, 4 * H)), "bhh": w(ks[9], (1, 4 * H), 0.05)},
        "decoder": {"wih": w(ks[10], (E, 4 * H)), "whh": w(ks[11], (H, 4 * H)),
                    "bih": w(ks[12], (1, 4 * H)), "bhh": w(ks[13], (1, 4 * H), 0.05)},
    }


def pack_params(params):
    """Pad hidden dim to a lane-aligned Hp, merge biases, fold the input scale."""
    H, nd = params["hidden_dim"], params["noise_dim"]
    Hp = _round_up(H, 128)

    def pad_gate_cols(w):                       # [..., 4H] -> [..., 4Hp], per-gate
        out = jnp.zeros(w.shape[:-1] + (4 * Hp,), jnp.float32)
        for g in range(4):
            out = out.at[..., g * Hp:g * Hp + H].set(w[..., g * H:(g + 1) * H])
        return out

    def pad_rows(w, rows):                      # [r, c] -> [rows, c]
        return jnp.zeros((rows, w.shape[1]), jnp.float32).at[:w.shape[0], :].set(w)

    def cell(p):
        wih = pad_gate_cols(p["wih"])                        # [E, 4Hp]
        whh = pad_rows(pad_gate_cols(p["whh"]), Hp)          # [Hp, 4Hp]
        b = pad_gate_cols(p["bih"] + p["bhh"])               # [1, 4Hp]   merged bias
        return wih, whh, b

    wn = jnp.zeros((Hp, NORMAL_PAD), jnp.float32).at[:H, :5].set(params["wn"])
    bn = jnp.zeros((1, NORMAL_PAD), jnp.float32).at[:, :5].set(params["bn"])
    wm = jnp.zeros((Hp, Hp), jnp.float32).at[:H, :H - nd].set(params["wm"])
    bm = jnp.zeros((1, Hp), jnp.float32).at[:, :H - nd].set(params["bm"])

    return {
        "Hp": Hp,
        "wemb": (SCALE * params["wemb"]).astype(jnp.float32),   # scale folded in
        "bemb": params["bemb"].astype(jnp.float32),
        "enc": cell(params["encoder"]),
        "dec": cell(params["decoder"]),
        "wm": wm, "bm": bm, "wn": wn, "bn": bn,
    }


# ----------------------------------------------------------------------------
# LSTMGenerator.forward  (pool=None, goal_flag=False, test mode with n_predict)
# ----------------------------------------------------------------------------
def lstm_generator_forward(params, observed, goals, batch_split, n_predict,
                           noise_key):
    del goals  # goal_flag = False -> goals unused in the forward pass
    obs_length, num_tracks, _ = observed.shape
    E = params["embedding_dim"]
    H = params["hidden_dim"]
    nd = params["noise_dim"]

    packed = pack_params(params)
    Hp = packed["Hp"]

    # primary-track mask from batch_split (static python list)
    primary = jnp.zeros((num_tracks, 1), jnp.float32)
    for pid in batch_split[:-1]:
        primary = primary.at[int(pid), 0].set(1.0)

    # noise, placed directly into the padded hidden layout:
    #   [ ctx (H-nd cols) | z (nd cols) | zero padding (Hp-H cols) ]
    noise = jax.random.normal(noise_key, (nd,), dtype=jnp.float32)
    z_pad = jnp.zeros((1, Hp), jnp.float32).at[0, H - nd:H].set(noise)

    fused = make_generator_fn(obs_length, num_tracks, E, H, nd, n_predict,
                              no_noise=params["no_noise"])
    enc_wih, enc_whh, enc_b = packed["enc"]
    dec_wih, dec_whh, dec_b = packed["dec"]

    normal_pad, pred_scene, feat_pad = fused(
        observed.astype(jnp.float32), primary, z_pad,
        packed["wemb"], packed["bemb"],
        enc_wih, enc_whh, enc_b,
        dec_wih, dec_whh, dec_b,
        packed["wm"], packed["bm"], packed["wn"], packed["bn"])

    rel_pred_scene = normal_pad[:, :, :5]       # [T, N, 5]
    feat_scene = feat_pad[:, :, :H]             # [n_predict, N, H]
    return rel_pred_scene, pred_scene, feat_scene


# ----------------------------------------------------------------------------
if __name__ == "__main__":
    key = jax.random.PRNGKey(0)
    k_par, k_obs, k_goal, k_noise = jax.random.split(key, 4)

    obs_length, num_tracks = 4, 8
    embedding_dim, hidden_dim, noise_dim = 32, 64, 8
    n_predict = 3

    params = init_params(k_par, embedding_dim, hidden_dim, noise_dim)

    observed = jax.random.normal(k_obs, (obs_length, num_tracks, 2),
                                 dtype=jnp.float32)
    goals = jax.random.normal(k_goal, (num_tracks, 2), dtype=jnp.float32)
    batch_split = [0, num_tracks]   # single scene

    rel_pred_scene, pred_scene, feat_scene = lstm_generator_forward(
        params, observed, goals, batch_split, n_predict, k_noise)

    jax.block_until_ready((rel_pred_scene, pred_scene, feat_scene))
    t_total = obs_length - 1 + n_predict - 1
    assert rel_pred_scene.shape == (t_total, num_tracks, 5)
    assert pred_scene.shape == (t_total, num_tracks, 2)
    assert feat_scene.shape == (n_predict, num_tracks, hidden_dim)
    assert bool(jnp.all(jnp.isfinite(rel_pred_scene)))
    print("KERNEL_OK")
</pallas_src>

<mosaic_0001>
module attributes {stable_mosaic.version = 11 : i64} {
  func.func @_fused_kernel(%arg0: memref<4x8x2xf32, #tpu.memory_space<vmem>>, %arg1: memref<8x1xf32, #tpu.memory_space<vmem>>, %arg2: memref<1x128xf32, #tpu.memory_space<vmem>>, %arg3: memref<2x32xf32, #tpu.memory_space<vmem>>, %arg4: memref<1x32xf32, #tpu.memory_space<vmem>>, %arg5: memref<32x512xf32, #tpu.memory_space<vmem>>, %arg6: memref<128x512xf32, #tpu.memory_space<vmem>>, %arg7: memref<1x512xf32, #tpu.memory_space<vmem>>, %arg8: memref<32x512xf32, #tpu.memory_space<vmem>>, %arg9: memref<128x512xf32, #tpu.memory_space<vmem>>, %arg10: memref<1x512xf32, #tpu.memory_space<vmem>>, %arg11: memref<128x128xf32, #tpu.memory_space<vmem>>, %arg12: memref<1x128xf32, #tpu.memory_space<vmem>>, %arg13: memref<128x128xf32, #tpu.memory_space<vmem>>, %arg14: memref<1x128xf32, #tpu.memory_space<vmem>>, %arg15: memref<5x8x128xf32, #tpu.memory_space<vmem>>, %arg16: memref<5x8x2xf32, #tpu.memory_space<vmem>>, %arg17: memref<3x8x128xf32, #tpu.memory_space<vmem>>) attributes {dimension_semantics = [], scalar_prefetch = 0 : i64, scratch_operands = 0 : i64, tpu.core_type = #tpu.core_type<tc>} {
    %c0 = arith.constant 0 : index
    %c0_0 = arith.constant 0 : index
    %c0_1 = arith.constant 0 : index
    %0 = vector.load %arg0[%c0, %c0_0, %c0_1] : memref<4x8x2xf32, #tpu.memory_space<vmem>>, vector<4x8x2xf32>
    %cst = arith.constant 0.000000e+00 : f32
    %1 = vector.broadcast %cst : f32 to vector<8x128xf32>
    %cst_2 = arith.constant 0.000000e+00 : f32
    %2 = vector.broadcast %cst_2 : f32 to vector<8x128xf32>
    %3 = vector.extract_strided_slice %0 {offsets = [0, 0, 0], sizes = [1, 8, 2], strides = [1, 1, 1]} : vector<4x8x2xf32> to vector<1x8x2xf32>
    %4 = vector.shape_cast %3 : vector<1x8x2xf32> to vector<8x2xf32>
    %5 = vector.extract_strided_slice %0 {offsets = [1, 0, 0], sizes = [1, 8, 2], strides = [1, 1, 1]} : vector<4x8x2xf32> to vector<1x8x2xf32>
    %6 = vector.shape_cast %5 : vector<1x8x2xf32> to vector<8x2xf32>
    %7 = vector.extract_strided_slice %4 {offsets = [0, 0], sizes = [8, 1], strides = [1, 1]} : vector<8x2xf32> to vector<8x1xf32>
    %8 = arith.cmpf one, %7, %7 : vector<8x1xf32>
    %9 = vector.extract_strided_slice %6 {offsets = [0, 0], sizes = [8, 1], strides = [1, 1]} : vector<8x2xf32> to vector<8x1xf32>
    %10 = arith.cmpf one, %9, %9 : vector<8x1xf32>
    %11 = arith.ori %8, %10 : vector<8x1xi1>
    %cst_3 = arith.constant dense<true> : vector<8x1xi1>
    %12 = arith.xori %11, %cst_3 : vector<8x1xi1>
    %13 = arith.subf %6, %4 : vector<8x2xf32>
    %c0_4 = arith.constant 0 : index
    %c0_5 = arith.constant 0 : index
    %14 = vector.load %arg3[%c0_4, %c0_5] : memref<2x32xf32, #tpu.memory_space<vmem>>, vector<2x32xf32>
    %cst_6 = arith.constant dense<0.000000e+00> : vector<8x32xf32>
    %15 = tpu.matmul %13, %14, %cst_6 {dimension_numbers = #tpu.dot_dimension_numbers<[1], [0], [0], [1], [0, 0, 1, 1], [], []>} : vector<8x2xf32>, vector<2x32xf32>, vector<8x32xf32> -> vector<8x32xf32>
    %c0_7 = arith.constant 0 : index
    %c0_8 = arith.constant 0 : index
    %16 = vector.load %arg4[%c0_7, %c0_8] : memref<1x32xf32, #tpu.memory_space<vmem>>, vector<1x32xf32>
    %17 = vector.broadcast %16 : vector<1x32xf32> to vector<8x32xf32>
    %18 = arith.addf %15, %17 : vector<8x32xf32>
    %cst_9 = arith.constant 0.000000e+00 : f32
    %19 = vector.broadcast %cst_9 : f32 to vector<8x32xf32>
    %20 = arith.maximumf %18, %19 : vector<8x32xf32>
    %c0_10 = arith.constant 0 : index
    %c0_11 = arith.constant 0 : index
    %21 = vector.load %arg5[%c0_10, %c0_11] : memref<32x512xf32, #tpu.memory_space<vmem>>, vector<32x512xf32>
    %cst_12 = arith.constant dense<0.000000e+00> : vector<8x512xf32>
    %22 = tpu.matmul %20, %21, %cst_12 {dimension_numbers = #tpu.dot_dimension_numbers<[1], [0], [0], [1], [0, 0, 1, 1], [], []>} : vector<8x32xf32>, vector<32x512xf32>, vector<8x512xf32> -> vector<8x512xf32>
    %c0_13 = arith.constant 0 : index
    %c0_14 = arith.constant 0 : index
    %23 = vector.load %arg6[%c0_13, %c0_14] : memref<128x512xf32, #tpu.memory_space<vmem>>, vector<128x512xf32>
    %cst_15 = arith.constant dense<0.000000e+00> : vector<8x512xf32>
    %24 = tpu.matmul %1, %23, %cst_15 {dimension_numbers = #tpu.dot_dimension_numbers<[1], [0], [0], [1], [0, 0, 1, 1], [], []>} : vector<8x128xf32>, vector<128x512xf32>, vector<8x512xf32> -> vector<8x512xf32>
    %25 = arith.addf %22, %24 : vector<8x512xf32>
    %c0_16 = arith.constant 0 : index
    %c0_17 = arith.constant 0 : index
    %26 = vector.load %arg7[%c0_16, %c0_17] : memref<1x512xf32, #tpu.memory_space<vmem>>, vector<1x512xf32>
    %27 = vector.broadcast %26 : vector<1x512xf32> to vector<8x512xf32>
    %28 = arith.addf %25, %27 : vector<8x512xf32>
    %29 = vector.extract_strided_slice %28 {offsets = [0, 0], sizes = [8, 128], strides = [1, 1]} : vector<8x512xf32> to vector<8x128xf32>
    %30 = arith.negf %29 : vector<8x128xf32>
    %31 = math.exp %30 : vector<8x128xf32>
    %cst_18 = arith.constant 1.000000e+00 : f32
    %32 = vector.broadcast %cst_18 : f32 to vector<8x128xf32>
    %33 = arith.addf %32, %31 : vector<8x128xf32>
    %34 = arith.divf %32, %33 : vector<8x128xf32>
    %35 = vector.extract_strided_slice %28 {offsets = [0, 128], sizes = [8, 128], strides = [1, 1]} : vector<8x512xf32> to vector<8x128xf32>
    %36 = arith.negf %35 : vector<8x128xf32>
    %37 = math.exp %36 : vector<8x128xf32>
    %cst_19 = arith.constant 1.000000e+00 : f32
    %38 = vector.broadcast %cst_19 : f32 to vector<8x128xf32>
    %39 = arith.addf %38, %37 : vector<8x128xf32>
    %40 = arith.divf %38, %39 : vector<8x128xf32>
    %41 = vector.extract_strided_slice %28 {offsets = [0, 256], sizes = [8, 128], strides = [1, 1]} : vector<8x512xf32> to vector<8x128xf32>
    %42 = math.tanh %41 : vector<8x128xf32>
    %43 = vector.extract_strided_slice %28 {offsets = [0, 384], sizes = [8, 128], strides = [1, 1]} : vector<8x512xf32> to vector<8x128xf32>
    %44 = arith.negf %43 : vector<8x128xf32>
    %45 = math.exp %44 : vector<8x128xf32>
    %cst_20 = arith.constant 1.000000e+00 : f32
    %46 = vector.broadcast %cst_20 : f32 to vector<8x128xf32>
    %47 = arith.addf %46, %45 : vector<8x128xf32>
    %48 = arith.divf %46, %47 : vector<8x128xf32>
    %49 = arith.mulf %40, %2 : vector<8x128xf32>
    %50 = arith.mulf %34, %42 : vector<8x128xf32>
    %51 = arith.addf %49, %50 : vector<8x128xf32>
    %52 = math.tanh %51 : vector<8x128xf32>
    %53 = arith.mulf %48, %52 : vector<8x128xf32>
    %c0_21 = arith.constant 0 : index
    %c0_22 = arith.constant 0 : index
    %54 = vector.load %arg13[%c0_21, %c0_22] : memref<128x128xf32, #tpu.memory_space<vmem>>, vector<128x128xf32>
    %cst_23 = arith.constant dense<0.000000e+00> : vector<8x128xf32>
    %55 = tpu.matmul %53, %54, %cst_23 {dimension_numbers = #tpu.dot_dimension_numbers<[1], [0], [0], [1], [0, 0, 1, 1], [], []>} : vector<8x128xf32>, vector<128x128xf32>, vector<8x128xf32> -> vector<8x128xf32>
    %c0_24 = arith.constant 0 : index
    %c0_25 = arith.constant 0 : index
    %56 = vector.load %arg14[%c0_24, %c0_25] : memref<1x128xf32, #tpu.memory_space<vmem>>, vector<1x128xf32>
    %57 = vector.broadcast %56 : vector<1x128xf32> to vector<8x128xf32>
    %58 = arith.addf %55, %57 : vector<8x128xf32>
    %59 = tpu.iota {dimensions = array<i32: 1>} : vector<8x128xi32>
    %60 = arith.negf %58 : vector<8x128xf32>
    %61 = math.exp %60 : vector<8x128xf32>
    %cst_26 = arith.constant 1.000000e+00 : f32
    %62 = vector.broadcast %cst_26 : f32 to vector<8x128xf32>
    %63 = arith.addf %62, %61 : vector<8x128xf32>
    %64 = arith.divf %62, %63 : vector<8x128xf32>
    %c2_i32 = arith.constant 2 : i32
    %65 = vector.broadcast %c2_i32 : i32 to vector<8x128xi32>
    %66 = arith.cmpi slt, %59, %65 : vector<8x128xi32>
    %c4_i32 = arith.constant 4 : i32
    %67 = vector.broadcast %c4_i32 : i32 to vector<8x128xi32>
    %68 = arith.cmpi slt, %59, %67 : vector<8x128xi32>
    %cst_27 = arith.constant 2.000000e-01 : f32
    %69 = vector.broadcast %cst_27 : f32 to vector<8x128xf32>
    %70 = arith.mulf %69, %64 : vector<8x128xf32>
    %cst_28 = arith.constant 0.00999999977 : f32
    %71 = vector.broadcast %cst_28 : f32 to vector<8x128xf32>
    %72 = arith.addf %71, %70 : vector<8x128xf32>
    %cst_29 = arith.constant 0.699999988 : f32
    %73 = vector.broadcast %cst_29 : f32 to vector<8x128xf32>
    %74 = arith.mulf %73, %64 : vector<8x128xf32>
    %75 = arith.select %68, %72, %74 : vector<8x128xi1>, vector<8x128xf32>
    %76 = arith.select %66, %58, %75 : vector<8x128xi1>, vector<8x128xf32>
    %77 = vector.shape_cast %12 : vector<8x1xi1> to vector<8x1xi1>
    %78 = vector.broadcast %77 : vector<8x1xi1> to vector<8x128xi1>
    %79 = arith.select %78, %53, %1 : vector<8x128xi1>, vector<8x128xf32>
    %80 = vector.shape_cast %12 : vector<8x1xi1> to vector<8x1xi1>
    %81 = vector.broadcast %80 : vector<8x1xi1> to vector<8x128xi1>
    %82 = arith.select %81, %51, %2 : vector<8x128xi1>, vector<8x128xf32>
    %cst_30 = arith.constant 0x7FC00000 : f32
    %83 = vector.broadcast %cst_30 : f32 to vector<8x128xf32>
    %84 = vector.shape_cast %12 : vector<8x1xi1> to vector<8x1xi1>
    %85 = vector.broadcast %84 : vector<8x1xi1> to vector<8x128xi1>
    %86 = arith.select %85, %76, %83 : vector<8x128xi1>, vector<8x128xf32>
    %87 = vector.extract_strided_slice %0 {offsets = [1, 0, 0], sizes = [1, 8, 2], strides = [1, 1, 1]} : vector<4x8x2xf32> to vector<1x8x2xf32>
    %88 = vector.shape_cast %87 : vector<1x8x2xf32> to vector<8x2xf32>
    %89 = vector.extract_strided_slice %86 {offsets = [0, 0], sizes = [8, 2], strides = [1, 1]} : vector<8x128xf32> to vector<8x2xf32>
    %90 = arith.addf %88, %89 : vector<8x2xf32>
    %c0_31 = arith.constant 0 : index
    %c0_32 = arith.constant 0 : index
    %c0_33 = arith.constant 0 : index
    %91 = vector.load %arg15[%c0_31, %c0_32, %c0_33] : memref<5x8x128xf32, #tpu.memory_space<vmem>>, vector<1x8x128xf32>
    %92 = vector.shape_cast %91 : vector<1x8x128xf32> to vector<8x128xf32>
    %93 = vector.shape_cast %86 : vector<8x128xf32> to vector<1x8x128xf32>
    tpu.vector_store %arg15[%c0_31, %c0_32, %c0_33], %93 {strides = array<i32>} : memref<5x8x128xf32, #tpu.memory_space<vmem>>, vector<1x8x128xf32>,
    %c0_34 = arith.constant 0 : index
    %c0_35 = arith.constant 0 : index
    %c0_36 = arith.constant 0 : index
    %94 = vector.load %arg16[%c0_34, %c0_35, %c0_36] : memref<5x8x2xf32, #tpu.memory_space<vmem>>, vector<1x8x2xf32>
    %95 = vector.shape_cast %94 : vector<1x8x2xf32> to vector<8x2xf32>
    %96 = vector.shape_cast %90 : vector<8x2xf32> to vector<1x8x2xf32>
    tpu.vector_store %arg16[%c0_34, %c0_35, %c0_36], %96 {strides = array<i32>} : memref<5x8x2xf32, #tpu.memory_space<vmem>>, vector<1x8x2xf32>,
    %97 = vector.extract_strided_slice %0 {offsets = [1, 0, 0], sizes = [1, 8, 2], strides = [1, 1, 1]} : vector<4x8x2xf32> to vector<1x8x2xf32>
    %98 = vector.shape_cast %97 : vector<1x8x2xf32> to vector<8x2xf32>
    %99 = vector.extract_strided_slice %0 {offsets = [2, 0, 0], sizes = [1, 8, 2], strides = [1, 1, 1]} : vector<4x8x2xf32> to vector<1x8x2xf32>
    %100 = vector.shape_cast %99 : vector<1x8x2xf32> to vector<8x2xf32>
    %101 = vector.extract_strided_slice %98 {offsets = [0, 0], sizes = [8, 1], strides = [1, 1]} : vector<8x2xf32> to vector<8x1xf32>
    %102 = arith.cmpf one, %101, %101 : vector<8x1xf32>
    %103 = vector.extract_strided_slice %100 {offsets = [0, 0], sizes = [8, 1], strides = [1, 1]} : vector<8x2xf32> to vector<8x1xf32>
    %104 = arith.cmpf one, %103, %103 : vector<8x1xf32>
    %105 = arith.ori %102, %104 : vector<8x1xi1>
    %cst_37 = arith.constant dense<true> : vector<8x1xi1>
    %106 = arith.xori %105, %cst_37 : vector<8x1xi1>
    %107 = arith.subf %100, %98 : vector<8x2xf32>
    %c0_38 = arith.constant 0 : index
    %c0_39 = arith.constant 0 : index
    %108 = vector.load %arg3[%c0_38, %c0_39] : memref<2x32xf32, #tpu.memory_space<vmem>>, vector<2x32xf32>
    %cst_40 = arith.constant dense<0.000000e+00> : vector<8x32xf32>
    %109 = tpu.matmul %107, %108, %cst_40 {dimension_numbers = #tpu.dot_dimension_numbers<[1], [0], [0], [1], [0, 0, 1, 1], [], []>} : vector<8x2xf32>, vector<2x32xf32>, vector<8x32xf32> -> vector<8x32xf32>
    %c0_41 = arith.constant 0 : index
    %c0_42 = arith.constant 0 : index
    %110 = vector.load %arg4[%c0_41, %c0_42] : memref<1x32xf32, #tpu.memory_space<vmem>>, vector<1x32xf32>
    %111 = vector.broadcast %110 : vector<1x32xf32> to vector<8x32xf32>
    %112 = arith.addf %109, %111 : vector<8x32xf32>
    %cst_43 = arith.constant 0.000000e+00 : f32
    %113 = vector.broadcast %cst_43 : f32 to vector<8x32xf32>
    %114 = arith.maximumf %112, %113 : vector<8x32xf32>
    %c0_44 = arith.constant 0 : index
    %c0_45 = arith.constant 0 : index
    %115 = vector.load %arg5[%c0_44, %c0_45] : memref<32x512xf32, #tpu.memory_space<vmem>>, vector<32x512xf32>
    %cst_46 = arith.constant dense<0.000000e+00> : vector<8x512xf32>
    %116 = tpu.matmul %114, %115, %cst_46 {dimension_numbers = #tpu.dot_dimension_numbers<[1], [0], [0], [1], [0, 0, 1, 1], [], []>} : vector<8x32xf32>, vector<32x512xf32>, vector<8x512xf32> -> vector<8x512xf32>
    %c0_47 = arith.constant 0 : index
    %c0_48 = arith.constant 0 : index
    %117 = vector.load %arg6[%c0_47, %c0_48] : memref<128x512xf32, #tpu.memory_space<vmem>>, vector<128x512xf32>
    %cst_49 = arith.constant dense<0.000000e+00> : vector<8x512xf32>
    %118 = tpu.matmul %79, %117, %cst_49 {dimension_numbers = #tpu.dot_dimension_numbers<[1], [0], [0], [1], [0, 0, 1, 1], [], []>} : vector<8x128xf32>, vector<128x512xf32>, vector<8x512xf32> -> vector<8x512xf32>
    %119 = arith.addf %116, %118 : vector<8x512xf32>
    %c0_50 = arith.constant 0 : index
    %c0_51 = arith.constant 0 : index
    %120 = vector.load %arg7[%c0_50, %c0_51] : memref<1x512xf32, #tpu.memory_space<vmem>>, vector<1x512xf32>
    %121 = vector.broadcast %120 : vector<1x512xf32> to vector<8x512xf32>
    %122 = arith.addf %119, %121 : vector<8x512xf32>
    %123 = vector.extract_strided_slice %122 {offsets = [0, 0], sizes = [8, 128], strides = [1, 1]} : vector<8x512xf32> to vector<8x128xf32>
    %124 = arith.negf %123 : vector<8x128xf32>
    %125 = math.exp %124 : vector<8x128xf32>
    %cst_52 = arith.constant 1.000000e+00 : f32
    %126 = vector.broadcast %cst_52 : f32 to vector<8x128xf32>
    %127 = arith.addf %126, %125 : vector<8x128xf32>
    %128 = arith.divf %126, %127 : vector<8x128xf32>
    %129 = vector.extract_strided_slice %122 {offsets = [0, 128], sizes = [8, 128], strides = [1, 1]} : vector<8x512xf32> to vector<8x128xf32>
    %130 = arith.negf %129 : vector<8x128xf32>
    %131 = math.exp %130 : vector<8x128xf32>
    %cst_53 = arith.constant 1.000000e+00 : f32
    %132 = vector.broadcast %cst_53 : f32 to vector<8x128xf32>
    %133 = arith.addf %132, %131 : vector<8x128xf32>
    %134 = arith.divf %132, %133 : vector<8x128xf32>
    %135 = vector.extract_strided_slice %122 {offsets = [0, 256], sizes = [8, 128], strides = [1, 1]} : vector<8x512xf32> to vector<8x128xf32>
    %136 = math.tanh %135 : vector<8x128xf32>
    %137 = vector.extract_strided_slice %122 {offsets = [0, 384], sizes = [8, 128], strides = [1, 1]} : vector<8x512xf32> to vector<8x128xf32>
    %138 = arith.negf %137 : vector<8x128xf32>
    %139 = math.exp %138 : vector<8x128xf32>
    %cst_54 = arith.constant 1.000000e+00 : f32
    %140 = vector.broadcast %cst_54 : f32 to vector<8x128xf32>
    %141 = arith.addf %140, %139 : vector<8x128xf32>
    %142 = arith.divf %140, %141 : vector<8x128xf32>
    %143 = arith.mulf %134, %82 : vector<8x128xf32>
    %144 = arith.mulf %128, %136 : vector<8x128xf32>
    %145 = arith.addf %143, %144 : vector<8x128xf32>
    %146 = math.tanh %145 : vector<8x128xf32>
    %147 = arith.mulf %142, %146 : vector<8x128xf32>
    %c0_55 = arith.constant 0 : index
    %c0_56 = arith.constant 0 : index
    %148 = vector.load %arg13[%c0_55, %c0_56] : memref<128x128xf32, #tpu.memory_space<vmem>>, vector<128x128xf32>
    %cst_57 = arith.constant dense<0.000000e+00> : vector<8x128xf32>
    %149 = tpu.matmul %147, %148, %cst_57 {dimension_numbers = #tpu.dot_dimension_numbers<[1], [0], [0], [1], [0, 0, 1, 1], [], []>} : vector<8x128xf32>, vector<128x128xf32>, vector<8x128xf32> -> vector<8x128xf32>
    %c0_58 = arith.constant 0 : index
    %c0_59 = arith.constant 0 : index
    %150 = vector.load %arg14[%c0_58, %c0_59] : memref<1x128xf32, #tpu.memory_space<vmem>>, vector<1x128xf32>
    %151 = vector.broadcast %150 : vector<1x128xf32> to vector<8x128xf32>
    %152 = arith.addf %149, %151 : vector<8x128xf32>
    %153 = tpu.iota {dimensions = array<i32: 1>} : vector<8x128xi32>
    %154 = arith.negf %152 : vector<8x128xf32>
    %155 = math.exp %154 : vector<8x128xf32>
    %cst_60 = arith.constant 1.000000e+00 : f32
    %156 = vector.broadcast %cst_60 : f32 to vector<8x128xf32>
    %157 = arith.addf %156, %155 : vector<8x128xf32>
    %158 = arith.divf %156, %157 : vector<8x128xf32>
    %c2_i32_61 = arith.constant 2 : i32
    %159 = vector.broadcast %c2_i32_61 : i32 to vector<8x128xi32>
    %160 = arith.cmpi slt, %153, %159 : vector<8x128xi32>
    %c4_i32_62 = arith.constant 4 : i32
    %161 = vector.broadcast %c4_i32_62 : i32 to vector<8x128xi32>
    %162 = arith.cmpi slt, %153, %161 : vector<8x128xi32>
    %cst_63 = arith.constant 2.000000e-01 : f32
    %163 = vector.broadcast %cst_63 : f32 to vector<8x128xf32>
    %164 = arith.mulf %163, %158 : vector<8x128xf32>
    %cst_64 = arith.constant 0.00999999977 : f32
    %165 = vector.broadcast %cst_64 : f32 to vector<8x128xf32>
    %166 = arith.addf %165, %164 : vector<8x128xf32>
    %cst_65 = arith.constant 0.699999988 : f32
    %167 = vector.broadcast %cst_65 : f32 to vector<8x128xf32>
    %168 = arith.mulf %167, %158 : vector<8x128xf32>
    %169 = arith.select %162, %166, %168 : vector<8x128xi1>, vector<8x128xf32>
    %170 = arith.select %160, %152, %169 : vector<8x128xi1>, vector<8x128xf32>
    %171 = vector.shape_cast %106 : vector<8x1xi1> to vector<8x1xi1>
    %172 = vector.broadcast %171 : vector<8x1xi1> to vector<8x128xi1>
    %173 = arith.select %172, %147, %79 : vector<8x128xi1>, vector<8x128xf32>
    %174 = vector.shape_cast %106 : vector<8x1xi1> to vector<8x1xi1>
    %175 = vector.broadcast %174 : vector<8x1xi1> to vector<8x128xi1>
    %176 = arith.select %175, %145, %82 : vector<8x128xi1>, vector<8x128xf32>
    %cst_66 = arith.constant 0x7FC00000 : f32
    %177 = vector.broadcast %cst_66 : f32 to vector<8x128xf32>
    %178 = vector.shape_cast %106 : vector<8x1xi1> to vector<8x1xi1>
    %179 = vector.broadcast %178 : vector<8x1xi1> to vector<8x128xi1>
    %180 = arith.select %179, %170, %177 : vector<8x128xi1>, vector<8x128xf32>
    %181 = vector.extract_strided_slice %0 {offsets = [2, 0, 0], sizes = [1, 8, 2], strides = [1, 1, 1]} : vector<4x8x2xf32> to vector<1x8x2xf32>
    %182 = vector.shape_cast %181 : vector<1x8x2xf32> to vector<8x2xf32>
    %183 = vector.extract_strided_slice %180 {offsets = [0, 0], sizes = [8, 2], strides = [1, 1]} : vector<8x128xf32> to vector<8x2xf32>
    %184 = arith.addf %182, %183 : vector<8x2xf32>
    %c1 = arith.constant 1 : index
    %c0_67 = arith.constant 0 : index
    %c0_68 = arith.constant 0 : index
    %185 = vector.load %arg15[%c1, %c0_67, %c0_68] : memref<5x8x128xf32, #tpu.memory_space<vmem>>, vector<1x8x128xf32>
    %186 = vector.shape_cast %185 : vector<1x8x128xf32> to vector<8x128xf32>
    %187 = vector.shape_cast %180 : vector<8x128xf32> to vector<1x8x128xf32>
    tpu.vector_store %arg15[%c1, %c0_67, %c0_68], %187 {strides = array<i32>} : memref<5x8x128xf32, #tpu.memory_space<vmem>>, vector<1x8x128xf32>,
    %c1_69 = arith.constant 1 : index
    %c0_70 = arith.constant 0 : index
    %c0_71 = arith.constant 0 : index
    %188 = vector.load %arg16[%c1_69, %c0_70, %c0_71] : memref<5x8x2xf32, #tpu.memory_space<vmem>>, vector<1x8x2xf32>
    %189 = vector.shape_cast %188 : vector<1x8x2xf32> to vector<8x2xf32>
    %190 = vector.shape_cast %184 : vector<8x2xf32> to vector<1x8x2xf32>
    tpu.vector_store %arg16[%c1_69, %c0_70, %c0_71], %190 {strides = array<i32>} : memref<5x8x2xf32, #tpu.memory_space<vmem>>, vector<1x8x2xf32>,
    %191 = vector.extract_strided_slice %0 {offsets = [2, 0, 0], sizes = [1, 8, 2], strides = [1, 1, 1]} : vector<4x8x2xf32> to vector<1x8x2xf32>
    %192 = vector.shape_cast %191 : vector<1x8x2xf32> to vector<8x2xf32>
    %193 = vector.extract_strided_slice %0 {offsets = [3, 0, 0], sizes = [1, 8, 2], strides = [1, 1, 1]} : vector<4x8x2xf32> to vector<1x8x2xf32>
    %194 = vector.shape_cast %193 : vector<1x8x2xf32> to vector<8x2xf32>
    %195 = vector.extract_strided_slice %192 {offsets = [0, 0], sizes = [8, 1], strides = [1, 1]} : vector<8x2xf32> to vector<8x1xf32>
    %196 = arith.cmpf one, %195, %195 : vector<8x1xf32>
    %197 = vector.extract_strided_slice %194 {offsets = [0, 0], sizes = [8, 1], strides = [1, 1]} : vector<8x2xf32> to vector<8x1xf32>
    %198 = arith.cmpf one, %197, %197 : vector<8x1xf32>
    %199 = arith.ori %196, %198 : vector<8x1xi1>
    %cst_72 = arith.constant dense<true> : vector<8x1xi1>
    %200 = arith.xori %199, %cst_72 : vector<8x1xi1>
    %201 = arith.subf %194, %192 : vector<8x2xf32>
    %c0_73 = arith.constant 0 : index
    %c0_74 = arith.constant 0 : index
    %202 = vector.load %arg3[%c0_73, %c0_74] : memref<2x32xf32, #tpu.memory_space<vmem>>, vector<2x32xf32>
    %cst_75 = arith.constant dense<0.000000e+00> : vector<8x32xf32>
    %203 = tpu.matmul %201, %202, %cst_75 {dimension_numbers = #tpu.dot_dimension_numbers<[1], [0], [0], [1], [0, 0, 1, 1], [], []>} : vector<8x2xf32>, vector<2x32xf32>, vector<8x32xf32> -> vector<8x32xf32>
    %c0_76 = arith.constant 0 : index
    %c0_77 = arith.constant 0 : index
    %204 = vector.load %arg4[%c0_76, %c0_77] : memref<1x32xf32, #tpu.memory_space<vmem>>, vector<1x32xf32>
    %205 = vector.broadcast %204 : vector<1x32xf32> to vector<8x32xf32>
    %206 = arith.addf %203, %205 : vector<8x32xf32>
    %cst_78 = arith.constant 0.000000e+00 : f32
    %207 = vector.broadcast %cst_78 : f32 to vector<8x32xf32>
    %208 = arith.maximumf %206, %207 : vector<8x32xf32>
    %c0_79 = arith.constant 0 : index
    %c0_80 = arith.constant 0 : index
    %209 = vector.load %arg5[%c0_79, %c0_80] : memref<32x512xf32, #tpu.memory_space<vmem>>, vector<32x512xf32>
    %cst_81 = arith.constant dense<0.000000e+00> : vector<8x512xf32>
    %210 = tpu.matmul %208, %209, %cst_81 {dimension_numbers = #tpu.dot_dimension_numbers<[1], [0], [0], [1], [0, 0, 1, 1], [], []>} : vector<8x32xf32>, vector<32x512xf32>, vector<8x512xf32> -> vector<8x512xf32>
    %c0_82 = arith.constant 0 : index
    %c0_83 = arith.constant 0 : index
    %211 = vector.load %arg6[%c0_82, %c0_83] : memref<128x512xf32, #tpu.memory_space<vmem>>, vector<128x512xf32>
    %cst_84 = arith.constant dense<0.000000e+00> : vector<8x512xf32>
    %212 = tpu.matmul %173, %211, %cst_84 {dimension_numbers = #tpu.dot_dimension_numbers<[1], [0], [0], [1], [0, 0, 1, 1], [], []>} : vector<8x128xf32>, vector<128x512xf32>, vector<8x512xf32> -> vector<8x512xf32>
    %213 = arith.addf %210, %212 : vector<8x512xf32>
    %c0_85 = arith.constant 0 : index
    %c0_86 = arith.constant 0 : index
    %214 = vector.load %arg7[%c0_85, %c0_86] : memref<1x512xf32, #tpu.memory_space<vmem>>, vector<1x512xf32>
    %215 = vector.broadcast %214 : vector<1x512xf32> to vector<8x512xf32>
    %216 = arith.addf %213, %215 : vector<8x512xf32>
    %217 = vector.extract_strided_slice %216 {offsets = [0, 0], sizes = [8, 128], strides = [1, 1]} : vector<8x512xf32> to vector<8x128xf32>
    %218 = arith.negf %217 : vector<8x128xf32>
    %219 = math.exp %218 : vector<8x128xf32>
    %cst_87 = arith.constant 1.000000e+00 : f32
    %220 = vector.broadcast %cst_87 : f32 to vector<8x128xf32>
    %221 = arith.addf %220, %219 : vector<8x128xf32>
    %222 = arith.divf %220, %221 : vector<8x128xf32>
    %223 = vector.extract_strided_slice %216 {offsets = [0, 128], sizes = [8, 128], strides = [1, 1]} : vector<8x512xf32> to vector<8x128xf32>
    %224 = arith.negf %223 : vector<8x128xf32>
    %225 = math.exp %224 : vector<8x128xf32>
    %cst_88 = arith.constant 1.000000e+00 : f32
    %226 = vector.broadcast %cst_88 : f32 to vector<8x128xf32>
    %227 = arith.addf %226, %225 : vector<8x128xf32>
    %228 = arith.divf %226, %227 : vector<8x128xf32>
    %229 = vector.extract_strided_slice %216 {offsets = [0, 256], sizes = [8, 128], strides = [1, 1]} : vector<8x512xf32> to vector<8x128xf32>
    %230 = math.tanh %229 : vector<8x128xf32>
    %231 = vector.extract_strided_slice %216 {offsets = [0, 384], sizes = [8, 128], strides = [1, 1]} : vector<8x512xf32> to vector<8x128xf32>
    %232 = arith.negf %231 : vector<8x128xf32>
    %233 = math.exp %232 : vector<8x128xf32>
    %cst_89 = arith.constant 1.000000e+00 : f32
    %234 = vector.broadcast %cst_89 : f32 to vector<8x128xf32>
    %235 = arith.addf %234, %233 : vector<8x128xf32>
    %236 = arith.divf %234, %235 : vector<8x128xf32>
    %237 = arith.mulf %228, %176 : vector<8x128xf32>
    %238 = arith.mulf %222, %230 : vector<8x128xf32>
    %239 = arith.addf %237, %238 : vector<8x128xf32>
    %240 = math.tanh %239 : vector<8x128xf32>
    %241 = arith.mulf %236, %240 : vector<8x128xf32>
    %c0_90 = arith.constant 0 : index
    %c0_91 = arith.constant 0 : index
    %242 = vector.load %arg13[%c0_90, %c0_91] : memref<128x128xf32, #tpu.memory_space<vmem>>, vector<128x128xf32>
    %cst_92 = arith.constant dense<0.000000e+00> : vector<8x128xf32>
    %243 = tpu.matmul %241, %242, %cst_92 {dimension_numbers = #tpu.dot_dimension_numbers<[1], [0], [0], [1], [0, 0, 1, 1], [], []>} : vector<8x128xf32>, vector<128x128xf32>, vector<8x128xf32> -> vector<8x128xf32>
    %c0_93 = arith.constant 0 : index
    %c0_94 = arith.constant 0 : index
    %244 = vector.load %arg14[%c0_93, %c0_94] : memref<1x128xf32, #tpu.memory_space<vmem>>, vector<1x128xf32>
    %245 = vector.broadcast %244 : vector<1x128xf32> to vector<8x128xf32>
    %246 = arith.addf %243, %245 : vector<8x128xf32>
    %247 = tpu.iota {dimensions = array<i32: 1>} : vector<8x128xi32>
    %248 = arith.negf %246 : vector<8x128xf32>
    %249 = math.exp %248 : vector<8x128xf32>
    %cst_95 = arith.constant 1.000000e+00 : f32
    %250 = vector.broadcast %cst_95 : f32 to vector<8x128xf32>
    %251 = arith.addf %250, %249 : vector<8x128xf32>
    %252 = arith.divf %250, %251 : vector<8x128xf32>
    %c2_i32_96 = arith.constant 2 : i32
    %253 = vector.broadcast %c2_i32_96 : i32 to vector<8x128xi32>
    %254 = arith.cmpi slt, %247, %253 : vector<8x128xi32>
    %c4_i32_97 = arith.constant 4 : i32
    %255 = vector.broadcast %c4_i32_97 : i32 to vector<8x128xi32>
    %256 = arith.cmpi slt, %247, %255 : vector<8x128xi32>
    %cst_98 = arith.constant 2.000000e-01 : f32
    %257 = vector.broadcast %cst_98 : f32 to vector<8x128xf32>
    %258 = arith.mulf %257, %252 : vector<8x128xf32>
    %cst_99 = arith.constant 0.00999999977 : f32
    %259 = vector.broadcast %cst_99 : f32 to vector<8x128xf32>
    %260 = arith.addf %259, %258 : vector<8x128xf32>
    %cst_100 = arith.constant 0.699999988 : f32
    %261 = vector.broadcast %cst_100 : f32 to vector<8x128xf32>
    %262 = arith.mulf %261, %252 : vector<8x128xf32>
    %263 = arith.select %256, %260, %262 : vector<8x128xi1>, vector<8x128xf32>
    %264 = arith.select %254, %246, %263 : vector<8x128xi1>, vector<8x128xf32>
    %265 = vector.shape_cast %200 : vector<8x1xi1> to vector<8x1xi1>
    %266 = vector.broadcast %265 : vector<8x1xi1> to vector<8x128xi1>
    %267 = arith.select %266, %241, %173 : vector<8x128xi1>, vector<8x128xf32>
    %268 = vector.shape_cast %200 : vector<8x1xi1> to vector<8x1xi1>
    %269 = vector.broadcast %268 : vector<8x1xi1> to vector<8x128xi1>
    %270 = arith.select %269, %239, %176 : vector<8x128xi1>, vector<8x128xf32>
    %cst_101 = arith.constant 0x7FC00000 : f32
    %271 = vector.broadcast %cst_101 : f32 to vector<8x128xf32>
    %272 = vector.shape_cast %200 : vector<8x1xi1> to vector<8x1xi1>
    %273 = vector.broadcast %272 : vector<8x1xi1> to vector<8x128xi1>
    %274 = arith.select %273, %264, %271 : vector<8x128xi1>, vector<8x128xf32>
    %275 = vector.extract_strided_slice %0 {offsets = [3, 0, 0], sizes = [1, 8, 2], strides = [1, 1, 1]} : vector<4x8x2xf32> to vector<1x8x2xf32>
    %276 = vector.shape_cast %275 : vector<1x8x2xf32> to vector<8x2xf32>
    %277 = vector.extract_strided_slice %274 {offsets = [0, 0], sizes = [8, 2], strides = [1, 1]} : vector<8x128xf32> to vector<8x2xf32>
    %278 = arith.addf %276, %277 : vector<8x2xf32>
    %c2 = arith.constant 2 : index
    %c0_102 = arith.constant 0 : index
    %c0_103 = arith.constant 0 : index
    %279 = vector.load %arg15[%c2, %c0_102, %c0_103] : memref<5x8x128xf32, #tpu.memory_space<vmem>>, vector<1x8x128xf32>
    %280 = vector.shape_cast %279 : vector<1x8x128xf32> to vector<8x128xf32>
    %281 = vector.shape_cast %274 : vector<8x128xf32> to vector<1x8x128xf32>
    tpu.vector_store %arg15[%c2, %c0_102, %c0_103], %281 {strides = array<i32>} : memref<5x8x128xf32, #tpu.memory_space<vmem>>, vector<1x8x128xf32>,
    %c2_104 = arith.constant 2 : index
    %c0_105 = arith.constant 0 : index
    %c0_106 = arith.constant 0 : index
    %282 = vector.load %arg16[%c2_104, %c0_105, %c0_106] : memref<5x8x2xf32, #tpu.memory_space<vmem>>, vector<1x8x2xf32>
    %283 = vector.shape_cast %282 : vector<1x8x2xf32> to vector<8x2xf32>
    %284 = vector.shape_cast %278 : vector<8x2xf32> to vector<1x8x2xf32>
    tpu.vector_store %arg16[%c2_104, %c0_105, %c0_106], %284 {strides = array<i32>} : memref<5x8x2xf32, #tpu.memory_space<vmem>>, vector<1x8x2xf32>,
    %c0_107 = arith.constant 0 : index
    %c0_108 = arith.constant 0 : index
    %285 = vector.load %arg11[%c0_107, %c0_108] : memref<128x128xf32, #tpu.memory_space<vmem>>, vector<128x128xf32>
    %cst_109 = arith.constant dense<0.000000e+00> : vector<8x128xf32>
    %286 = tpu.matmul %267, %285, %cst_109 {dimension_numbers = #tpu.dot_dimension_numbers<[1], [0], [0], [1], [0, 0, 1, 1], [], []>} : vector<8x128xf32>, vector<128x128xf32>, vector<8x128xf32> -> vector<8x128xf32>
    %c0_110 = arith.constant 0 : index
    %c0_111 = arith.constant 0 : index
    %287 = vector.load %arg12[%c0_110, %c0_111] : memref<1x128xf32, #tpu.memory_space<vmem>>, vector<1x128xf32>
    %288 = vector.broadcast %287 : vector<1x128xf32> to vector<8x128xf32>
    %289 = arith.addf %286, %288 : vector<8x128xf32>
    %cst_112 = arith.constant 0.000000e+00 : f32
    %290 = vector.broadcast %cst_112 : f32 to vector<8x128xf32>
    %291 = arith.maximumf %289, %290 : vector<8x128xf32>
    %c0_113 = arith.constant 0 : index
    %c0_114 = arith.constant 0 : index
    %292 = vector.load %arg2[%c0_113, %c0_114] : memref<1x128xf32, #tpu.memory_space<vmem>>, vector<1x128xf32>
    %293 = vector.broadcast %292 : vector<1x128xf32> to vector<8x128xf32>
    %294 = arith.addf %291, %293 : vector<8x128xf32>
    %c0_115 = arith.constant 0 : index
    %c0_116 = arith.constant 0 : index
    %c0_117 = arith.constant 0 : index
    %295 = vector.load %arg17[%c0_115, %c0_116, %c0_117] : memref<3x8x128xf32, #tpu.memory_space<vmem>>, vector<1x8x128xf32>
    %296 = vector.shape_cast %295 : vector<1x8x128xf32> to vector<8x128xf32>
    %297 = vector.shape_cast %294 : vector<8x128xf32> to vector<1x8x128xf32>
    tpu.vector_store %arg17[%c0_115, %c0_116, %c0_117], %297 {strides = array<i32>} : memref<3x8x128xf32, #tpu.memory_space<vmem>>, vector<1x8x128xf32>,
    %c0_118 = arith.constant 0 : index
    %c0_119 = arith.constant 0 : index
    %298 = vector.load %arg1[%c0_118, %c0_119] : memref<8x1xf32, #tpu.memory_space<vmem>>, vector<8x1xf32>
    %cst_120 = arith.constant 0.000000e+00 : f32
    %299 = vector.broadcast %cst_120 : f32 to vector<8x1xf32>
    %300 = arith.cmpf ogt, %298, %299 : vector<8x1xf32>
    %301 = vector.extract_strided_slice %0 {offsets = [3, 0, 0], sizes = [1, 8, 2], strides = [1, 1, 1]} : vector<4x8x2xf32> to vector<1x8x2xf32>
    %302 = vector.shape_cast %301 : vector<1x8x2xf32> to vector<8x2xf32>
    %303 = vector.shape_cast %300 : vector<8x1xi1> to vector<8x1xi1>
    %304 = vector.broadcast %303 : vector<8x1xi1> to vector<8x2xi1>
    %305 = arith.select %304, %184, %302 : vector<8x2xi1>, vector<8x2xf32>
    %306 = vector.extract_strided_slice %305 {offsets = [0, 0], sizes = [8, 1], strides = [1, 1]} : vector<8x2xf32> to vector<8x1xf32>
    %307 = arith.cmpf one, %306, %306 : vector<8x1xf32>
    %308 = vector.extract_strided_slice %278 {offsets = [0, 0], sizes = [8, 1], strides = [1, 1]} : vector<8x2xf32> to vector<8x1xf32>
    %309 = arith.cmpf one, %308, %308 : vector<8x1xf32>
    %310 = arith.ori %307, %309 : vector<8x1xi1>
    %cst_121 = arith.constant dense<true> : vector<8x1xi1>
    %311 = arith.xori %310, %cst_121 : vector<8x1xi1>
    %312 = arith.subf %278, %305 : vector<8x2xf32>
    %c0_122 = arith.constant 0 : index
    %c0_123 = arith.constant 0 : index
    %313 = vector.load %arg3[%c0_122, %c0_123] : memref<2x32xf32, #tpu.memory_space<vmem>>, vector<2x32xf32>
    %cst_124 = arith.constant dense<0.000000e+00> : vector<8x32xf32>
    %314 = tpu.matmul %312, %313, %cst_124 {dimension_numbers = #tpu.dot_dimension_numbers<[1], [0], [0], [1], [0, 0, 1, 1], [], []>} : vector<8x2xf32>, vector<2x32xf32>, vector<8x32xf32> -> vector<8x32xf32>
    %c0_125 = arith.constant 0 : index
    %c0_126 = arith.constant 0 : index
    %315 = vector.load %arg4[%c0_125, %c0_126] : memref<1x32xf32, #tpu.memory_space<vmem>>, vector<1x32xf32>
    %316 = vector.broadcast %315 : vector<1x32xf32> to vector<8x32xf32>
    %317 = arith.addf %314, %316 : vector<8x32xf32>
    %cst_127 = arith.constant 0.000000e+00 : f32
    %318 = vector.broadcast %cst_127 : f32 to vector<8x32xf32>
    %319 = arith.maximumf %317, %318 : vector<8x32xf32>
    %c0_128 = arith.constant 0 : index
    %c0_129 = arith.constant 0 : index
    %320 = vector.load %arg8[%c0_128, %c0_129] : memref<32x512xf32, #tpu.memory_space<vmem>>, vector<32x512xf32>
    %cst_130 = arith.constant dense<0.000000e+00> : vector<8x512xf32>
    %321 = tpu.matmul %319, %320, %cst_130 {dimension_numbers = #tpu.dot_dimension_numbers<[1], [0], [0], [1], [0, 0, 1, 1], [], []>} : vector<8x32xf32>, vector<32x512xf32>, vector<8x512xf32> -> vector<8x512xf32>
    %c0_131 = arith.constant 0 : index
    %c0_132 = arith.constant 0 : index
    %322 = vector.load %arg9[%c0_131, %c0_132] : memref<128x512xf32, #tpu.memory_space<vmem>>, vector<128x512xf32>
    %cst_133 = arith.constant dense<0.000000e+00> : vector<8x512xf32>
    %323 = tpu.matmul %294, %322, %cst_133 {dimension_numbers = #tpu.dot_dimension_numbers<[1], [0], [0], [1], [0, 0, 1, 1], [], []>} : vector<8x128xf32>, vector<128x512xf32>, vector<8x512xf32> -> vector<8x512xf32>
    %324 = arith.addf %321, %323 : vector<8x512xf32>
    %c0_134 = arith.constant 0 : index
    %c0_135 = arith.constant 0 : index
    %325 = vector.load %arg10[%c0_134, %c0_135] : memref<1x512xf32, #tpu.memory_space<vmem>>, vector<1x512xf32>
    %326 = vector.broadcast %325 : vector<1x512xf32> to vector<8x512xf32>
    %327 = arith.addf %324, %326 : vector<8x512xf32>
    %328 = vector.extract_strided_slice %327 {offsets = [0, 0], sizes = [8, 128], strides = [1, 1]} : vector<8x512xf32> to vector<8x128xf32>
    %329 = arith.negf %328 : vector<8x128xf32>
    %330 = math.exp %329 : vector<8x128xf32>
    %cst_136 = arith.constant 1.000000e+00 : f32
    %331 = vector.broadcast %cst_136 : f32 to vector<8x128xf32>
    %332 = arith.addf %331, %330 : vector<8x128xf32>
    %333 = arith.divf %331, %332 : vector<8x128xf32>
    %334 = vector.extract_strided_slice %327 {offsets = [0, 128], sizes = [8, 128], strides = [1, 1]} : vector<8x512xf32> to vector<8x128xf32>
    %335 = arith.negf %334 : vector<8x128xf32>
    %336 = math.exp %335 : vector<8x128xf32>
    %cst_137 = arith.constant 1.000000e+00 : f32
    %337 = vector.broadcast %cst_137 : f32 to vector<8x128xf32>
    %338 = arith.addf %337, %336 : vector<8x128xf32>
    %339 = arith.divf %337, %338 : vector<8x128xf32>
    %340 = vector.extract_strided_slice %327 {offsets = [0, 256], sizes = [8, 128], strides = [1, 1]} : vector<8x512xf32> to vector<8x128xf32>
    %341 = math.tanh %340 : vector<8x128xf32>
    %342 = vector.extract_strided_slice %327 {offsets = [0, 384], sizes = [8, 128], strides = [1, 1]} : vector<8x512xf32> to vector<8x128xf32>
    %343 = arith.negf %342 : vector<8x128xf32>
    %344 = math.exp %343 : vector<8x128xf32>
    %cst_138 = arith.constant 1.000000e+00 : f32
    %345 = vector.broadcast %cst_138 : f32 to vector<8x128xf32>
    %346 = arith.addf %345, %344 : vector<8x128xf32>
    %347 = arith.divf %345, %346 : vector<8x128xf32>
    %348 = arith.mulf %339, %270 : vector<8x128xf32>
    %349 = arith.mulf %333, %341 : vector<8x128xf32>
    %350 = arith.addf %348, %349 : vector<8x128xf32>
    %351 = math.tanh %350 : vector<8x128xf32>
    %352 = arith.mulf %347, %351 : vector<8x128xf32>
    %c0_139 = arith.constant 0 : index
    %c0_140 = arith.constant 0 : index
    %353 = vector.load %arg13[%c0_139, %c0_140] : memref<128x128xf32, #tpu.memory_space<vmem>>, vector<128x128xf32>
    %cst_141 = arith.constant dense<0.000000e+00> : vector<8x128xf32>
    %354 = tpu.matmul %352, %353, %cst_141 {dimension_numbers = #tpu.dot_dimension_numbers<[1], [0], [0], [1], [0, 0, 1, 1], [], []>} : vector<8x128xf32>, vector<128x128xf32>, vector<8x128xf32> -> vector<8x128xf32>
    %c0_142 = arith.constant 0 : index
    %c0_143 = arith.constant 0 : index
    %355 = vector.load %arg14[%c0_142, %c0_143] : memref<1x128xf32, #tpu.memory_space<vmem>>, vector<1x128xf32>
    %356 = vector.broadcast %355 : vector<1x128xf32> to vector<8x128xf32>
    %357 = arith.addf %354, %356 : vector<8x128xf32>
    %358 = tpu.iota {dimensions = array<i32: 1>} : vector<8x128xi32>
    %359 = arith.negf %357 : vector<8x128xf32>
    %360 = math.exp %359 : vector<8x128xf32>
    %cst_144 = arith.constant 1.000000e+00 : f32
    %361 = vector.broadcast %cst_144 : f32 to vector<8x128xf32>
    %362 = arith.addf %361, %360 : vector<8x128xf32>
    %363 = arith.divf %361, %362 : vector<8x128xf32>
    %c2_i32_145 = arith.constant 2 : i32
    %364 = vector.broadcast %c2_i32_145 : i32 to vector<8x128xi32>
    %365 = arith.cmpi slt, %358, %364 : vector<8x128xi32>
    %c4_i32_146 = arith.constant 4 : i32
    %366 = vector.broadcast %c4_i32_146 : i32 to vector<8x128xi32>
    %367 = arith.cmpi slt, %358, %366 : vector<8x128xi32>
    %cst_147 = arith.constant 2.000000e-01 : f32
    %368 = vector.broadcast %cst_147 : f32 to vector<8x128xf32>
    %369 = arith.mulf %368, %363 : vector<8x128xf32>
    %cst_148 = arith.constant 0.00999999977 : f32
    %370 = vector.broadcast %cst_148 : f32 to vector<8x128xf32>
    %371 = arith.addf %370, %369 : vector<8x128xf32>
    %cst_149 = arith.constant 0.699999988 : f32
    %372 = vector.broadcast %cst_149 : f32 to vector<8x128xf32>
    %373 = arith.mulf %372, %363 : vector<8x128xf32>
    %374 = arith.select %367, %371, %373 : vector<8x128xi1>, vector<8x128xf32>
    %375 = arith.select %365, %357, %374 : vector<8x128xi1>, vector<8x128xf32>
    %376 = vector.shape_cast %311 : vector<8x1xi1> to vector<8x1xi1>
    %377 = vector.broadcast %376 : vector<8x1xi1> to vector<8x128xi1>
    %378 = arith.select %377, %352, %294 : vector<8x128xi1>, vector<8x128xf32>
    %379 = vector.shape_cast %311 : vector<8x1xi1> to vector<8x1xi1>
    %380 = vector.broadcast %379 : vector<8x1xi1> to vector<8x128xi1>
    %381 = arith.select %380, %350, %270 : vector<8x128xi1>, vector<8x128xf32>
    %cst_150 = arith.constant 0x7FC00000 : f32
    %382 = vector.broadcast %cst_150 : f32 to vector<8x128xf32>
    %383 = vector.shape_cast %311 : vector<8x1xi1> to vector<8x1xi1>
    %384 = vector.broadcast %383 : vector<8x1xi1> to vector<8x128xi1>
    %385 = arith.select %384, %375, %382 : vector<8x128xi1>, vector<8x128xf32>
    %386 = vector.extract_strided_slice %385 {offsets = [0, 0], sizes = [8, 2], strides = [1, 1]} : vector<8x128xf32> to vector<8x2xf32>
    %387 = arith.addf %278, %386 : vector<8x2xf32>
    %c3 = arith.constant 3 : index
    %c0_151 = arith.constant 0 : index
    %c0_152 = arith.constant 0 : index
    %388 = vector.load %arg15[%c3, %c0_151, %c0_152] : memref<5x8x128xf32, #tpu.memory_space<vmem>>, vector<1x8x128xf32>
    %389 = vector.shape_cast %388 : vector<1x8x128xf32> to vector<8x128xf32>
    %390 = vector.shape_cast %385 : vector<8x128xf32> to vector<1x8x128xf32>
    tpu.vector_store %arg15[%c3, %c0_151, %c0_152], %390 {strides = array<i32>} : memref<5x8x128xf32, #tpu.memory_space<vmem>>, vector<1x8x128xf32>,
    %c3_153 = arith.constant 3 : index
    %c0_154 = arith.constant 0 : index
    %c0_155 = arith.constant 0 : index
    %391 = vector.load %arg16[%c3_153, %c0_154, %c0_155] : memref<5x8x2xf32, #tpu.memory_space<vmem>>, vector<1x8x2xf32>
    %392 = vector.shape_cast %391 : vector<1x8x2xf32> to vector<8x2xf32>
    %393 = vector.shape_cast %387 : vector<8x2xf32> to vector<1x8x2xf32>
    tpu.vector_store %arg16[%c3_153, %c0_154, %c0_155], %393 {strides = array<i32>} : memref<5x8x2xf32, #tpu.memory_space<vmem>>, vector<1x8x2xf32>,
    %c1_156 = arith.constant 1 : index
    %c0_157 = arith.constant 0 : index
    %c0_158 = arith.constant 0 : index
    %394 = vector.load %arg17[%c1_156, %c0_157, %c0_158] : memref<3x8x128xf32, #tpu.memory_space<vmem>>, vector<1x8x128xf32>
    %395 = vector.shape_cast %394 : vector<1x8x128xf32> to vector<8x128xf32>
    %396 = vector.shape_cast %378 : vector<8x128xf32> to vector<1x8x128xf32>
    tpu.vector_store %arg17[%c1_156, %c0_157, %c0_158], %396 {strides = array<i32>} : memref<3x8x128xf32, #tpu.memory_space<vmem>>, vector<1x8x128xf32>,
    %397 = vector.extract_strided_slice %278 {offsets = [0, 0], sizes = [8, 1], strides = [1, 1]} : vector<8x2xf32> to vector<8x1xf32>
    %398 = arith.cmpf one, %397, %397 : vector<8x1xf32>
    %399 = vector.extract_strided_slice %387 {offsets = [0, 0], sizes = [8, 1], strides = [1, 1]} : vector<8x2xf32> to vector<8x1xf32>
    %400 = arith.cmpf one, %399, %399 : vector<8x1xf32>
    %401 = arith.ori %398, %400 : vector<8x1xi1>
    %cst_159 = arith.constant dense<true> : vector<8x1xi1>
    %402 = arith.xori %401, %cst_159 : vector<8x1xi1>
    %403 = arith.subf %387, %278 : vector<8x2xf32>
    %c0_160 = arith.constant 0 : index
    %c0_161 = arith.constant 0 : index
    %404 = vector.load %arg3[%c0_160, %c0_161] : memref<2x32xf32, #tpu.memory_space<vmem>>, vector<2x32xf32>
    %cst_162 = arith.constant dense<0.000000e+00> : vector<8x32xf32>
    %405 = tpu.matmul %403, %404, %cst_162 {dimension_numbers = #tpu.dot_dimension_numbers<[1], [0], [0], [1], [0, 0, 1, 1], [], []>} : vector<8x2xf32>, vector<2x32xf32>, vector<8x32xf32> -> vector<8x32xf32>
    %c0_163 = arith.constant 0 : index
    %c0_164 = arith.constant 0 : index
    %406 = vector.load %arg4[%c0_163, %c0_164] : memref<1x32xf32, #tpu.memory_space<vmem>>, vector<1x32xf32>
    %407 = vector.broadcast %406 : vector<1x32xf32> to vector<8x32xf32>
    %408 = arith.addf %405, %407 : vector<8x32xf32>
    %cst_165 = arith.constant 0.000000e+00 : f32
    %409 = vector.broadcast %cst_165 : f32 to vector<8x32xf32>
    %410 = arith.maximumf %408, %409 : vector<8x32xf32>
    %c0_166 = arith.constant 0 : index
    %c0_167 = arith.constant 0 : index
    %411 = vector.load %arg8[%c0_166, %c0_167] : memref<32x512xf32, #tpu.memory_space<vmem>>, vector<32x512xf32>
    %cst_168 = arith.constant dense<0.000000e+00> : vector<8x512xf32>
    %412 = tpu.matmul %410, %411, %cst_168 {dimension_numbers = #tpu.dot_dimension_numbers<[1], [0], [0], [1], [0, 0, 1, 1], [], []>} : vector<8x32xf32>, vector<32x512xf32>, vector<8x512xf32> -> vector<8x512xf32>
    %c0_169 = arith.constant 0 : index
    %c0_170 = arith.constant 0 : index
    %413 = vector.load %arg9[%c0_169, %c0_170] : memref<128x512xf32, #tpu.memory_space<vmem>>, vector<128x512xf32>
    %cst_171 = arith.constant dense<0.000000e+00> : vector<8x512xf32>
    %414 = tpu.matmul %378, %413, %cst_171 {dimension_numbers = #tpu.dot_dimension_numbers<[1], [0], [0], [1], [0, 0, 1, 1], [], []>} : vector<8x128xf32>, vector<128x512xf32>, vector<8x512xf32> -> vector<8x512xf32>
    %415 = arith.addf %412, %414 : vector<8x512xf32>
    %c0_172 = arith.constant 0 : index
    %c0_173 = arith.constant 0 : index
    %416 = vector.load %arg10[%c0_172, %c0_173] : memref<1x512xf32, #tpu.memory_space<vmem>>, vector<1x512xf32>
    %417 = vector.broadcast %416 : vector<1x512xf32> to vector<8x512xf32>
    %418 = arith.addf %415, %417 : vector<8x512xf32>
    %419 = vector.extract_strided_slice %418 {offsets = [0, 0], sizes = [8, 128], strides = [1, 1]} : vector<8x512xf32> to vector<8x128xf32>
    %420 = arith.negf %419 : vector<8x128xf32>
    %421 = math.exp %420 : vector<8x128xf32>
    %cst_174 = arith.constant 1.000000e+00 : f32
    %422 = vector.broadcast %cst_174 : f32 to vector<8x128xf32>
    %423 = arith.addf %422, %421 : vector<8x128xf32>
    %424 = arith.divf %422, %423 : vector<8x128xf32>
    %425 = vector.extract_strided_slice %418 {offsets = [0, 128], sizes = [8, 128], strides = [1, 1]} : vector<8x512xf32> to vector<8x128xf32>
    %426 = arith.negf %425 : vector<8x128xf32>
    %427 = math.exp %426 : vector<8x128xf32>
    %cst_175 = arith.constant 1.000000e+00 : f32
    %428 = vector.broadcast %cst_175 : f32 to vector<8x128xf32>
    %429 = arith.addf %428, %427 : vector<8x128xf32>
    %430 = arith.divf %428, %429 : vector<8x128xf32>
    %431 = vector.extract_strided_slice %418 {offsets = [0, 256], sizes = [8, 128], strides = [1, 1]} : vector<8x512xf32> to vector<8x128xf32>
    %432 = math.tanh %431 : vector<8x128xf32>
    %433 = vector.extract_strided_slice %418 {offsets = [0, 384], sizes = [8, 128], strides = [1, 1]} : vector<8x512xf32> to vector<8x128xf32>
    %434 = arith.negf %433 : vector<8x128xf32>
    %435 = math.exp %434 : vector<8x128xf32>
    %cst_176 = arith.constant 1.000000e+00 : f32
    %436 = vector.broadcast %cst_176 : f32 to vector<8x128xf32>
    %437 = arith.addf %436, %435 : vector<8x128xf32>
    %438 = arith.divf %436, %437 : vector<8x128xf32>
    %439 = arith.mulf %430, %381 : vector<8x128xf32>
    %440 = arith.mulf %424, %432 : vector<8x128xf32>
    %441 = arith.addf %439, %440 : vector<8x128xf32>
    %442 = math.tanh %441 : vector<8x128xf32>
    %443 = arith.mulf %438, %442 : vector<8x128xf32>
    %c0_177 = arith.constant 0 : index
    %c0_178 = arith.constant 0 : index
    %444 = vector.load %arg13[%c0_177, %c0_178] : memref<128x128xf32, #tpu.memory_space<vmem>>, vector<128x128xf32>
    %cst_179 = arith.constant dense<0.000000e+00> : vector<8x128xf32>
    %445 = tpu.matmul %443, %444, %cst_179 {dimension_numbers = #tpu.dot_dimension_numbers<[1], [0], [0], [1], [0, 0, 1, 1], [], []>} : vector<8x128xf32>, vector<128x128xf32>, vector<8x128xf32> -> vector<8x128xf32>
    %c0_180 = arith.constant 0 : index
    %c0_181 = arith.constant 0 : index
    %446 = vector.load %arg14[%c0_180, %c0_181] : memref<1x128xf32, #tpu.memory_space<vmem>>, vector<1x128xf32>
    %447 = vector.broadcast %446 : vector<1x128xf32> to vector<8x128xf32>
    %448 = arith.addf %445, %447 : vector<8x128xf32>
    %449 = tpu.iota {dimensions = array<i32: 1>} : vector<8x128xi32>
    %450 = arith.negf %448 : vector<8x128xf32>
    %451 = math.exp %450 : vector<8x128xf32>
    %cst_182 = arith.constant 1.000000e+00 : f32
    %452 = vector.broadcast %cst_182 : f32 to vector<8x128xf32>
    %453 = arith.addf %452, %451 : vector<8x128xf32>
    %454 = arith.divf %452, %453 : vector<8x128xf32>
    %c2_i32_183 = arith.constant 2 : i32
    %455 = vector.broadcast %c2_i32_183 : i32 to vector<8x128xi32>
    %456 = arith.cmpi slt, %449, %455 : vector<8x128xi32>
    %c4_i32_184 = arith.constant 4 : i32
    %457 = vector.broadcast %c4_i32_184 : i32 to vector<8x128xi32>
    %458 = arith.cmpi slt, %449, %457 : vector<8x128xi32>
    %cst_185 = arith.constant 2.000000e-01 : f32
    %459 = vector.broadcast %cst_185 : f32 to vector<8x128xf32>
    %460 = arith.mulf %459, %454 : vector<8x128xf32>
    %cst_186 = arith.constant 0.00999999977 : f32
    %461 = vector.broadcast %cst_186 : f32 to vector<8x128xf32>
    %462 = arith.addf %461, %460 : vector<8x128xf32>
    %cst_187 = arith.constant 0.699999988 : f32
    %463 = vector.broadcast %cst_187 : f32 to vector<8x128xf32>
    %464 = arith.mulf %463, %454 : vector<8x128xf32>
    %465 = arith.select %458, %462, %464 : vector<8x128xi1>, vector<8x128xf32>
    %466 = arith.select %456, %448, %465 : vector<8x128xi1>, vector<8x128xf32>
    %467 = vector.shape_cast %402 : vector<8x1xi1> to vector<8x1xi1>
    %468 = vector.broadcast %467 : vector<8x1xi1> to vector<8x128xi1>
    %469 = arith.select %468, %443, %378 : vector<8x128xi1>, vector<8x128xf32>
    %cst_188 = arith.constant 0x7FC00000 : f32
    %470 = vector.broadcast %cst_188 : f32 to vector<8x128xf32>
    %471 = vector.shape_cast %402 : vector<8x1xi1> to vector<8x1xi1>
    %472 = vector.broadcast %471 : vector<8x1xi1> to vector<8x128xi1>
    %473 = arith.select %472, %466, %470 : vector<8x128xi1>, vector<8x128xf32>
    %474 = vector.extract_strided_slice %473 {offsets = [0, 0], sizes = [8, 2], strides = [1, 1]} : vector<8x128xf32> to vector<8x2xf32>
    %475 = arith.addf %387, %474 : vector<8x2xf32>
    %c4 = arith.constant 4 : index
    %c0_189 = arith.constant 0 : index
    %c0_190 = arith.constant 0 : index
    %476 = vector.load %arg15[%c4, %c0_189, %c0_190] : memref<5x8x128xf32, #tpu.memory_space<vmem>>, vector<1x8x128xf32>
    %477 = vector.shape_cast %476 : vector<1x8x128xf32> to vector<8x128xf32>
    %478 = vector.shape_cast %473 : vector<8x128xf32> to vector<1x8x128xf32>
    tpu.vector_store %arg15[%c4, %c0_189, %c0_190], %478 {strides = array<i32>} : memref<5x8x128xf32, #tpu.memory_space<vmem>>, vector<1x8x128xf32>,
    %c4_191 = arith.constant 4 : index
    %c0_192 = arith.constant 0 : index
    %c0_193 = arith.constant 0 : index
    %479 = vector.load %arg16[%c4_191, %c0_192, %c0_193] : memref<5x8x2xf32, #tpu.memory_space<vmem>>, vector<1x8x2xf32>
    %480 = vector.shape_cast %479 : vector<1x8x2xf32> to vector<8x2xf32>
    %481 = vector.shape_cast %475 : vector<8x2xf32> to vector<1x8x2xf32>
    tpu.vector_store %arg16[%c4_191, %c0_192, %c0_193], %481 {strides = array<i32>} : memref<5x8x2xf32, #tpu.memory_space<vmem>>, vector<1x8x2xf32>,
    %c2_194 = arith.constant 2 : index
    %c0_195 = arith.constant 0 : index
    %c0_196 = arith.constant 0 : index
    %482 = vector.load %arg17[%c2_194, %c0_195, %c0_196] : memref<3x8x128xf32, #tpu.memory_space<vmem>>, vector<1x8x128xf32>
    %483 = vector.shape_cast %482 : vector<1x8x128xf32> to vector<8x128xf32>
    %484 = vector.shape_cast %469 : vector<8x128xf32> to vector<1x8x128xf32>
    tpu.vector_store %arg17[%c2_194, %c0_195, %c0_196], %484 {strides = array<i32>} : memref<3x8x128xf32, #tpu.memory_space<vmem>>, vector<1x8x128xf32>,
    return
  }
}

</mosaic_0001>

<llo_original>
// kernel: tpu_custom_call.1
$region0: #{tpu_custom_call.1}
  #allocation0 [shape = 'u32[]', space=smem, size = 0x4, offset = 0x4, fixed_abs, tag = 'smem constant byte address 0x4 - core index']
  #allocation1 [shape = 'u32[72,128]{1,0:T(1,128)}', space=vmem, size = 0x9000, scoped, tag = 'internal scratch']
  %s0 = inlined_call_operand.vmem [shape: f32[4,8,2], index: 0, kind: input, shape index: {}]
  %s1 = inlined_call_operand.vmem [shape: f32[8,1], index: 1, kind: input, shape index: {}]
  %s2 = inlined_call_operand.vmem [shape: f32[1,128], index: 2, kind: input, shape index: {}]
  %s3 = inlined_call_operand.vmem [shape: f32[2,32], index: 3, kind: input, shape index: {}]
  %s4 = inlined_call_operand.vmem [shape: f32[1,32], index: 4, kind: input, shape index: {}]
  %s5 = inlined_call_operand.hbm [shape: f32[32,512], index: 5, kind: input, shape index: {}]
  %s6 = inlined_call_operand.hbm [shape: f32[128,512], index: 6, kind: input, shape index: {}]
  %s7 = inlined_call_operand.vmem [shape: f32[1,512], index: 7, kind: input, shape index: {}]
  %s8 = inlined_call_operand.hbm [shape: f32[32,512], index: 8, kind: input, shape index: {}]
  %s9 = inlined_call_operand.hbm [shape: f32[128,512], index: 9, kind: input, shape index: {}]
  %s10 = inlined_call_operand.vmem [shape: f32[1,512], index: 10, kind: input, shape index: {}]
  %s11 = inlined_call_operand.hbm [shape: f32[128,128], index: 11, kind: input, shape index: {}]
  %s12 = inlined_call_operand.vmem [shape: f32[1,128], index: 12, kind: input, shape index: {}]
  %s13 = inlined_call_operand.hbm [shape: f32[128,128], index: 13, kind: input, shape index: {}]
  %s14 = inlined_call_operand.vmem [shape: f32[1,128], index: 14, kind: input, shape index: {}]
  %s15 = inlined_call_operand.hbm [shape: f32[5,8,128], index: 15, kind: output, shape index: {0}]
  %s16 = inlined_call_operand.vmem [shape: f32[5,8,2], index: 16, kind: output, shape index: {1}]
  %s17 = inlined_call_operand.hbm [shape: f32[3,8,128], index: 17, kind: output, shape index: {2}]
  %18 = xla_tuple %s15, %s16, %s17
  %s19 = sld [smem:[#allocation0]]
  $region110: #{tpu_custom_call.1} parent=0
    _
  %s21 = ssub.s32 1, %s19
  %s22 = scalar_select 0, %s21, %s19
  $region1: #{tpu_custom_call.1} parent=0
    #allocation2 [shape = 'u8[65536]{0}', space=vmem, size = 0x10000, scoped, tag = 'input window, operand 5, single buffered']
    #allocation3 [shape = 's32[1]{0}', space=sflag, size = 0x4, scoped, tag = 'scoped memory for tpu_custom_call.1']
    #allocation4 [shape = 's32[1]{0}', space=sflag, size = 0x4, scoped, tag = 'scoped memory for tpu_custom_call.1']
    #allocation5 [shape = 'u8[262144]{0}', space=vmem, size = 0x40000, scoped, tag = 'input window, operand 6, single buffered']
    #allocation6 [shape = 's32[1]{0}', space=sflag, size = 0x4, scoped, tag = 'scoped memory for tpu_custom_call.1']
    #allocation7 [shape = 'u8[65536]{0}', space=vmem, size = 0x10000, scoped, tag = 'input window, operand 8, single buffered']
    #allocation8 [shape = 'u8[262144]{0}', space=vmem, size = 0x40000, scoped, tag = 'input window, operand 9, single buffered']
    #allocation9 [shape = 's32[1]{0}', space=sflag, size = 0x4, scoped, tag = 'scoped memory for tpu_custom_call.1']
    #allocation10 [shape = 'u8[65536]{0}', space=vmem, size = 0x10000, scoped, tag = 'input window, operand 11, single buffered']
    #allocation11 [shape = 'u8[65536]{0}', space=vmem, size = 0x10000, scoped, tag = 'input window, operand 13, single buffered']
    #allocation12 [shape = 's32[1]{0}', space=sflag, size = 0x4, scoped, tag = 'scoped memory for tpu_custom_call.1']
    #allocation13 [shape = 'u8[20480]{0}', space=vmem, size = 0x5000, scoped, tag = 'output window, operand 0, single buffered']
    #allocation14 [shape = 'u8[12288]{0}', space=vmem, size = 0x3000, scoped, tag = 'output window, operand 2, single buffered']
    #allocation15 [shape = 's32[1]{0}', space=sflag, size = 0x4, scoped, tag = 'scoped memory for tpu_custom_call.1']
    %23 = vsyncpa [#allocation3], 0
    %24 = vsyncpa [#allocation6], 0
    %25 = vsyncpa [#allocation9], 0
    %26 = vsyncpa [#allocation12], 0
    %27 = vsyncpa [#allocation4], 0
    %28 = vsyncpa [#allocation15], 0
    // Predicated region
    $region2: #{tpu_custom_call.1} parent=1 // pred_check
      _
    $region3: #{tpu_custom_call.1} parent=1 // pred_check_branch
      %30 = sbr.rel (0) target = $region5
    $region4: #{tpu_custom_call.1} parent=1 // pred_region
      _
    $region5: #{tpu_custom_call.1} parent=1 // pred_fallthru
      _
    // Predicated region
    $region6: #{tpu_custom_call.1} parent=1 // pred_check
      _
    $region7: #{tpu_custom_call.1} parent=1 // pred_check_branch
      %32 = sbr.rel (0) target = $region9
    $region8: #{tpu_custom_call.1} parent=1 // pred_region
      _
    $region9: #{tpu_custom_call.1} parent=1 // pred_fallthru
      _
    // Predicated region
    $region10: #{tpu_custom_call.1} parent=1 // pred_check
      _
    $region11: #{tpu_custom_call.1} parent=1 // pred_check_branch
      %34 = sbr.rel (0) target = $region13
    $region12: #{tpu_custom_call.1} parent=1 // pred_region
      _
    $region13: #{tpu_custom_call.1} parent=1 // pred_fallthru
      _
    // Predicated region
    $region14: #{tpu_custom_call.1} parent=1 // pred_check
      _
    $region15: #{tpu_custom_call.1} parent=1 // pred_check_branch
      %36 = sbr.rel (0) target = $region17
    $region16: #{tpu_custom_call.1} parent=1 // pred_region
      _
    $region17: #{tpu_custom_call.1} parent=1 // pred_fallthru
      _
    // Predicated region
    $region18: #{tpu_custom_call.1} parent=1 // pred_check
      _
    $region19: #{tpu_custom_call.1} parent=1 // pred_check_branch
      %38 = sbr.rel (0) target = $region21
    $region20: #{tpu_custom_call.1} parent=1 // pred_region
      _
    $region21: #{tpu_custom_call.1} parent=1 // pred_fallthru
      _
    // Predicated region
    $region22: #{tpu_custom_call.1} parent=1 // pred_check
      _
    $region23: #{tpu_custom_call.1} parent=1 // pred_check_branch
      %40 = sbr.rel (0) target = $region25
    $region24: #{tpu_custom_call.1} parent=1 // pred_region
      %42 = vsyncadd [#allocation3], 0
      %s43 = sshll.u32 %s5, 4
      %s44 = int_to_ptr.hbm [resolvable:$true] %s43
      %s45 = sshll.u32 [#allocation2], 4
      %s46 = int_to_ptr.vmem [resolvable:$true] %s45
      %51 = dma.hbm_to_vmem [thread:$0]  %s44, 2048, %s46, [#allocation3], 512, 512, 32
    $region25: #{tpu_custom_call.1} parent=1 // pred_fallthru
      _
    // Predicated region
    $region26: #{tpu_custom_call.1} parent=1 // pred_check
      _
    $region27: #{tpu_custom_call.1} parent=1 // pred_check_branch
      %53 = sbr.rel (0) target = $region29
    $region28: #{tpu_custom_call.1} parent=1 // pred_region
      %55 = vsyncadd [#allocation6], 0
      %s56 = sshll.u32 %s6, 4
      %s57 = int_to_ptr.hbm [resolvable:$true] %s56
      %s58 = sshll.u32 [#allocation5], 4
      %s59 = int_to_ptr.vmem [resolvable:$true] %s58
      %64 = dma.hbm_to_vmem [thread:$0]  %s57, 8192, %s59, [#allocation6], 512, 512, 32
    $region29: #{tpu_custom_call.1} parent=1 // pred_fallthru
      _
    // Predicated region
    $region30: #{tpu_custom_call.1} parent=1 // pred_check
      _
    $region31: #{tpu_custom_call.1} parent=1 // pred_check_branch
      %66 = sbr.rel (0) target = $region33
    $region32: #{tpu_custom_call.1} parent=1 // pred_region
      _
    $region33: #{tpu_custom_call.1} parent=1 // pred_fallthru
      _
    // Predicated region
    $region34: #{tpu_custom_call.1} parent=1 // pred_check
      _
    $region35: #{tpu_custom_call.1} parent=1 // pred_check_branch
      %68 = sbr.rel (0) target = $region37
    $region36: #{tpu_custom_call.1} parent=1 // pred_region
      %70 = vsyncadd [#allocation6], 0
      %s71 = sshll.u32 %s8, 4
      %s72 = int_to_ptr.hbm [resolvable:$true] %s71
      %s73 = sshll.u32 [#allocation7], 4
      %s74 = int_to_ptr.vmem [resolvable:$true] %s73
      %79 = dma.hbm_to_vmem [thread:$0]  %s72, 2048, %s74, [#allocation6], 512, 512, 32
    $region37: #{tpu_custom_call.1} parent=1 // pred_fallthru
      _
    // Predicated region
    $region38: #{tpu_custom_call.1} parent=1 // pred_check
      _
    $region39: #{tpu_custom_call.1} parent=1 // pred_check_branch
      %81 = sbr.rel (0) target = $region41
    $region40: #{tpu_custom_call.1} parent=1 // pred_region
      %83 = vsyncadd [#allocation9], 0
      %s84 = sshll.u32 %s9, 4
      %s85 = int_to_ptr.hbm [resolvable:$true] %s84
      %s86 = sshll.u32 [#allocation8], 4
      %s87 = int_to_ptr.vmem [resolvable:$true] %s86
      %92 = dma.hbm_to_vmem [thread:$0]  %s85, 8192, %s87, [#allocation9], 512, 512, 32
    $region41: #{tpu_custom_call.1} parent=1 // pred_fallthru
      _
    // Predicated region
    $region42: #{tpu_custom_call.1} parent=1 // pred_check
      _
    $region43: #{tpu_custom_call.1} parent=1 // pred_check_branch
      %94 = sbr.rel (0) target = $region45
    $region44: #{tpu_custom_call.1} parent=1 // pred_region
      _
    $region45: #{tpu_custom_call.1} parent=1 // pred_fallthru
      _
    // Predicated region
    $region46: #{tpu_custom_call.1} parent=1 // pred_check
      _
    $region47: #{tpu_custom_call.1} parent=1 // pred_check_branch
      %96 = sbr.rel (0) target = $region49
    $region48: #{tpu_custom_call.1} parent=1 // pred_region
      %98 = vsyncadd [#allocation9], 0
      %s99 = sshll.u32 %s11, 4
      %s100 = int_to_ptr.hbm [resolvable:$true] %s99
      %s101 = sshll.u32 [#allocation10], 4
      %s102 = int_to_ptr.vmem [resolvable:$true] %s101
      %107 = dma.hbm_to_vmem [thread:$0]  %s100, 2048, %s102, [#allocation9], 128, 128, 8
    $region49: #{tpu_custom_call.1} parent=1 // pred_fallthru
      _
    // Predicated region
    $region50: #{tpu_custom_call.1} parent=1 // pred_check
      _
    $region51: #{tpu_custom_call.1} parent=1 // pred_check_branch
      %109 = sbr.rel (0) target = $region53
    $region52: #{tpu_custom_call.1} parent=1 // pred_region
      _
    $region53: #{tpu_custom_call.1} parent=1 // pred_fallthru
      _
    // Predicated region
    $region54: #{tpu_custom_call.1} parent=1 // pred_check
      _
    $region55: #{tpu_custom_call.1} parent=1 // pred_check_branch
      %111 = sbr.rel (0) target = $region57
    $region56: #{tpu_custom_call.1} parent=1 // pred_region
      %113 = vsyncadd [#allocation12], 0
      %s114 = sshll.u32 %s13, 4
      %s115 = int_to_ptr.hbm [resolvable:$true] %s114
      %s116 = sshll.u32 [#allocation11], 4
      %s117 = int_to_ptr.vmem [resolvable:$true] %s116
      %122 = dma.hbm_to_vmem [thread:$0]  %s115, 2048, %s117, [#allocation12], 128, 128, 8
    $region57: #{tpu_custom_call.1} parent=1 // pred_fallthru
      _
    // Predicated region
    $region58: #{tpu_custom_call.1} parent=1 // pred_check
      _
    $region59: #{tpu_custom_call.1} parent=1 // pred_check_branch
      %124 = sbr.rel (0) target = $region61
    $region60: #{tpu_custom_call.1} parent=1 // pred_region
      _
    $region61: #{tpu_custom_call.1} parent=1 // pred_fallthru
      _
    // Predicated region
    $region62: #{tpu_custom_call.1} parent=1 // pred_check
      _
    $region63: #{tpu_custom_call.1} parent=1 // pred_check_branch
      %126 = sbr.rel (0) target = $region65
    $region64: #{tpu_custom_call.1} parent=1 // pred_region
      %128 = dma.done [#allocation3], 2048
    $region65: #{tpu_custom_call.1} parent=1 // pred_fallthru
      _
    // Predicated region
    $region66: #{tpu_custom_call.1} parent=1 // pred_check
      _
    $region67: #{tpu_custom_call.1} parent=1 // pred_check_branch
      %130 = sbr.rel (0) target = $region69
    $region68: #{tpu_custom_call.1} parent=1 // pred_region
      %132 = dma.done [#allocation6], 8192
    $region69: #{tpu_custom_call.1} parent=1 // pred_fallthru
      _
    // Predicated region
    $region70: #{tpu_custom_call.1} parent=1 // pred_check
      _
    $region71: #{tpu_custom_call.1} parent=1 // pred_check_branch
      %134 = sbr.rel (0) target = $region73
    $region72: #{tpu_custom_call.1} parent=1 // pred_region
      %136 = dma.done [#allocation6], 2048
    $region73: #{tpu_custom_call.1} parent=1 // pred_fallthru
      _
    // Predicated region
    $region74: #{tpu_custom_call.1} parent=1 // pred_check
      _
    $region75: #{tpu_custom_call.1} parent=1 // pred_check_branch
      %138 = sbr.rel (0) target = $region77
    $region76: #{tpu_custom_call.1} parent=1 // pred_region
      %140 = dma.done [#allocation9], 8192
    $region77: #{tpu_custom_call.1} parent=1 // pred_fallthru
      _
    // Predicated region
    $region78: #{tpu_custom_call.1} parent=1 // pred_check
      _
    $region79: #{tpu_custom_call.1} parent=1 // pred_check_branch
      %142 = sbr.rel (0) target = $region81
    $region80: #{tpu_custom_call.1} parent=1 // pred_region
      %144 = dma.done [#allocation9], 2048
    $region81: #{tpu_custom_call.1} parent=1 // pred_fallthru
      _
    // Predicated region
    $region82: #{tpu_custom_call.1} parent=1 // pred_check
      _
    $region83: #{tpu_custom_call.1} parent=1 // pred_check_branch
      %146 = sbr.rel (0) target = $region85
    $region84: #{tpu_custom_call.1} parent=1 // pred_region
      %148 = dma.done [#allocation12], 2048
    $region85: #{tpu_custom_call.1} parent=1 // pred_fallthru
      _
    %v149 = vld [vmem:[%s0] sm:$0xff]
    %v150 = vld [vmem:[%s0 + $0x8] sm:$0xff]
    %v151 = vld [vmem:[%s0 + $0x10] sm:$0xff]
    %v152 = vld [vmem:[%s0 + $0x18] sm:$0xff]
    %vm153 = vcmp.ne.f32.partialorder %v149, %v149
    %vm154 = vcmp.ne.f32.partialorder %v150, %v150
    %vm155 = vmor %vm153, %vm154
    %vm156 = vmxor %vm155, 1
    %v157 = vsub.f32 %v150, %v149
    %v158 = vld [vmem:[%s3] sm:$0x3]
    %v159 = vld [vmem:[%s4] sm:$0x1]
    %v161 = vperm.slane %v159, 0
    %vm163 = vcmask 15360
    %v165 = vsel %vm163, %v157, 0
    %vm167 = vcmask 1041408
    %v169 = vsel %vm167, %v158, 0
    %171 = vmatpush.msra.mxu0 0.0
    %172 = vmatpush.msra.mxu0 0.0
    %173 = vmatpush.msra.mxu0 0.0
    %174 = vmatpush.msra.mxu0 0.0
    %175 = vmatpush.msra.mxu0 0.0
    %176 = vmatpush.msra.mxu0 0.0
    %177 = vmatpush.msra.mxu0 0.0
    %178 = vmatpush.msra.mxu0 0.0
    %179 = vmatpush.msra.mxu0 0.0
    %180 = vmatpush.msra.mxu0 0.0
    %181 = vmatpush.msra.mxu0 0.0
    %182 = vmatpush.msra.mxu0 0.0
    %183 = vmatpush.msra.mxu0 0.0
    %184 = vmatpush.msra.mxu0 0.0
    %185 = vmatpush.msra.mxu0 0.0
    %186 = vmatpush.msra.mxu0 %v169
    %187 = vmatmul.f32.gmra.mxu0 %v165
    %v188 = vpop.f32.mrf.mxu0
    %v189 = vadd.f32 %v161, %v188
    %190 = vdwg.mxu0
    %v191 = vmax.f32 %v189, 0.0
    %v192 = vld [vmem:[#allocation2] sm:$0xff]
    %v193 = vld [vmem:[#allocation2 + $0x8] sm:$0xff]
    %v194 = vld [vmem:[#allocation2 + $0x10] sm:$0xff]
    %v195 = vld [vmem:[#allocation2 + $0x18] sm:$0xff]
    %v196 = vld [vmem:[#allocation2 + $0x20] sm:$0xff]
    %v197 = vld [vmem:[#allocation2 + $0x28] sm:$0xff]
    %v198 = vld [vmem:[#allocation2 + $0x30] sm:$0xff]
    %v199 = vld [vmem:[#allocation2 + $0x38] sm:$0xff]
    %v200 = vld [vmem:[#allocation2 + $0x40] sm:$0xff]
    %v201 = vld [vmem:[#allocation2 + $0x48] sm:$0xff]
    %v202 = vld [vmem:[#allocation2 + $0x50] sm:$0xff]
    %v203 = vld [vmem:[#allocation2 + $0x58] sm:$0xff]
    %v204 = vld [vmem:[#allocation2 + $0x60] sm:$0xff]
    %v205 = vld [vmem:[#allocation2 + $0x68] sm:$0xff]
    %v206 = vld [vmem:[#allocation2 + $0x70] sm:$0xff]
    %v207 = vld [vmem:[#allocation2 + $0x78] sm:$0xff]
    %v208 = vld [vmem:[#allocation5] sm:$0xff]
    %v209 = vld [vmem:[#allocation5 + $0x8] sm:$0xff]
    %v210 = vld [vmem:[#allocation5 + $0x10] sm:$0xff]
    %v211 = vld [vmem:[#allocation5 + $0x18] sm:$0xff]
    %v212 = vld [vmem:[#allocation5 + $0x20] sm:$0xff]
    %v213 = vld [vmem:[#allocation5 + $0x28] sm:$0xff]
    %v214 = vld [vmem:[#allocation5 + $0x30] sm:$0xff]
    %v215 = vld [vmem:[#allocation5 + $0x38] sm:$0xff]
    %v216 = vld [vmem:[#allocation5 + $0x40] sm:$0xff]
    %v217 = vld [vmem:[#allocation5 + $0x48] sm:$0xff]
    %v218 = vld [vmem:[#allocation5 + $0x50] sm:$0xff]
    %v219 = vld [vmem:[#allocation5 + $0x58] sm:$0xff]
    %v220 = vld [vmem:[#allocation5 + $0x60] sm:$0xff]
    %v221 = vld [vmem:[#allocation5 + $0x68] sm:$0xff]
    %v222 = vld [vmem:[#allocation5 + $0x70] sm:$0xff]
    %v223 = vld [vmem:[#allocation5 + $0x78] sm:$0xff]
    %v224 = vld [vmem:[#allocation5 + $0x80] sm:$0xff]
    %v225 = vld [vmem:[#allocation5 + $0x88] sm:$0xff]
    %v226 = vld [vmem:[#allocation5 + $0x90] sm:$0xff]
    %v227 = vld [vmem:[#allocation5 + $0x98] sm:$0xff]
    %v228 = vld [vmem:[#allocation5 + $0xa0] sm:$0xff]
    %v229 = vld [vmem:[#allocation5 + $0xa8] sm:$0xff]
    %v230 = vld [vmem:[#allocation5 + $0xb0] sm:$0xff]
    %v231 = vld [vmem:[#allocation5 + $0xb8] sm:$0xff]
    %v232 = vld [vmem:[#allocation5 + $0xc0] sm:$0xff]
    %v233 = vld [vmem:[#allocation5 + $0xc8] sm:$0xff]
    %v234 = vld [vmem:[#allocation5 + $0xd0] sm:$0xff]
    %v235 = vld [vmem:[#allocation5 + $0xd8] sm:$0xff]
    %v236 = vld [vmem:[#allocation5 + $0xe0] sm:$0xff]
    %v237 = vld [vmem:[#allocation5 + $0xe8] sm:$0xff]
    %v238 = vld [vmem:[#allocation5 + $0xf0] sm:$0xff]
    %v239 = vld [vmem:[#allocation5 + $0xf8] sm:$0xff]
    %v240 = vld [vmem:[#allocation5 + $0x100] sm:$0xff]
    %v241 = vld [vmem:[#allocation5 + $0x108] sm:$0xff]
    %v242 = vld [vmem:[#allocation5 + $0x110] sm:$0xff]
    %v243 = vld [vmem:[#allocation5 + $0x118] sm:$0xff]
    %v244 = vld [vmem:[#allocation5 + $0x120] sm:$0xff]
    %v245 = vld [vmem:[#allocation5 + $0x128] sm:$0xff]
    %v246 = vld [vmem:[#allocation5 + $0x130] sm:$0xff]
    %v247 = vld [vmem:[#allocation5 + $0x138] sm:$0xff]
    %v248 = vld [vmem:[#allocation5 + $0x140] sm:$0xff]
    %v249 = vld [vmem:[#allocation5 + $0x148] sm:$0xff]
    %v250 = vld [vmem:[#allocation5 + $0x150] sm:$0xff]
    %v251 = vld [vmem:[#allocation5 + $0x158] sm:$0xff]
    %v252 = vld [vmem:[#allocation5 + $0x160] sm:$0xff]
    %v253 = vld [vmem:[#allocation5 + $0x168] sm:$0xff]
    %v254 = vld [vmem:[#allocation5 + $0x170] sm:$0xff]
    %v255 = vld [vmem:[#allocation5 + $0x178] sm:$0xff]
    %v256 = vld [vmem:[#allocation5 + $0x180] sm:$0xff]
    %v257 = vld [vmem:[#allocation5 + $0x188] sm:$0xff]
    %v258 = vld [vmem:[#allocation5 + $0x190] sm:$0xff]
    %v259 = vld [vmem:[#allocation5 + $0x198] sm:$0xff]
    %v260 = vld [vmem:[#allocation5 + $0x1a0] sm:$0xff]
    %v261 = vld [vmem:[#allocation5 + $0x1a8] sm:$0xff]
    %v262 = vld [vmem:[#allocation5 + $0x1b0] sm:$0xff]
    %v263 = vld [vmem:[#allocation5 + $0x1b8] sm:$0xff]
    %v264 = vld [vmem:[#allocation5 + $0x1c0] sm:$0xff]
    %v265 = vld [vmem:[#allocation5 + $0x1c8] sm:$0xff]
    %v266 = vld [vmem:[#allocation5 + $0x1d0] sm:$0xff]
    %v267 = vld [vmem:[#allocation5 + $0x1d8] sm:$0xff]
    %v268 = vld [vmem:[#allocation5 + $0x1e0] sm:$0xff]
    %v269 = vld [vmem:[#allocation5 + $0x1e8] sm:$0xff]
    %v270 = vld [vmem:[#allocation5 + $0x1f0] sm:$0xff]
    %v271 = vld [vmem:[#allocation5 + $0x1f8] sm:$0xff]
    %272 = vmatpush.msra.mxu0 %v268
    %273 = vmatpush.msra.mxu0 %v264
    %274 = vmatpush.msra.mxu0 %v260
    %275 = vmatpush.msra.mxu0 %v256
    %276 = vmatpush.msra.mxu0 %v252
    %277 = vmatpush.msra.mxu0 %v248
    %278 = vmatpush.msra.mxu0 %v244
    %279 = vmatpush.msra.mxu0 %v240
    %280 = vmatpush.msra.mxu0 %v236
    %281 = vmatpush.msra.mxu0 %v232
    %282 = vmatpush.msra.mxu0 %v228
    %283 = vmatpush.msra.mxu0 %v224
    %284 = vmatpush.msra.mxu0 %v220
    %285 = vmatpush.msra.mxu0 %v216
    %286 = vmatpush.msra.mxu0 %v212
    %287 = vmatpush.msra.mxu0 %v208
    %288 = vmatmul.f32.gmra.mxu0 0.0
    %v289 = vpop.f32.mrf.mxu0
    %v290 = vadd.f32 0.0, %v289
    %291 = vdwg.mxu0
    %292 = vmatpush.msra.mxu0 %v269
    %293 = vmatpush.msra.mxu0 %v265
    %294 = vmatpush.msra.mxu0 %v261
    %295 = vmatpush.msra.mxu0 %v257
    %296 = vmatpush.msra.mxu0 %v253
    %297 = vmatpush.msra.mxu0 %v249
    %298 = vmatpush.msra.mxu0 %v245
    %299 = vmatpush.msra.mxu0 %v241
    %300 = vmatpush.msra.mxu0 %v237
    %301 = vmatpush.msra.mxu0 %v233
    %302 = vmatpush.msra.mxu0 %v229
    %303 = vmatpush.msra.mxu0 %v225
    %304 = vmatpush.msra.mxu0 %v221
    %305 = vmatpush.msra.mxu0 %v217
    %306 = vmatpush.msra.mxu0 %v213
    %307 = vmatpush.msra.mxu0 %v209
    %308 = vmatmul.f32.gmra.mxu0 0.0
    %v309 = vpop.f32.mrf.mxu0
    %v310 = vadd.f32 0.0, %v309
    %311 = vdwg.mxu0
    %312 = vmatpush.msra.mxu0 %v270
    %313 = vmatpush.msra.mxu0 %v266
    %314 = vmatpush.msra.mxu0 %v262
    %315 = vmatpush.msra.mxu0 %v258
    %316 = vmatpush.msra.mxu0 %v254
    %317 = vmatpush.msra.mxu0 %v250
    %318 = vmatpush.msra.mxu0 %v246
    %319 = vmatpush.msra.mxu0 %v242
    %320 = vmatpush.msra.mxu0 %v238
    %321 = vmatpush.msra.mxu0 %v234
    %322 = vmatpush.msra.mxu0 %v230
    %323 = vmatpush.msra.mxu0 %v226
    %324 = vmatpush.msra.mxu0 %v222
    %325 = vmatpush.msra.mxu0 %v218
    %326 = vmatpush.msra.mxu0 %v214
    %327 = vmatpush.msra.mxu0 %v210
    %328 = vmatmul.f32.gmra.mxu0 0.0
    %v329 = vpop.f32.mrf.mxu0
    %v330 = vadd.f32 0.0, %v329
    %331 = vdwg.mxu0
    %332 = vmatpush.msra.mxu0 %v271
    %333 = vmatpush.msra.mxu0 %v267
    %334 = vmatpush.msra.mxu0 %v263
    %335 = vmatpush.msra.mxu0 %v259
    %336 = vmatpush.msra.mxu0 %v255
    %337 = vmatpush.msra.mxu0 %v251
    %338 = vmatpush.msra.mxu0 %v247
    %339 = vmatpush.msra.mxu0 %v243
    %340 = vmatpush.msra.mxu0 %v239
    %341 = vmatpush.msra.mxu0 %v235
    %342 = vmatpush.msra.mxu0 %v231
    %343 = vmatpush.msra.mxu0 %v227
    %344 = vmatpush.msra.mxu0 %v223
    %345 = vmatpush.msra.mxu0 %v219
    %346 = vmatpush.msra.mxu0 %v215
    %347 = vmatpush.msra.mxu0 %v211
    %348 = vmatmul.f32.gmra.mxu0 0.0
    %v349 = vpop.f32.mrf.mxu0
    %v350 = vadd.f32 0.0, %v349
    %351 = vdwg.mxu0
    %vm352 = vcmask 261120
    %v354 = vsel %vm352, %v191, 0
    %356 = vmatpush.msra.mxu0 0.0
    %357 = vmatpush.msra.mxu0 0.0
    %358 = vmatpush.msra.mxu0 0.0
    %359 = vmatpush.msra.mxu0 0.0
    %360 = vmatpush.msra.mxu0 0.0
    %361 = vmatpush.msra.mxu0 0.0
    %362 = vmatpush.msra.mxu0 0.0
    %363 = vmatpush.msra.mxu0 0.0
    %364 = vmatpush.msra.mxu0 0.0
    %365 = vmatpush.msra.mxu0 0.0
    %366 = vmatpush.msra.mxu0 0.0
    %367 = vmatpush.msra.mxu0 0.0
    %368 = vmatpush.msra.mxu0 %v204
    %369 = vmatpush.msra.mxu0 %v200
    %370 = vmatpush.msra.mxu0 %v196
    %371 = vmatpush.msra.mxu0 %v192
    %372 = vmatmul.f32.gmra.mxu0 %v354
    %v373 = vpop.f32.mrf.mxu0
    %v374 = vadd.f32 %v290, %v373
    %375 = vdwg.mxu0
    %376 = vmatpush.msra.mxu0 0.0
    %377 = vmatpush.msra.mxu0 0.0
    %378 = vmatpush.msra.mxu0 0.0
    %379 = vmatpush.msra.mxu0 0.0
    %380 = vmatpush.msra.mxu0 0.0
    %381 = vmatpush.msra.mxu0 0.0
    %382 = vmatpush.msra.mxu0 0.0
    %383 = vmatpush.msra.mxu0 0.0
    %384 = vmatpush.msra.mxu0 0.0
    %385 = vmatpush.msra.mxu0 0.0
    %386 = vmatpush.msra.mxu0 0.0
    %387 = vmatpush.msra.mxu0 0.0
    %388 = vmatpush.msra.mxu0 %v205
    %389 = vmatpush.msra.mxu0 %v201
    %390 = vmatpush.msra.mxu0 %v197
    %391 = vmatpush.msra.mxu0 %v193
    %392 = vmatmul.f32.gmra.mxu0 %v354
    %v393 = vpop.f32.mrf.mxu0
    %v394 = vadd.f32 %v310, %v393
    %395 = vdwg.mxu0
    %396 = vmatpush.msra.mxu0 0.0
    %397 = vmatpush.msra.mxu0 0.0
    %398 = vmatpush.msra.mxu0 0.0
    %399 = vmatpush.msra.mxu0 0.0
    %400 = vmatpush.msra.mxu0 0.0
    %401 = vmatpush.msra.mxu0 0.0
    %402 = vmatpush.msra.mxu0 0.0
    %403 = vmatpush.msra.mxu0 0.0
    %404 = vmatpush.msra.mxu0 0.0
    %405 = vmatpush.msra.mxu0 0.0
    %406 = vmatpush.msra.mxu0 0.0
    %407 = vmatpush.msra.mxu0 0.0
    %408 = vmatpush.msra.mxu0 %v206
    %409 = vmatpush.msra.mxu0 %v202
    %410 = vmatpush.msra.mxu0 %v198
    %411 = vmatpush.msra.mxu0 %v194
    %412 = vmatmul.f32.gmra.mxu0 %v354
    %v413 = vpop.f32.mrf.mxu0
    %v414 = vadd.f32 %v330, %v413
    %415 = vdwg.mxu0
    %416 = vmatpush.msra.mxu0 0.0
    %417 = vmatpush.msra.mxu0 0.0
    %418 = vmatpush.msra.mxu0 0.0
    %419 = vmatpush.msra.mxu0 0.0
    %420 = vmatpush.msra.mxu0 0.0
    %421 = vmatpush.msra.mxu0 0.0
    %422 = vmatpush.msra.mxu0 0.0
    %423 = vmatpush.msra.mxu0 0.0
    %424 = vmatpush.msra.mxu0 0.0
    %425 = vmatpush.msra.mxu0 0.0
    %426 = vmatpush.msra.mxu0 0.0
    %427 = vmatpush.msra.mxu0 0.0
    %428 = vmatpush.msra.mxu0 %v207
    %429 = vmatpush.msra.mxu0 %v203
    %430 = vmatpush.msra.mxu0 %v199
    %431 = vmatpush.msra.mxu0 %v195
    %432 = vmatmul.f32.gmra.mxu0 %v354
    %v433 = vpop.f32.mrf.mxu0
    %v434 = vadd.f32 %v350, %v433
    %435 = vdwg.mxu0
    %v436 = vld [vmem:[%s7] sm:$0xf]
    %v438 = vperm.slane %v436, 0
    %v439 = vperm.slane %v436, 1
    %v440 = vperm.slane %v436, 2
    %v441 = vperm.slane %v436, 3
    %v446 = vadd.f32 %v374, %v438
    %v447 = vadd.f32 %v394, %v439
    %v448 = vadd.f32 %v414, %v440
    %v449 = vadd.f32 %v434, %v441
    %v450 = vxor.u32 %v446, 2147483648
    %v451 = vmul.f32 %v450, 1.442695
    %v452 = vpow.pop %v451
    %v453 = vadd.f32 %v452, 1.0
    %v454 = vrcp.pop %v453
    %v455 = vmul.f32 %v453, %v454
    %v456 = vsub.f32 1.0, %v455
    %v457 = vmul.f32 %v454, %v456
    %v458 = vadd.f32 %v454, %v457
    %vm459 = vweird.f32 %v453
    %vm460 = vweird.f32 %v454
    %vm461 = vmor %vm459, %vm460
    %v462 = vsel %vm461, %v454, %v458
    %v463 = vand.u32 2147483647, %v453
    %vm464 = vcmp.eq.f32.partialorder %v463, 8.507059e+37
    %v465 = vand.u32 %v453, 2147483648
    %v466 = vor.u32 1.1754944e-38, %v465
    %v467 = vsel %vm464, %v466, %v462
    %v468 = vmul.f32 1.0, %v467
    %v469 = vxor.u32 %v447, 2147483648
    %v470 = vmul.f32 %v469, 1.442695
    %v471 = vpow.pop %v470
    %v472 = vadd.f32 %v471, 1.0
    %v473 = vrcp.pop %v472
    %v474 = vmul.f32 %v472, %v473
    %v475 = vsub.f32 1.0, %v474
    %v476 = vmul.f32 %v473, %v475
    %v477 = vadd.f32 %v473, %v476
    %vm478 = vweird.f32 %v472
    %vm479 = vweird.f32 %v473
    %vm480 = vmor %vm478, %vm479
    %v481 = vsel %vm480, %v473, %v477
    %v482 = vand.u32 2147483647, %v472
    %vm483 = vcmp.eq.f32.partialorder %v482, 8.507059e+37
    %v484 = vand.u32 %v472, 2147483648
    %v485 = vor.u32 1.1754944e-38, %v484
    %v486 = vsel %vm483, %v485, %v481
    %v487 = vmul.f32 1.0, %v486
    %v488 = vtanh.pop %v448
    %v489 = vxor.u32 %v449, 2147483648
    %v490 = vmul.f32 %v489, 1.442695
    %v491 = vpow.pop %v490
    %v492 = vadd.f32 %v491, 1.0
    %v493 = vrcp.pop %v492
    %v494 = vmul.f32 %v492, %v493
    %v495 = vsub.f32 1.0, %v494
    %v496 = vmul.f32 %v493, %v495
    %v497 = vadd.f32 %v493, %v496
    %vm498 = vweird.f32 %v492
    %vm499 = vweird.f32 %v493
    %vm500 = vmor %vm498, %vm499
    %v501 = vsel %vm500, %v493, %v497
    %v502 = vand.u32 2147483647, %v492
    %vm503 = vcmp.eq.f32.partialorder %v502, 8.507059e+37
    %v504 = vand.u32 %v492, 2147483648
    %v505 = vor.u32 1.1754944e-38, %v504
    %v506 = vsel %vm503, %v505, %v501
    %v507 = vmul.f32 1.0, %v506
    %v508 = vmul.f32 %v487, 0.0
    %v509 = vmul.f32 %v468, %v488
    %v510 = vadd.f32 %v508, %v509
    %v511 = vtanh.pop %v510
    %v512 = vmul.f32 %v507, %v511
    %v513 = vld [vmem:[#allocation11] sm:$0xff]
    %v514 = vld [vmem:[#allocation11 + $0x8] sm:$0xff]
    %v515 = vld [vmem:[#allocation11 + $0x10] sm:$0xff]
    %v516 = vld [vmem:[#allocation11 + $0x18] sm:$0xff]
    %v517 = vld [vmem:[#allocation11 + $0x20] sm:$0xff]
    %v518 = vld [vmem:[#allocation11 + $0x28] sm:$0xff]
    %v519 = vld [vmem:[#allocation11 + $0x30] sm:$0xff]
    %v520 = vld [vmem:[#allocation11 + $0x38] sm:$0xff]
    %v521 = vld [vmem:[#allocation11 + $0x40] sm:$0xff]
    %v522 = vld [vmem:[#allocation11 + $0x48] sm:$0xff]
    %v523 = vld [vmem:[#allocation11 + $0x50] sm:$0xff]
    %v524 = vld [vmem:[#allocation11 + $0x58] sm:$0xff]
    %v525 = vld [vmem:[#allocation11 + $0x60] sm:$0xff]
    %v526 = vld [vmem:[#allocation11 + $0x68] sm:$0xff]
    %v527 = vld [vmem:[#allocation11 + $0x70] sm:$0xff]
    %v528 = vld [vmem:[#allocation11 + $0x78] sm:$0xff]
    %v529 = vld [vmem:[%s14] sm:$0x1]
    %v531 = vperm.slane %v529, 0
    %533 = vmatpush.msra.mxu0 %v528
    %534 = vmatpush.msra.mxu0 %v527
    %535 = vmatpush.msra.mxu0 %v526
    %536 = vmatpush.msra.mxu0 %v525
    %537 = vmatpush.msra.mxu0 %v524
    %538 = vmatpush.msra.mxu0 %v523
    %539 = vmatpush.msra.mxu0 %v522
    %540 = vmatpush.msra.mxu0 %v521
    %541 = vmatpush.msra.mxu0 %v520
    %542 = vmatpush.msra.mxu0 %v519
    %543 = vmatpush.msra.mxu0 %v518
    %544 = vmatpush.msra.mxu0 %v517
    %545 = vmatpush.msra.mxu0 %v516
    %546 = vmatpush.msra.mxu0 %v515
    %547 = vmatpush.msra.mxu0 %v514
    %548 = vmatpush.msra.mxu0 %v513
    %549 = vmatmul.f32.gmra.mxu0 %v512
    %v550 = vpop.f32.mrf.mxu0
    %v551 = vadd.f32 %v531, %v550
    %552 = vdwg.mxu0
    %v553 = vlaneseq
    %v554 = vand.u32 %v553, 127
    %v555 = vxor.u32 %v551, 2147483648
    %v556 = vmul.f32 %v555, 1.442695
    %v557 = vpow.pop %v556
    %v558 = vadd.f32 %v557, 1.0
    %v559 = vrcp.pop %v558
    %v560 = vmul.f32 %v558, %v559
    %v561 = vsub.f32 1.0, %v560
    %v562 = vmul.f32 %v559, %v561
    %v563 = vadd.f32 %v559, %v562
    %vm564 = vweird.f32 %v558
    %vm565 = vweird.f32 %v559
    %vm566 = vmor %vm564, %vm565
    %v567 = vsel %vm566, %v559, %v563
    %v568 = vand.u32 2147483647, %v558
    %vm569 = vcmp.eq.f32.partialorder %v568, 8.507059e+37
    %v570 = vand.u32 %v558, 2147483648
    %v571 = vor.u32 1.1754944e-38, %v570
    %v572 = vsel %vm569, %v571, %v567
    %v573 = vmul.f32 1.0, %v572
    %vm574 = vcmp.lt.s32.totalorder %v554, 2
    %vm575 = vcmp.lt.s32.totalorder %v554, 4
    %v576 = vmul.f32 %v573, 0.2
    %v577 = vadd.f32 %v576, 0.01
    %v578 = vmul.f32 %v573, 0.7
    %v579 = vsel %vm575, %v577, %v578
    %v580 = vsel %vm574, %v551, %v579
    %v581 = vsel %vm156, 1, 0
    %582 = vset.pattern.permute.xlu0 0
    %583 = vperm.xlu0 %582, %v581
    %v584 = vpop.permute.xlu0 %583
    %vm585 = vcmp.eq.s32.totalorder %v584, 1
    %v586 = vsel %vm585, %v512, 0.0
    %v587 = vsel %vm585, %v510, 0.0
    %v588 = vsel %vm585, %v580, nan
    %v589 = vadd.f32 %v150, %v588
    %590 = vst [vmem:[#allocation13] sm:$0xff] %v588
    %591 = vst.msk [vmem:[%s16] sm:$0xff] %vm163, %v589
    %vm592 = vcmp.ne.f32.partialorder %v151, %v151
    %vm593 = vmor %vm154, %vm592
    %vm594 = vmxor %vm593, 1
    %v595 = vsub.f32 %v151, %v150
    %v596 = vld [vmem:[%s3] sm:$0x3]
    %v597 = vld [vmem:[%s4] sm:$0x1]
    %v599 = vperm.slane %v597, 0
    %v602 = vsel %vm163, %v595, 0
    %v605 = vsel %vm167, %v596, 0
    %607 = vmatpush.msra.mxu0 0.0
    %608 = vmatpush.msra.mxu0 0.0
    %609 = vmatpush.msra.mxu0 0.0
    %610 = vmatpush.msra.mxu0 0.0
    %611 = vmatpush.msra.mxu0 0.0
    %612 = vmatpush.msra.mxu0 0.0
    %613 = vmatpush.msra.mxu0 0.0
    %614 = vmatpush.msra.mxu0 0.0
    %615 = vmatpush.msra.mxu0 0.0
    %616 = vmatpush.msra.mxu0 0.0
    %617 = vmatpush.msra.mxu0 0.0
    %618 = vmatpush.msra.mxu0 0.0
    %619 = vmatpush.msra.mxu0 0.0
    %620 = vmatpush.msra.mxu0 0.0
    %621 = vmatpush.msra.mxu0 0.0
    %622 = vmatpush.msra.mxu0 %v605
    %623 = vmatmul.f32.gmra.mxu0 %v602
    %v624 = vpop.f32.mrf.mxu0
    %v625 = vadd.f32 %v599, %v624
    %626 = vdwg.mxu0
    %v627 = vmax.f32 %v625, 0.0
    %v628 = vld [vmem:[#allocation2] sm:$0xff]
    %v629 = vld [vmem:[#allocation2 + $0x8] sm:$0xff]
    %v630 = vld [vmem:[#allocation2 + $0x10] sm:$0xff]
    %v631 = vld [vmem:[#allocation2 + $0x18] sm:$0xff]
    %v632 = vld [vmem:[#allocation2 + $0x20] sm:$0xff]
    %v633 = vld [vmem:[#allocation2 + $0x28] sm:$0xff]
    %v634 = vld [vmem:[#allocation2 + $0x30] sm:$0xff]
    %v635 = vld [vmem:[#allocation2 + $0x38] sm:$0xff]
    %v636 = vld [vmem:[#allocation2 + $0x40] sm:$0xff]
    %v637 = vld [vmem:[#allocation2 + $0x48] sm:$0xff]
    %v638 = vld [vmem:[#allocation2 + $0x50] sm:$0xff]
    %v639 = vld [vmem:[#allocation2 + $0x58] sm:$0xff]
    %v640 = vld [vmem:[#allocation2 + $0x60] sm:$0xff]
    %v641 = vld [vmem:[#allocation2 + $0x68] sm:$0xff]
    %v642 = vld [vmem:[#allocation2 + $0x70] sm:$0xff]
    %v643 = vld [vmem:[#allocation2 + $0x78] sm:$0xff]
    %v644 = vld [vmem:[#allocation5] sm:$0xff]
    %v645 = vld [vmem:[#allocation5 + $0x8] sm:$0xff]
    %v646 = vld [vmem:[#allocation5 + $0x10] sm:$0xff]
    %v647 = vld [vmem:[#allocation5 + $0x18] sm:$0xff]
    %v648 = vld [vmem:[#allocation5 + $0x20] sm:$0xff]
    %v649 = vld [vmem:[#allocation5 + $0x28] sm:$0xff]
    %v650 = vld [vmem:[#allocation5 + $0x30] sm:$0xff]
    %v651 = vld [vmem:[#allocation5 + $0x38] sm:$0xff]
    %v652 = vld [vmem:[#allocation5 + $0x40] sm:$0xff]
    %v653 = vld [vmem:[#allocation5 + $0x48] sm:$0xff]
    %v654 = vld [vmem:[#allocation5 + $0x50] sm:$0xff]
    %v655 = vld [vmem:[#allocation5 + $0x58] sm:$0xff]
    %v656 = vld [vmem:[#allocation5 + $0x60] sm:$0xff]
    %v657 = vld [vmem:[#allocation5 + $0x68] sm:$0xff]
    %v658 = vld [vmem:[#allocation5 + $0x70] sm:$0xff]
    %v659 = vld [vmem:[#allocation5 + $0x78] sm:$0xff]
    %v660 = vld [vmem:[#allocation5 + $0x80] sm:$0xff]
    %v661 = vld [vmem:[#allocation5 + $0x88] sm:$0xff]
    %v662 = vld [vmem:[#allocation5 + $0x90] sm:$0xff]
    %v663 = vld [vmem:[#allocation5 + $0x98] sm:$0xff]
    %v664 = vld [vmem:[#allocation5 + $0xa0] sm:$0xff]
    %v665 = vld [vmem:[#allocation5 + $0xa8] sm:$0xff]
    %v666 = vld [vmem:[#allocation5 + $0xb0] sm:$0xff]
    %v667 = vld [vmem:[#allocation5 + $0xb8] sm:$0xff]
    %v668 = vld [vmem:[#allocation5 + $0xc0] sm:$0xff]
    %v669 = vld [vmem:[#allocation5 + $0xc8] sm:$0xff]
    %v670 = vld [vmem:[#allocation5 + $0xd0] sm:$0xff]
    %v671 = vld [vmem:[#allocation5 + $0xd8] sm:$0xff]
    %v672 = vld [vmem:[#allocation5 + $0xe0] sm:$0xff]
    %v673 = vld [vmem:[#allocation5 + $0xe8] sm:$0xff]
    %v674 = vld [vmem:[#allocation5 + $0xf0] sm:$0xff]
    %v675 = vld [vmem:[#allocation5 + $0xf8] sm:$0xff]
    %v676 = vld [vmem:[#allocation5 + $0x100] sm:$0xff]
    %v677 = vld [vmem:[#allocation5 + $0x108] sm:$0xff]
    %v678 = vld [vmem:[#allocation5 + $0x110] sm:$0xff]
    %v679 = vld [vmem:[#allocation5 + $0x118] sm:$0xff]
    %v680 = vld [vmem:[#allocation5 + $0x120] sm:$0xff]
    %v681 = vld [vmem:[#allocation5 + $0x128] sm:$0xff]
    %v682 = vld [vmem:[#allocation5 + $0x130] sm:$0xff]
    %v683 = vld [vmem:[#allocation5 + $0x138] sm:$0xff]
    %v684 = vld [vmem:[#allocation5 + $0x140] sm:$0xff]
    %v685 = vld [vmem:[#allocation5 + $0x148] sm:$0xff]
    %v686 = vld [vmem:[#allocation5 + $0x150] sm:$0xff]
    %v687 = vld [vmem:[#allocation5 + $0x158] sm:$0xff]
    %v688 = vld [vmem:[#allocation5 + $0x160] sm:$0xff]
    %v689 = vld [vmem:[#allocation5 + $0x168] sm:$0xff]
    %v690 = vld [vmem:[#allocation5 + $0x170] sm:$0xff]
    %v691 = vld [vmem:[#allocation5 + $0x178] sm:$0xff]
    %v692 = vld [vmem:[#allocation5 + $0x180] sm:$0xff]
    %v693 = vld [vmem:[#allocation5 + $0x188] sm:$0xff]
    %v694 = vld [vmem:[#allocation5 + $0x190] sm:$0xff]
    %v695 = vld [vmem:[#allocation5 + $0x198] sm:$0xff]
    %v696 = vld [vmem:[#allocation5 + $0x1a0] sm:$0xff]
    %v697 = vld [vmem:[#allocation5 + $0x1a8] sm:$0xff]
    %v698 = vld [vmem:[#allocation5 + $0x1b0] sm:$0xff]
    %v699 = vld [vmem:[#allocation5 + $0x1b8] sm:$0xff]
    %v700 = vld [vmem:[#allocation5 + $0x1c0] sm:$0xff]
    %v701 = vld [vmem:[#allocation5 + $0x1c8] sm:$0xff]
    %v702 = vld [vmem:[#allocation5 + $0x1d0] sm:$0xff]
    %v703 = vld [vmem:[#allocation5 + $0x1d8] sm:$0xff]
    %v704 = vld [vmem:[#allocation5 + $0x1e0] sm:$0xff]
    %v705 = vld [vmem:[#allocation5 + $0x1e8] sm:$0xff]
    %v706 = vld [vmem:[#allocation5 + $0x1f0] sm:$0xff]
    %v707 = vld [vmem:[#allocation5 + $0x1f8] sm:$0xff]
    %708 = vmatpush.msra.mxu0 %v704
    %709 = vmatpush.msra.mxu0 %v700
    %710 = vmatpush.msra.mxu0 %v696
    %711 = vmatpush.msra.mxu0 %v692
    %712 = vmatpush.msra.mxu0 %v688
    %713 = vmatpush.msra.mxu0 %v684
    %714 = vmatpush.msra.mxu0 %v680
    %715 = vmatpush.msra.mxu0 %v676
    %716 = vmatpush.msra.mxu0 %v672
    %717 = vmatpush.msra.mxu0 %v668
    %718 = vmatpush.msra.mxu0 %v664
    %719 = vmatpush.msra.mxu0 %v660
    %720 = vmatpush.msra.mxu0 %v656
    %721 = vmatpush.msra.mxu0 %v652
    %722 = vmatpush.msra.mxu0 %v648
    %723 = vmatpush.msra.mxu0 %v644
    %724 = vmatmul.f32.gmra.mxu0 %v586
    %v725 = vpop.f32.mrf.mxu0
    %v726 = vadd.f32 0.0, %v725
    %727 = vdwg.mxu0
    %728 = vmatpush.msra.mxu0 %v705
    %729 = vmatpush.msra.mxu0 %v701
    %730 = vmatpush.msra.mxu0 %v697
    %731 = vmatpush.msra.mxu0 %v693
    %732 = vmatpush.msra.mxu0 %v689
    %733 = vmatpush.msra.mxu0 %v685
    %734 = vmatpush.msra.mxu0 %v681
    %735 = vmatpush.msra.mxu0 %v677
    %736 = vmatpush.msra.mxu0 %v673
    %737 = vmatpush.msra.mxu0 %v669
    %738 = vmatpush.msra.mxu0 %v665
    %739 = vmatpush.msra.mxu0 %v661
    %740 = vmatpush.msra.mxu0 %v657
    %741 = vmatpush.msra.mxu0 %v653
    %742 = vmatpush.msra.mxu0 %v649
    %743 = vmatpush.msra.mxu0 %v645
    %744 = vmatmul.f32.gmra.mxu0 %v586
    %v745 = vpop.f32.mrf.mxu0
    %v746 = vadd.f32 0.0, %v745
    %747 = vdwg.mxu0
    %748 = vmatpush.msra.mxu0 %v706
    %749 = vmatpush.msra.mxu0 %v702
    %750 = vmatpush.msra.mxu0 %v698
    %751 = vmatpush.msra.mxu0 %v694
    %752 = vmatpush.msra.mxu0 %v690
    %753 = vmatpush.msra.mxu0 %v686
    %754 = vmatpush.msra.mxu0 %v682
    %755 = vmatpush.msra.mxu0 %v678
    %756 = vmatpush.msra.mxu0 %v674
    %757 = vmatpush.msra.mxu0 %v670
    %758 = vmatpush.msra.mxu0 %v666
    %759 = vmatpush.msra.mxu0 %v662
    %760 = vmatpush.msra.mxu0 %v658
    %761 = vmatpush.msra.mxu0 %v654
    %762 = vmatpush.msra.mxu0 %v650
    %763 = vmatpush.msra.mxu0 %v646
    %764 = vmatmul.f32.gmra.mxu0 %v586
    %v765 = vpop.f32.mrf.mxu0
    %v766 = vadd.f32 0.0, %v765
    %767 = vdwg.mxu0
    %768 = vmatpush.msra.mxu0 %v707
    %769 = vmatpush.msra.mxu0 %v703
    %770 = vmatpush.msra.mxu0 %v699
    %771 = vmatpush.msra.mxu0 %v695
    %772 = vmatpush.msra.mxu0 %v691
    %773 = vmatpush.msra.mxu0 %v687
    %774 = vmatpush.msra.mxu0 %v683
    %775 = vmatpush.msra.mxu0 %v679
    %776 = vmatpush.msra.mxu0 %v675
    %777 = vmatpush.msra.mxu0 %v671
    %778 = vmatpush.msra.mxu0 %v667
    %779 = vmatpush.msra.mxu0 %v663
    %780 = vmatpush.msra.mxu0 %v659
    %781 = vmatpush.msra.mxu0 %v655
    %782 = vmatpush.msra.mxu0 %v651
    %783 = vmatpush.msra.mxu0 %v647
    %784 = vmatmul.f32.gmra.mxu0 %v586
    %v785 = vpop.f32.mrf.mxu0
    %v786 = vadd.f32 0.0, %v785
    %787 = vdwg.mxu0
    %v789 = vsel %vm352, %v627, 0
    %791 = vmatpush.msra.mxu0 0.0
    %792 = vmatpush.msra.mxu0 0.0
    %793 = vmatpush.msra.mxu0 0.0
    %794 = vmatpush.msra.mxu0 0.0
    %795 = vmatpush.msra.mxu0 0.0
    %796 = vmatpush.msra.mxu0 0.0
    %797 = vmatpush.msra.mxu0 0.0
    %798 = vmatpush.msra.mxu0 0.0
    %799 = vmatpush.msra.mxu0 0.0
    %800 = vmatpush.msra.mxu0 0.0
    %801 = vmatpush.msra.mxu0 0.0
    %802 = vmatpush.msra.mxu0 0.0
    %803 = vmatpush.msra.mxu0 %v640
    %804 = vmatpush.msra.mxu0 %v636
    %805 = vmatpush.msra.mxu0 %v632
    %806 = vmatpush.msra.mxu0 %v628
    %807 = vmatmul.f32.gmra.mxu0 %v789
    %v808 = vpop.f32.mrf.mxu0
    %v809 = vadd.f32 %v726, %v808
    %810 = vdwg.mxu0
    %811 = vmatpush.msra.mxu0 0.0
    %812 = vmatpush.msra.mxu0 0.0
    %813 = vmatpush.msra.mxu0 0.0
    %814 = vmatpush.msra.mxu0 0.0
    %815 = vmatpush.msra.mxu0 0.0
    %816 = vmatpush.msra.mxu0 0.0
    %817 = vmatpush.msra.mxu0 0.0
    %818 = vmatpush.msra.mxu0 0.0
    %819 = vmatpush.msra.mxu0 0.0
    %820 = vmatpush.msra.mxu0 0.0
    %821 = vmatpush.msra.mxu0 0.0
    %822 = vmatpush.msra.mxu0 0.0
    %823 = vmatpush.msra.mxu0 %v641
    %824 = vmatpush.msra.mxu0 %v637
    %825 = vmatpush.msra.mxu0 %v633
    %826 = vmatpush.msra.mxu0 %v629
    %827 = vmatmul.f32.gmra.mxu0 %v789
    %v828 = vpop.f32.mrf.mxu0
    %v829 = vadd.f32 %v746, %v828
    %830 = vdwg.mxu0
    %831 = vmatpush.msra.mxu0 0.0
    %832 = vmatpush.msra.mxu0 0.0
    %833 = vmatpush.msra.mxu0 0.0
    %834 = vmatpush.msra.mxu0 0.0
    %835 = vmatpush.msra.mxu0 0.0
    %836 = vmatpush.msra.mxu0 0.0
    %837 = vmatpush.msra.mxu0 0.0
    %838 = vmatpush.msra.mxu0 0.0
    %839 = vmatpush.msra.mxu0 0.0
    %840 = vmatpush.msra.mxu0 0.0
    %841 = vmatpush.msra.mxu0 0.0
    %842 = vmatpush.msra.mxu0 0.0
    %843 = vmatpush.msra.mxu0 %v642
    %844 = vmatpush.msra.mxu0 %v638
    %845 = vmatpush.msra.mxu0 %v634
    %846 = vmatpush.msra.mxu0 %v630
    %847 = vmatmul.f32.gmra.mxu0 %v789
    %v848 = vpop.f32.mrf.mxu0
    %v849 = vadd.f32 %v766, %v848
    %850 = vdwg.mxu0
    %851 = vmatpush.msra.mxu0 0.0
    %852 = vmatpush.msra.mxu0 0.0
    %853 = vmatpush.msra.mxu0 0.0
    %854 = vmatpush.msra.mxu0 0.0
    %855 = vmatpush.msra.mxu0 0.0
    %856 = vmatpush.msra.mxu0 0.0
    %857 = vmatpush.msra.mxu0 0.0
    %858 = vmatpush.msra.mxu0 0.0
    %859 = vmatpush.msra.mxu0 0.0
    %860 = vmatpush.msra.mxu0 0.0
    %861 = vmatpush.msra.mxu0 0.0
    %862 = vmatpush.msra.mxu0 0.0
    %863 = vmatpush.msra.mxu0 %v643
    %864 = vmatpush.msra.mxu0 %v639
    %865 = vmatpush.msra.mxu0 %v635
    %866 = vmatpush.msra.mxu0 %v631
    %867 = vmatmul.f32.gmra.mxu0 %v789
    %v868 = vpop.f32.mrf.mxu0
    %v869 = vadd.f32 %v786, %v868
    %870 = vdwg.mxu0
    %v871 = vld [vmem:[%s7] sm:$0xf]
    %v873 = vperm.slane %v871, 0
    %v874 = vperm.slane %v871, 1
    %v875 = vperm.slane %v871, 2
    %v876 = vperm.slane %v871, 3
    %v881 = vadd.f32 %v809, %v873
    %v882 = vadd.f32 %v829, %v874
    %v883 = vadd.f32 %v849, %v875
    %v884 = vadd.f32 %v869, %v876
    %v885 = vxor.u32 %v881, 2147483648
    %v886 = vmul.f32 %v885, 1.442695
    %v887 = vpow.pop %v886
    %v888 = vadd.f32 %v887, 1.0
    %v889 = vrcp.pop %v888
    %v890 = vmul.f32 %v888, %v889
    %v891 = vsub.f32 1.0, %v890
    %v892 = vmul.f32 %v889, %v891
    %v893 = vadd.f32 %v889, %v892
    %vm894 = vweird.f32 %v888
    %vm895 = vweird.f32 %v889
    %vm896 = vmor %vm894, %vm895
    %v897 = vsel %vm896, %v889, %v893
    %v898 = vand.u32 2147483647, %v888
    %vm899 = vcmp.eq.f32.partialorder %v898, 8.507059e+37
    %v900 = vand.u32 %v888, 2147483648
    %v901 = vor.u32 1.1754944e-38, %v900
    %v902 = vsel %vm899, %v901, %v897
    %v903 = vmul.f32 1.0, %v902
    %v904 = vxor.u32 %v882, 2147483648
    %v905 = vmul.f32 %v904, 1.442695
    %v906 = vpow.pop %v905
    %v907 = vadd.f32 %v906, 1.0
    %v908 = vrcp.pop %v907
    %v909 = vmul.f32 %v907, %v908
    %v910 = vsub.f32 1.0, %v909
    %v911 = vmul.f32 %v908, %v910
    %v912 = vadd.f32 %v908, %v911
    %vm913 = vweird.f32 %v907
    %vm914 = vweird.f32 %v908
    %vm915 = vmor %vm913, %vm914
    %v916 = vsel %vm915, %v908, %v912
    %v917 = vand.u32 2147483647, %v907
    %vm918 = vcmp.eq.f32.partialorder %v917, 8.507059e+37
    %v919 = vand.u32 %v907, 2147483648
    %v920 = vor.u32 1.1754944e-38, %v919
    %v921 = vsel %vm918, %v920, %v916
    %v922 = vmul.f32 1.0, %v921
    %v923 = vtanh.pop %v883
    %v924 = vxor.u32 %v884, 2147483648
    %v925 = vmul.f32 %v924, 1.442695
    %v926 = vpow.pop %v925
    %v927 = vadd.f32 %v926, 1.0
    %v928 = vrcp.pop %v927
    %v929 = vmul.f32 %v927, %v928
    %v930 = vsub.f32 1.0, %v929
    %v931 = vmul.f32 %v928, %v930
    %v932 = vadd.f32 %v928, %v931
    %vm933 = vweird.f32 %v927
    %vm934 = vweird.f32 %v928
    %vm935 = vmor %vm933, %vm934
    %v936 = vsel %vm935, %v928, %v932
    %v937 = vand.u32 2147483647, %v927
    %vm938 = vcmp.eq.f32.partialorder %v937, 8.507059e+37
    %v939 = vand.u32 %v927, 2147483648
    %v940 = vor.u32 1.1754944e-38, %v939
    %v941 = vsel %vm938, %v940, %v936
    %v942 = vmul.f32 1.0, %v941
    %v943 = vmul.f32 %v922, %v587
    %v944 = vmul.f32 %v903, %v923
    %v945 = vadd.f32 %v943, %v944
    %v946 = vtanh.pop %v945
    %v947 = vmul.f32 %v942, %v946
    %v948 = vld [vmem:[#allocation11] sm:$0xff]
    %v949 = vld [vmem:[#allocation11 + $0x8] sm:$0xff]
    %v950 = vld [vmem:[#allocation11 + $0x10] sm:$0xff]
    %v951 = vld [vmem:[#allocation11 + $0x18] sm:$0xff]
    %v952 = vld [vmem:[#allocation11 + $0x20] sm:$0xff]
    %v953 = vld [vmem:[#allocation11 + $0x28] sm:$0xff]
    %v954 = vld [vmem:[#allocation11 + $0x30] sm:$0xff]
    %v955 = vld [vmem:[#allocation11 + $0x38] sm:$0xff]
    %v956 = vld [vmem:[#allocation11 + $0x40] sm:$0xff]
    %v957 = vld [vmem:[#allocation11 + $0x48] sm:$0xff]
    %v958 = vld [vmem:[#allocation11 + $0x50] sm:$0xff]
    %v959 = vld [vmem:[#allocation11 + $0x58] sm:$0xff]
    %v960 = vld [vmem:[#allocation11 + $0x60] sm:$0xff]
    %v961 = vld [vmem:[#allocation11 + $0x68] sm:$0xff]
    %v962 = vld [vmem:[#allocation11 + $0x70] sm:$0xff]
    %v963 = vld [vmem:[#allocation11 + $0x78] sm:$0xff]
    %v964 = vld [vmem:[%s14] sm:$0x1]
    %v966 = vperm.slane %v964, 0
    %968 = vmatpush.msra.mxu0 %v963
    %969 = vmatpush.msra.mxu0 %v962
    %970 = vmatpush.msra.mxu0 %v961
    %971 = vmatpush.msra.mxu0 %v960
    %972 = vmatpush.msra.mxu0 %v959
    %973 = vmatpush.msra.mxu0 %v958
    %974 = vmatpush.msra.mxu0 %v957
    %975 = vmatpush.msra.mxu0 %v956
    %976 = vmatpush.msra.mxu0 %v955
    %977 = vmatpush.msra.mxu0 %v954
    %978 = vmatpush.msra.mxu0 %v953
    %979 = vmatpush.msra.mxu0 %v952
    %980 = vmatpush.msra.mxu0 %v951
    %981 = vmatpush.msra.mxu0 %v950
    %982 = vmatpush.msra.mxu0 %v949
    %983 = vmatpush.msra.mxu0 %v948
    %984 = vmatmul.f32.gmra.mxu0 %v947
    %v985 = vpop.f32.mrf.mxu0
    %v986 = vadd.f32 %v966, %v985
    %987 = vdwg.mxu0
    %v988 = vxor.u32 %v986, 2147483648
    %v989 = vmul.f32 %v988, 1.442695
    %v990 = vpow.pop %v989
    %v991 = vadd.f32 %v990, 1.0
    %v992 = vrcp.pop %v991
    %v993 = vmul.f32 %v991, %v992
    %v994 = vsub.f32 1.0, %v993
    %v995 = vmul.f32 %v992, %v994
    %v996 = vadd.f32 %v992, %v995
    %vm997 = vweird.f32 %v991
    %vm998 = vweird.f32 %v992
    %vm999 = vmor %vm997, %vm998
    %v1000 = vsel %vm999, %v992, %v996
    %v1001 = vand.u32 2147483647, %v991
    %vm1002 = vcmp.eq.f32.partialorder %v1001, 8.507059e+37
    %v1003 = vand.u32 %v991, 2147483648
    %v1004 = vor.u32 1.1754944e-38, %v1003
    %v1005 = vsel %vm1002, %v1004, %v1000
    %v1006 = vmul.f32 1.0, %v1005
    %v1007 = vmul.f32 %v1006, 0.2
    %v1008 = vadd.f32 %v1007, 0.01
    %v1009 = vmul.f32 %v1006, 0.7
    %v1010 = vsel %vm575, %v1008, %v1009
    %v1011 = vsel %vm574, %v986, %v1010
    %v1012 = vsel %vm594, 1, 0
    %1013 = vset.pattern.permute.xlu0 0
    %1014 = vperm.xlu0 %1013, %v1012
    %v1015 = vpop.permute.xlu0 %1014
    %vm1016 = vcmp.eq.s32.totalorder %v1015, 1
    %v1017 = vsel %vm1016, %v947, %v586
    %v1018 = vsel %vm1016, %v945, %v587
    %v1019 = vsel %vm1016, %v1011, nan
    %v1020 = vadd.f32 %v151, %v1019
    %s1021 = scalar_lea.vmem [#allocation13], 8
    %1022 = vst [vmem:[%s1021] sm:$0xff] %v1019
    %s1023 = scalar_lea.vmem %s16, 8
    %1024 = vst.msk [vmem:[%s1023] sm:$0xff] %vm163, %v1020
    %vm1025 = vcmp.ne.f32.partialorder %v152, %v152
    %vm1026 = vmor %vm592, %vm1025
    %vm1027 = vmxor %vm1026, 1
    %v1028 = vsub.f32 %v152, %v151
    %v1029 = vld [vmem:[%s3] sm:$0x3]
    %v1030 = vld [vmem:[%s4] sm:$0x1]
    %v1032 = vperm.slane %v1030, 0
    %v1035 = vsel %vm163, %v1028, 0
    %v1038 = vsel %vm167, %v1029, 0
    %1040 = vmatpush.msra.mxu0 0.0
    %1041 = vmatpush.msra.mxu0 0.0
    %1042 = vmatpush.msra.mxu0 0.0
    %1043 = vmatpush.msra.mxu0 0.0
    %1044 = vmatpush.msra.mxu0 0.0
    %1045 = vmatpush.msra.mxu0 0.0
    %1046 = vmatpush.msra.mxu0 0.0
    %1047 = vmatpush.msra.mxu0 0.0
    %1048 = vmatpush.msra.mxu0 0.0
    %1049 = vmatpush.msra.mxu0 0.0
    %1050 = vmatpush.msra.mxu0 0.0
    %1051 = vmatpush.msra.mxu0 0.0
    %1052 = vmatpush.msra.mxu0 0.0
    %1053 = vmatpush.msra.mxu0 0.0
    %1054 = vmatpush.msra.mxu0 0.0
    %1055 = vmatpush.msra.mxu0 %v1038
    %1056 = vmatmul.f32.gmra.mxu0 %v1035
    %v1057 = vpop.f32.mrf.mxu0
    %v1058 = vadd.f32 %v1032, %v1057
    %1059 = vdwg.mxu0
    %v1060 = vmax.f32 %v1058, 0.0
    %v1061 = vld [vmem:[#allocation2] sm:$0xff]
    %v1062 = vld [vmem:[#allocation2 + $0x8] sm:$0xff]
    %v1063 = vld [vmem:[#allocation2 + $0x10] sm:$0xff]
    %v1064 = vld [vmem:[#allocation2 + $0x18] sm:$0xff]
    %v1065 = vld [vmem:[#allocation2 + $0x20] sm:$0xff]
    %v1066 = vld [vmem:[#allocation2 + $0x28] sm:$0xff]
    %v1067 = vld [vmem:[#allocation2 + $0x30] sm:$0xff]
    %v1068 = vld [vmem:[#allocation2 + $0x38] sm:$0xff]
    %v1069 = vld [vmem:[#allocation2 + $0x40] sm:$0xff]
    %v1070 = vld [vmem:[#allocation2 + $0x48] sm:$0xff]
    %v1071 = vld [vmem:[#allocation2 + $0x50] sm:$0xff]
    %v1072 = vld [vmem:[#allocation2 + $0x58] sm:$0xff]
    %v1073 = vld [vmem:[#allocation2 + $0x60] sm:$0xff]
    %v1074 = vld [vmem:[#allocation2 + $0x68] sm:$0xff]
    %v1075 = vld [vmem:[#allocation2 + $0x70] sm:$0xff]
    %v1076 = vld [vmem:[#allocation2 + $0x78] sm:$0xff]
    %v1077 = vld [vmem:[#allocation5] sm:$0xff]
    %v1078 = vld [vmem:[#allocation5 + $0x8] sm:$0xff]
    %v1079 = vld [vmem:[#allocation5 + $0x10] sm:$0xff]
    %v1080 = vld [vmem:[#allocation5 + $0x18] sm:$0xff]
    %v1081 = vld [vmem:[#allocation5 + $0x20] sm:$0xff]
    %v1082 = vld [vmem:[#allocation5 + $0x28] sm:$0xff]
    %v1083 = vld [vmem:[#allocation5 + $0x30] sm:$0xff]
    %v1084 = vld [vmem:[#allocation5 + $0x38] sm:$0xff]
    %v1085 = vld [vmem:[#allocation5 + $0x40] sm:$0xff]
    %v1086 = vld [vmem:[#allocation5 + $0x48] sm:$0xff]
    %v1087 = vld [vmem:[#allocation5 + $0x50] sm:$0xff]
    %v1088 = vld [vmem:[#allocation5 + $0x58] sm:$0xff]
    %v1089 = vld [vmem:[#allocation5 + $0x60] sm:$0xff]
    %v1090 = vld [vmem:[#allocation5 + $0x68] sm:$0xff]
    %v1091 = vld [vmem:[#allocation5 + $0x70] sm:$0xff]
    %v1092 = vld [vmem:[#allocation5 + $0x78] sm:$0xff]
    %v1093 = vld [vmem:[#allocation5 + $0x80] sm:$0xff]
    %v1094 = vld [vmem:[#allocation5 + $0x88] sm:$0xff]
    %v1095 = vld [vmem:[#allocation5 + $0x90] sm:$0xff]
    %v1096 = vld [vmem:[#allocation5 + $0x98] sm:$0xff]
    %v1097 = vld [vmem:[#allocation5 + $0xa0] sm:$0xff]
    %v1098 = vld [vmem:[#allocation5 + $0xa8] sm:$0xff]
    %v1099 = vld [vmem:[#allocation5 + $0xb0] sm:$0xff]
    %v1100 = vld [vmem:[#allocation5 + $0xb8] sm:$0xff]
    %v1101 = vld [vmem:[#allocation5 + $0xc0] sm:$0xff]
    %v1102 = vld [vmem:[#allocation5 + $0xc8] sm:$0xff]
    %v1103 = vld [vmem:[#allocation5 + $0xd0] sm:$0xff]
    %v1104 = vld [vmem:[#allocation5 + $0xd8] sm:$0xff]
    %v1105 = vld [vmem:[#allocation5 + $0xe0] sm:$0xff]
    %v1106 = vld [vmem:[#allocation5 + $0xe8] sm:$0xff]
    %v1107 = vld [vmem:[#allocation5 + $0xf0] sm:$0xff]
    %v1108 = vld [vmem:[#allocation5 + $0xf8] sm:$0xff]
    %v1109 = vld [vmem:[#allocation5 + $0x100] sm:$0xff]
    %v1110 = vld [vmem:[#allocation5 + $0x108] sm:$0xff]
    %v1111 = vld [vmem:[#allocation5 + $0x110] sm:$0xff]
    %v1112 = vld [vmem:[#allocation5 + $0x118] sm:$0xff]
    %v1113 = vld [vmem:[#allocation5 + $0x120] sm:$0xff]
    %v1114 = vld [vmem:[#allocation5 + $0x128] sm:$0xff]
    %v1115 = vld [vmem:[#allocation5 + $0x130] sm:$0xff]
    %v1116 = vld [vmem:[#allocation5 + $0x138] sm:$0xff]
    %v1117 = vld [vmem:[#allocation5 + $0x140] sm:$0xff]
    %v1118 = vld [vmem:[#allocation5 + $0x148] sm:$0xff]
    %v1119 = vld [vmem:[#allocation5 + $0x150] sm:$0xff]
    %v1120 = vld [vmem:[#allocation5 + $0x158] sm:$0xff]
    %v1121 = vld [vmem:[#allocation5 + $0x160] sm:$0xff]
    %v1122 = vld [vmem:[#allocation5 + $0x168] sm:$0xff]
    %v1123 = vld [vmem:[#allocation5 + $0x170] sm:$0xff]
    %v1124 = vld [vmem:[#allocation5 + $0x178] sm:$0xff]
    %v1125 = vld [vmem:[#allocation5 + $0x180] sm:$0xff]
    %v1126 = vld [vmem:[#allocation5 + $0x188] sm:$0xff]
    %v1127 = vld [vmem:[#allocation5 + $0x190] sm:$0xff]
    %v1128 = vld [vmem:[#allocation5 + $0x198] sm:$0xff]
    %v1129 = vld [vmem:[#allocation5 + $0x1a0] sm:$0xff]
    %v1130 = vld [vmem:[#allocation5 + $0x1a8] sm:$0xff]
    %v1131 = vld [vmem:[#allocation5 + $0x1b0] sm:$0xff]
    %v1132 = vld [vmem:[#allocation5 + $0x1b8] sm:$0xff]
    %v1133 = vld [vmem:[#allocation5 + $0x1c0] sm:$0xff]
    %v1134 = vld [vmem:[#allocation5 + $0x1c8] sm:$0xff]
    %v1135 = vld [vmem:[#allocation5 + $0x1d0] sm:$0xff]
    %v1136 = vld [vmem:[#allocation5 + $0x1d8] sm:$0xff]
    %v1137 = vld [vmem:[#allocation5 + $0x1e0] sm:$0xff]
    %v1138 = vld [vmem:[#allocation5 + $0x1e8] sm:$0xff]
    %v1139 = vld [vmem:[#allocation5 + $0x1f0] sm:$0xff]
    %v1140 = vld [vmem:[#allocation5 + $0x1f8] sm:$0xff]
    %1141 = vmatpush.msra.mxu0 %v1137
    %1142 = vmatpush.msra.mxu0 %v1133
    %1143 = vmatpush.msra.mxu0 %v1129
    %1144 = vmatpush.msra.mxu0 %v1125
    %1145 = vmatpush.msra.mxu0 %v1121
    %1146 = vmatpush.msra.mxu0 %v1117
    %1147 = vmatpush.msra.mxu0 %v1113
    %1148 = vmatpush.msra.mxu0 %v1109
    %1149 = vmatpush.msra.mxu0 %v1105
    %1150 = vmatpush.msra.mxu0 %v1101
    %1151 = vmatpush.msra.mxu0 %v1097
    %1152 = vmatpush.msra.mxu0 %v1093
    %1153 = vmatpush.msra.mxu0 %v1089
    %1154 = vmatpush.msra.mxu0 %v1085
    %1155 = vmatpush.msra.mxu0 %v1081
    %1156 = vmatpush.msra.mxu0 %v1077
    %1157 = vmatmul.f32.gmra.mxu0 %v1017
    %v1158 = vpop.f32.mrf.mxu0
    %v1159 = vadd.f32 0.0, %v1158
    %1160 = vdwg.mxu0
    %1161 = vmatpush.msra.mxu0 %v1138
    %1162 = vmatpush.msra.mxu0 %v1134
    %1163 = vmatpush.msra.mxu0 %v1130
    %1164 = vmatpush.msra.mxu0 %v1126
    %1165 = vmatpush.msra.mxu0 %v1122
    %1166 = vmatpush.msra.mxu0 %v1118
    %1167 = vmatpush.msra.mxu0 %v1114
    %1168 = vmatpush.msra.mxu0 %v1110
    %1169 = vmatpush.msra.mxu0 %v1106
    %1170 = vmatpush.msra.mxu0 %v1102
    %1171 = vmatpush.msra.mxu0 %v1098
    %1172 = vmatpush.msra.mxu0 %v1094
    %1173 = vmatpush.msra.mxu0 %v1090
    %1174 = vmatpush.msra.mxu0 %v1086
    %1175 = vmatpush.msra.mxu0 %v1082
    %1176 = vmatpush.msra.mxu0 %v1078
    %1177 = vmatmul.f32.gmra.mxu0 %v1017
    %v1178 = vpop.f32.mrf.mxu0
    %v1179 = vadd.f32 0.0, %v1178
    %1180 = vdwg.mxu0
    %1181 = vmatpush.msra.mxu0 %v1139
    %1182 = vmatpush.msra.mxu0 %v1135
    %1183 = vmatpush.msra.mxu0 %v1131
    %1184 = vmatpush.msra.mxu0 %v1127
    %1185 = vmatpush.msra.mxu0 %v1123
    %1186 = vmatpush.msra.mxu0 %v1119
    %1187 = vmatpush.msra.mxu0 %v1115
    %1188 = vmatpush.msra.mxu0 %v1111
    %1189 = vmatpush.msra.mxu0 %v1107
    %1190 = vmatpush.msra.mxu0 %v1103
    %1191 = vmatpush.msra.mxu0 %v1099
    %1192 = vmatpush.msra.mxu0 %v1095
    %1193 = vmatpush.msra.mxu0 %v1091
    %1194 = vmatpush.msra.mxu0 %v1087
    %1195 = vmatpush.msra.mxu0 %v1083
    %1196 = vmatpush.msra.mxu0 %v1079
    %1197 = vmatmul.f32.gmra.mxu0 %v1017
    %v1198 = vpop.f32.mrf.mxu0
    %v1199 = vadd.f32 0.0, %v1198
    %1200 = vdwg.mxu0
    %1201 = vmatpush.msra.mxu0 %v1140
    %1202 = vmatpush.msra.mxu0 %v1136
    %1203 = vmatpush.msra.mxu0 %v1132
    %1204 = vmatpush.msra.mxu0 %v1128
    %1205 = vmatpush.msra.mxu0 %v1124
    %1206 = vmatpush.msra.mxu0 %v1120
    %1207 = vmatpush.msra.mxu0 %v1116
    %1208 = vmatpush.msra.mxu0 %v1112
    %1209 = vmatpush.msra.mxu0 %v1108
    %1210 = vmatpush.msra.mxu0 %v1104
    %1211 = vmatpush.msra.mxu0 %v1100
    %1212 = vmatpush.msra.mxu0 %v1096
    %1213 = vmatpush.msra.mxu0 %v1092
    %1214 = vmatpush.msra.mxu0 %v1088
    %1215 = vmatpush.msra.mxu0 %v1084
    %1216 = vmatpush.msra.mxu0 %v1080
    %1217 = vmatmul.f32.gmra.mxu0 %v1017
    %v1218 = vpop.f32.mrf.mxu0
    %v1219 = vadd.f32 0.0, %v1218
    %1220 = vdwg.mxu0
    %v1222 = vsel %vm352, %v1060, 0
    %1224 = vmatpush.msra.mxu0 0.0
    %1225 = vmatpush.msra.mxu0 0.0
    %1226 = vmatpush.msra.mxu0 0.0
    %1227 = vmatpush.msra.mxu0 0.0
    %1228 = vmatpush.msra.mxu0 0.0
    %1229 = vmatpush.msra.mxu0 0.0
    %1230 = vmatpush.msra.mxu0 0.0
    %1231 = vmatpush.msra.mxu0 0.0
    %1232 = vmatpush.msra.mxu0 0.0
    %1233 = vmatpush.msra.mxu0 0.0
    %1234 = vmatpush.msra.mxu0 0.0
    %1235 = vmatpush.msra.mxu0 0.0
    %1236 = vmatpush.msra.mxu0 %v1073
    %1237 = vmatpush.msra.mxu0 %v1069
    %1238 = vmatpush.msra.mxu0 %v1065
    %1239 = vmatpush.msra.mxu0 %v1061
    %1240 = vmatmul.f32.gmra.mxu0 %v1222
    %v1241 = vpop.f32.mrf.mxu0
    %v1242 = vadd.f32 %v1159, %v1241
    %1243 = vdwg.mxu0
    %1244 = vmatpush.msra.mxu0 0.0
    %1245 = vmatpush.msra.mxu0 0.0
    %1246 = vmatpush.msra.mxu0 0.0
    %1247 = vmatpush.msra.mxu0 0.0
    %1248 = vmatpush.msra.mxu0 0.0
    %1249 = vmatpush.msra.mxu0 0.0
    %1250 = vmatpush.msra.mxu0 0.0
    %1251 = vmatpush.msra.mxu0 0.0
    %1252 = vmatpush.msra.mxu0 0.0
    %1253 = vmatpush.msra.mxu0 0.0
    %1254 = vmatpush.msra.mxu0 0.0
    %1255 = vmatpush.msra.mxu0 0.0
    %1256 = vmatpush.msra.mxu0 %v1074
    %1257 = vmatpush.msra.mxu0 %v1070
    %1258 = vmatpush.msra.mxu0 %v1066
    %1259 = vmatpush.msra.mxu0 %v1062
    %1260 = vmatmul.f32.gmra.mxu0 %v1222
    %v1261 = vpop.f32.mrf.mxu0
    %v1262 = vadd.f32 %v1179, %v1261
    %1263 = vdwg.mxu0
    %1264 = vmatpush.msra.mxu0 0.0
    %1265 = vmatpush.msra.mxu0 0.0
    %1266 = vmatpush.msra.mxu0 0.0
    %1267 = vmatpush.msra.mxu0 0.0
    %1268 = vmatpush.msra.mxu0 0.0
    %1269 = vmatpush.msra.mxu0 0.0
    %1270 = vmatpush.msra.mxu0 0.0
    %1271 = vmatpush.msra.mxu0 0.0
    %1272 = vmatpush.msra.mxu0 0.0
    %1273 = vmatpush.msra.mxu0 0.0
    %1274 = vmatpush.msra.mxu0 0.0
    %1275 = vmatpush.msra.mxu0 0.0
    %1276 = vmatpush.msra.mxu0 %v1075
    %1277 = vmatpush.msra.mxu0 %v1071
    %1278 = vmatpush.msra.mxu0 %v1067
    %1279 = vmatpush.msra.mxu0 %v1063
    %1280 = vmatmul.f32.gmra.mxu0 %v1222
    %v1281 = vpop.f32.mrf.mxu0
    %v1282 = vadd.f32 %v1199, %v1281
    %1283 = vdwg.mxu0
    %1284 = vmatpush.msra.mxu0 0.0
    %1285 = vmatpush.msra.mxu0 0.0
    %1286 = vmatpush.msra.mxu0 0.0
    %1287 = vmatpush.msra.mxu0 0.0
    %1288 = vmatpush.msra.mxu0 0.0
    %1289 = vmatpush.msra.mxu0 0.0
    %1290 = vmatpush.msra.mxu0 0.0
    %1291 = vmatpush.msra.mxu0 0.0
    %1292 = vmatpush.msra.mxu0 0.0
    %1293 = vmatpush.msra.mxu0 0.0
    %1294 = vmatpush.msra.mxu0 0.0
    %1295 = vmatpush.msra.mxu0 0.0
    %1296 = vmatpush.msra.mxu0 %v1076
    %1297 = vmatpush.msra.mxu0 %v1072
    %1298 = vmatpush.msra.mxu0 %v1068
    %1299 = vmatpush.msra.mxu0 %v1064
    %1300 = vmatmul.f32.gmra.mxu0 %v1222
    %v1301 = vpop.f32.mrf.mxu0
    %v1302 = vadd.f32 %v1219, %v1301
    %1303 = vdwg.mxu0
    %v1304 = vld [vmem:[%s7] sm:$0xf]
    %v1306 = vperm.slane %v1304, 0
    %v1307 = vperm.slane %v1304, 1
    %v1308 = vperm.slane %v1304, 2
    %v1309 = vperm.slane %v1304, 3
    %v1314 = vadd.f32 %v1242, %v1306
    %v1315 = vadd.f32 %v1262, %v1307
    %v1316 = vadd.f32 %v1282, %v1308
    %v1317 = vadd.f32 %v1302, %v1309
    %v1318 = vxor.u32 %v1314, 2147483648
    %v1319 = vmul.f32 %v1318, 1.442695
    %v1320 = vpow.pop %v1319
    %v1321 = vadd.f32 %v1320, 1.0
    %v1322 = vrcp.pop %v1321
    %v1323 = vmul.f32 %v1321, %v1322
    %v1324 = vsub.f32 1.0, %v1323
    %v1325 = vmul.f32 %v1322, %v1324
    %v1326 = vadd.f32 %v1322, %v1325
    %vm1327 = vweird.f32 %v1321
    %vm1328 = vweird.f32 %v1322
    %vm1329 = vmor %vm1327, %vm1328
    %v1330 = vsel %vm1329, %v1322, %v1326
    %v1331 = vand.u32 2147483647, %v1321
    %vm1332 = vcmp.eq.f32.partialorder %v1331, 8.507059e+37
    %v1333 = vand.u32 %v1321, 2147483648
    %v1334 = vor.u32 1.1754944e-38, %v1333
    %v1335 = vsel %vm1332, %v1334, %v1330
    %v1336 = vmul.f32 1.0, %v1335
    %v1337 = vxor.u32 %v1315, 2147483648
    %v1338 = vmul.f32 %v1337, 1.442695
    %v1339 = vpow.pop %v1338
    %v1340 = vadd.f32 %v1339, 1.0
    %v1341 = vrcp.pop %v1340
    %v1342 = vmul.f32 %v1340, %v1341
    %v1343 = vsub.f32 1.0, %v1342
    %v1344 = vmul.f32 %v1341, %v1343
    %v1345 = vadd.f32 %v1341, %v1344
    %vm1346 = vweird.f32 %v1340
    %vm1347 = vweird.f32 %v1341
    %vm1348 = vmor %vm1346, %vm1347
    %v1349 = vsel %vm1348, %v1341, %v1345
    %v1350 = vand.u32 2147483647, %v1340
    %vm1351 = vcmp.eq.f32.partialorder %v1350, 8.507059e+37
    %v1352 = vand.u32 %v1340, 2147483648
    %v1353 = vor.u32 1.1754944e-38, %v1352
    %v1354 = vsel %vm1351, %v1353, %v1349
    %v1355 = vmul.f32 1.0, %v1354
    %v1356 = vtanh.pop %v1316
    %v1357 = vxor.u32 %v1317, 2147483648
    %v1358 = vmul.f32 %v1357, 1.442695
    %v1359 = vpow.pop %v1358
    %v1360 = vadd.f32 %v1359, 1.0
    %v1361 = vrcp.pop %v1360
    %v1362 = vmul.f32 %v1360, %v1361
    %v1363 = vsub.f32 1.0, %v1362
    %v1364 = vmul.f32 %v1361, %v1363
    %v1365 = vadd.f32 %v1361, %v1364
    %vm1366 = vweird.f32 %v1360
    %vm1367 = vweird.f32 %v1361
    %vm1368 = vmor %vm1366, %vm1367
    %v1369 = vsel %vm1368, %v1361, %v1365
    %v1370 = vand.u32 2147483647, %v1360
    %vm1371 = vcmp.eq.f32.partialorder %v1370, 8.507059e+37
    %v1372 = vand.u32 %v1360, 2147483648
    %v1373 = vor.u32 1.1754944e-38, %v1372
    %v1374 = vsel %vm1371, %v1373, %v1369
    %v1375 = vmul.f32 1.0, %v1374
    %v1376 = vmul.f32 %v1355, %v1018
    %v1377 = vmul.f32 %v1336, %v1356
    %v1378 = vadd.f32 %v1376, %v1377
    %v1379 = vtanh.pop %v1378
    %v1380 = vmul.f32 %v1375, %v1379
    %v1381 = vld [vmem:[#allocation11] sm:$0xff]
    %v1382 = vld [vmem:[#allocation11 + $0x8] sm:$0xff]
    %v1383 = vld [vmem:[#allocation11 + $0x10] sm:$0xff]
    %v1384 = vld [vmem:[#allocation11 + $0x18] sm:$0xff]
    %v1385 = vld [vmem:[#allocation11 + $0x20] sm:$0xff]
    %v1386 = vld [vmem:[#allocation11 + $0x28] sm:$0xff]
    %v1387 = vld [vmem:[#allocation11 + $0x30] sm:$0xff]
    %v1388 = vld [vmem:[#allocation11 + $0x38] sm:$0xff]
    %v1389 = vld [vmem:[#allocation11 + $0x40] sm:$0xff]
    %v1390 = vld [vmem:[#allocation11 + $0x48] sm:$0xff]
    %v1391 = vld [vmem:[#allocation11 + $0x50] sm:$0xff]
    %v1392 = vld [vmem:[#allocation11 + $0x58] sm:$0xff]
    %v1393 = vld [vmem:[#allocation11 + $0x60] sm:$0xff]
    %v1394 = vld [vmem:[#allocation11 + $0x68] sm:$0xff]
    %v1395 = vld [vmem:[#allocation11 + $0x70] sm:$0xff]
    %v1396 = vld [vmem:[#allocation11 + $0x78] sm:$0xff]
    %v1397 = vld [vmem:[%s14] sm:$0x1]
    %v1399 = vperm.slane %v1397, 0
    %1401 = vmatpush.msra.mxu0 %v1396
    %1402 = vmatpush.msra.mxu0 %v1395
    %1403 = vmatpush.msra.mxu0 %v1394
    %1404 = vmatpush.msra.mxu0 %v1393
    %1405 = vmatpush.msra.mxu0 %v1392
    %1406 = vmatpush.msra.mxu0 %v1391
    %1407 = vmatpush.msra.mxu0 %v1390
    %1408 = vmatpush.msra.mxu0 %v1389
    %1409 = vmatpush.msra.mxu0 %v1388
    %1410 = vmatpush.msra.mxu0 %v1387
    %1411 = vmatpush.msra.mxu0 %v1386
    %1412 = vmatpush.msra.mxu0 %v1385
    %1413 = vmatpush.msra.mxu0 %v1384
    %1414 = vmatpush.msra.mxu0 %v1383
    %1415 = vmatpush.msra.mxu0 %v1382
    %1416 = vmatpush.msra.mxu0 %v1381
    %1417 = vmatmul.f32.gmra.mxu0 %v1380
    %v1418 = vpop.f32.mrf.mxu0
    %v1419 = vadd.f32 %v1399, %v1418
    %1420 = vdwg.mxu0
    %v1421 = vxor.u32 %v1419, 2147483648
    %v1422 = vmul.f32 %v1421, 1.442695
    %v1423 = vpow.pop %v1422
    %v1424 = vadd.f32 %v1423, 1.0
    %v1425 = vrcp.pop %v1424
    %v1426 = vmul.f32 %v1424, %v1425
    %v1427 = vsub.f32 1.0, %v1426
    %v1428 = vmul.f32 %v1425, %v1427
    %v1429 = vadd.f32 %v1425, %v1428
    %vm1430 = vweird.f32 %v1424
    %vm1431 = vweird.f32 %v1425
    %vm1432 = vmor %vm1430, %vm1431
    %v1433 = vsel %vm1432, %v1425, %v1429
    %v1434 = vand.u32 2147483647, %v1424
    %vm1435 = vcmp.eq.f32.partialorder %v1434, 8.507059e+37
    %v1436 = vand.u32 %v1424, 2147483648
    %v1437 = vor.u32 1.1754944e-38, %v1436
    %v1438 = vsel %vm1435, %v1437, %v1433
    %v1439 = vmul.f32 1.0, %v1438
    %v1440 = vmul.f32 %v1439, 0.2
    %v1441 = vadd.f32 %v1440, 0.01
    %v1442 = vmul.f32 %v1439, 0.7
    %v1443 = vsel %vm575, %v1441, %v1442
    %v1444 = vsel %vm574, %v1419, %v1443
    %v1445 = vsel %vm1027, 1, 0
    %1446 = vset.pattern.permute.xlu0 0
    %1447 = vperm.xlu0 %1446, %v1445
    %v1448 = vpop.permute.xlu0 %1447
    %vm1449 = vcmp.eq.s32.totalorder %v1448, 1
    %v1450 = vsel %vm1449, %v1380, %v1017
    %v1451 = vsel %vm1449, %v1378, %v1018
    %v1452 = vsel %vm1449, %v1444, nan
    %v1453 = vadd.f32 %v152, %v1452
    %s1454 = scalar_lea.vmem [#allocation13], 16
    %1455 = vst [vmem:[%s1454] sm:$0xff] %v1452
    %s1456 = scalar_lea.vmem %s16, 16
    %1457 = vst.msk [vmem:[%s1456] sm:$0xff] %vm163, %v1453
    %v1458 = vld [vmem:[#allocation10] sm:$0xff]
    %v1459 = vld [vmem:[#allocation10 + $0x8] sm:$0xff]
    %v1460 = vld [vmem:[#allocation10 + $0x10] sm:$0xff]
    %v1461 = vld [vmem:[#allocation10 + $0x18] sm:$0xff]
    %v1462 = vld [vmem:[#allocation10 + $0x20] sm:$0xff]
    %v1463 = vld [vmem:[#allocation10 + $0x28] sm:$0xff]
    %v1464 = vld [vmem:[#allocation10 + $0x30] sm:$0xff]
    %v1465 = vld [vmem:[#allocation10 + $0x38] sm:$0xff]
    %v1466 = vld [vmem:[#allocation10 + $0x40] sm:$0xff]
    %v1467 = vld [vmem:[#allocation10 + $0x48] sm:$0xff]
    %v1468 = vld [vmem:[#allocation10 + $0x50] sm:$0xff]
    %v1469 = vld [vmem:[#allocation10 + $0x58] sm:$0xff]
    %v1470 = vld [vmem:[#allocation10 + $0x60] sm:$0xff]
    %v1471 = vld [vmem:[#allocation10 + $0x68] sm:$0xff]
    %v1472 = vld [vmem:[#allocation10 + $0x70] sm:$0xff]
    %v1473 = vld [vmem:[#allocation10 + $0x78] sm:$0xff]
    %v1474 = vld [vmem:[%s12] sm:$0x1]
    %v1476 = vperm.slane %v1474, 0
    %1478 = vmatpush.msra.mxu0 %v1473
    %1479 = vmatpush.msra.mxu0 %v1472
    %1480 = vmatpush.msra.mxu0 %v1471
    %1481 = vmatpush.msra.mxu0 %v1470
    %1482 = vmatpush.msra.mxu0 %v1469
    %1483 = vmatpush.msra.mxu0 %v1468
    %1484 = vmatpush.msra.mxu0 %v1467
    %1485 = vmatpush.msra.mxu0 %v1466
    %1486 = vmatpush.msra.mxu0 %v1465
    %1487 = vmatpush.msra.mxu0 %v1464
    %1488 = vmatpush.msra.mxu0 %v1463
    %1489 = vmatpush.msra.mxu0 %v1462
    %1490 = vmatpush.msra.mxu0 %v1461
    %1491 = vmatpush.msra.mxu0 %v1460
    %1492 = vmatpush.msra.mxu0 %v1459
    %1493 = vmatpush.msra.mxu0 %v1458
    %1494 = vmatmul.f32.gmra.mxu0 %v1450
    %v1495 = vpop.f32.mrf.mxu0
    %v1496 = vadd.f32 %v1476, %v1495
    %1497 = vdwg.mxu0
    %v1498 = vmax.f32 %v1496, 0.0
    %v1499 = vld [vmem:[%s2] sm:$0x1]
    %v1501 = vperm.slane %v1499, 0
    %v1503 = vadd.f32 %v1498, %v1501
    %1504 = vst [vmem:[#allocation14] sm:$0xff] %v1503
    %v1505 = vld [vmem:[%s1] sm:$0xff]
    %vm1506 = vcmp.gt.f32.partialorder %v1505, 0.0
    %v1507 = vsel %vm1506, 1, 0
    %1508 = vset.pattern.permute.xlu0 0
    %1509 = vperm.xlu0 %1508, %v1507
    %v1510 = vpop.permute.xlu0 %1509
    %vm1511 = vcmp.eq.s32.totalorder %v1510, 1
    %v1512 = vsel %vm1511, %v1020, %v152
    %vm1513 = vcmp.ne.f32.partialorder %v1512, %v1512
    %vm1514 = vcmp.ne.f32.partialorder %v1453, %v1453
    %vm1515 = vmor %vm1513, %vm1514
    %vm1516 = vmxor %vm1515, 1
    %v1517 = vsub.f32 %v1453, %v1512
    %v1518 = vld [vmem:[%s3] sm:$0x3]
    %v1519 = vld [vmem:[%s4] sm:$0x1]
    %v1521 = vperm.slane %v1519, 0
    %v1524 = vsel %vm163, %v1517, 0
    %v1527 = vsel %vm167, %v1518, 0
    %1529 = vmatpush.msra.mxu0 0.0
    %1530 = vmatpush.msra.mxu0 0.0
    %1531 = vmatpush.msra.mxu0 0.0
    %1532 = vmatpush.msra.mxu0 0.0
    %1533 = vmatpush.msra.mxu0 0.0
    %1534 = vmatpush.msra.mxu0 0.0
    %1535 = vmatpush.msra.mxu0 0.0
    %1536 = vmatpush.msra.mxu0 0.0
    %1537 = vmatpush.msra.mxu0 0.0
    %1538 = vmatpush.msra.mxu0 0.0
    %1539 = vmatpush.msra.mxu0 0.0
    %1540 = vmatpush.msra.mxu0 0.0
    %1541 = vmatpush.msra.mxu0 0.0
    %1542 = vmatpush.msra.mxu0 0.0
    %1543 = vmatpush.msra.mxu0 0.0
    %1544 = vmatpush.msra.mxu0 %v1527
    %1545 = vmatmul.f32.gmra.mxu0 %v1524
    %v1546 = vpop.f32.mrf.mxu0
    %v1547 = vadd.f32 %v1521, %v1546
    %1548 = vdwg.mxu0
    %v1549 = vmax.f32 %v1547, 0.0
    %v1550 = vld [vmem:[#allocation7] sm:$0xff]
    %v1551 = vld [vmem:[#allocation7 + $0x8] sm:$0xff]
    %v1552 = vld [vmem:[#allocation7 + $0x10] sm:$0xff]
    %v1553 = vld [vmem:[#allocation7 + $0x18] sm:$0xff]
    %v1554 = vld [vmem:[#allocation7 + $0x20] sm:$0xff]
    %v1555 = vld [vmem:[#allocation7 + $0x28] sm:$0xff]
    %v1556 = vld [vmem:[#allocation7 + $0x30] sm:$0xff]
    %v1557 = vld [vmem:[#allocation7 + $0x38] sm:$0xff]
    %v1558 = vld [vmem:[#allocation7 + $0x40] sm:$0xff]
    %v1559 = vld [vmem:[#allocation7 + $0x48] sm:$0xff]
    %v1560 = vld [vmem:[#allocation7 + $0x50] sm:$0xff]
    %v1561 = vld [vmem:[#allocation7 + $0x58] sm:$0xff]
    %v1562 = vld [vmem:[#allocation7 + $0x60] sm:$0xff]
    %v1563 = vld [vmem:[#allocation7 + $0x68] sm:$0xff]
    %v1564 = vld [vmem:[#allocation7 + $0x70] sm:$0xff]
    %v1565 = vld [vmem:[#allocation7 + $0x78] sm:$0xff]
    %v1566 = vld [vmem:[#allocation8] sm:$0xff]
    %v1567 = vld [vmem:[#allocation8 + $0x8] sm:$0xff]
    %v1568 = vld [vmem:[#allocation8 + $0x10] sm:$0xff]
    %v1569 = vld [vmem:[#allocation8 + $0x18] sm:$0xff]
    %v1570 = vld [vmem:[#allocation8 + $0x20] sm:$0xff]
    %v1571 = vld [vmem:[#allocation8 + $0x28] sm:$0xff]
    %v1572 = vld [vmem:[#allocation8 + $0x30] sm:$0xff]
    %v1573 = vld [vmem:[#allocation8 + $0x38] sm:$0xff]
    %v1574 = vld [vmem:[#allocation8 + $0x40] sm:$0xff]
    %v1575 = vld [vmem:[#allocation8 + $0x48] sm:$0xff]
    %v1576 = vld [vmem:[#allocation8 + $0x50] sm:$0xff]
    %v1577 = vld [vmem:[#allocation8 + $0x58] sm:$0xff]
    %v1578 = vld [vmem:[#allocation8 + $0x60] sm:$0xff]
    %v1579 = vld [vmem:[#allocation8 + $0x68] sm:$0xff]
    %v1580 = vld [vmem:[#allocation8 + $0x70] sm:$0xff]
    %v1581 = vld [vmem:[#allocation8 + $0x78] sm:$0xff]
    %v1582 = vld [vmem:[#allocation8 + $0x80] sm:$0xff]
    %v1583 = vld [vmem:[#allocation8 + $0x88] sm:$0xff]
    %v1584 = vld [vmem:[#allocation8 + $0x90] sm:$0xff]
    %v1585 = vld [vmem:[#allocation8 + $0x98] sm:$0xff]
    %v1586 = vld [vmem:[#allocation8 + $0xa0] sm:$0xff]
    %v1587 = vld [vmem:[#allocation8 + $0xa8] sm:$0xff]
    %v1588 = vld [vmem:[#allocation8 + $0xb0] sm:$0xff]
    %v1589 = vld [vmem:[#allocation8 + $0xb8] sm:$0xff]
    %v1590 = vld [vmem:[#allocation8 + $0xc0] sm:$0xff]
    %v1591 = vld [vmem:[#allocation8 + $0xc8] sm:$0xff]
    %v1592 = vld [vmem:[#allocation8 + $0xd0] sm:$0xff]
    %v1593 = vld [vmem:[#allocation8 + $0xd8] sm:$0xff]
    %v1594 = vld [vmem:[#allocation8 + $0xe0] sm:$0xff]
    %v1595 = vld [vmem:[#allocation8 + $0xe8] sm:$0xff]
    %v1596 = vld [vmem:[#allocation8 + $0xf0] sm:$0xff]
    %v1597 = vld [vmem:[#allocation8 + $0xf8] sm:$0xff]
    %v1598 = vld [vmem:[#allocation8 + $0x100] sm:$0xff]
    %v1599 = vld [vmem:[#allocation8 + $0x108] sm:$0xff]
    %v1600 = vld [vmem:[#allocation8 + $0x110] sm:$0xff]
    %v1601 = vld [vmem:[#allocation8 + $0x118] sm:$0xff]
    %v1602 = vld [vmem:[#allocation8 + $0x120] sm:$0xff]
    %v1603 = vld [vmem:[#allocation8 + $0x128] sm:$0xff]
    %v1604 = vld [vmem:[#allocation8 + $0x130] sm:$0xff]
    %v1605 = vld [vmem:[#allocation8 + $0x138] sm:$0xff]
    %v1606 = vld [vmem:[#allocation8 + $0x140] sm:$0xff]
    %v1607 = vld [vmem:[#allocation8 + $0x148] sm:$0xff]
    %v1608 = vld [vmem:[#allocation8 + $0x150] sm:$0xff]
    %v1609 = vld [vmem:[#allocation8 + $0x158] sm:$0xff]
    %v1610 = vld [vmem:[#allocation8 + $0x160] sm:$0xff]
    %v1611 = vld [vmem:[#allocation8 + $0x168] sm:$0xff]
    %v1612 = vld [vmem:[#allocation8 + $0x170] sm:$0xff]
    %v1613 = vld [vmem:[#allocation8 + $0x178] sm:$0xff]
    %v1614 = vld [vmem:[#allocation8 + $0x180] sm:$0xff]
    %v1615 = vld [vmem:[#allocation8 + $0x188] sm:$0xff]
    %v1616 = vld [vmem:[#allocation8 + $0x190] sm:$0xff]
    %v1617 = vld [vmem:[#allocation8 + $0x198] sm:$0xff]
    %v1618 = vld [vmem:[#allocation8 + $0x1a0] sm:$0xff]
    %v1619 = vld [vmem:[#allocation8 + $0x1a8] sm:$0xff]
    %v1620 = vld [vmem:[#allocation8 + $0x1b0] sm:$0xff]
    %v1621 = vld [vmem:[#allocation8 + $0x1b8] sm:$0xff]
    %v1622 = vld [vmem:[#allocation8 + $0x1c0] sm:$0xff]
    %v1623 = vld [vmem:[#allocation8 + $0x1c8] sm:$0xff]
    %v1624 = vld [vmem:[#allocation8 + $0x1d0] sm:$0xff]
    %v1625 = vld [vmem:[#allocation8 + $0x1d8] sm:$0xff]
    %v1626 = vld [vmem:[#allocation8 + $0x1e0] sm:$0xff]
    %v1627 = vld [vmem:[#allocation8 + $0x1e8] sm:$0xff]
    %v1628 = vld [vmem:[#allocation8 + $0x1f0] sm:$0xff]
    %v1629 = vld [vmem:[#allocation8 + $0x1f8] sm:$0xff]
    %1630 = vmatpush.msra.mxu0 %v1626
    %1631 = vmatpush.msra.mxu0 %v1622
    %1632 = vmatpush.msra.mxu0 %v1618
    %1633 = vmatpush.msra.mxu0 %v1614
    %1634 = vmatpush.msra.mxu0 %v1610
    %1635 = vmatpush.msra.mxu0 %v1606
    %1636 = vmatpush.msra.mxu0 %v1602
    %1637 = vmatpush.msra.mxu0 %v1598
    %1638 = vmatpush.msra.mxu0 %v1594
    %1639 = vmatpush.msra.mxu0 %v1590
    %1640 = vmatpush.msra.mxu0 %v1586
    %1641 = vmatpush.msra.mxu0 %v1582
    %1642 = vmatpush.msra.mxu0 %v1578
    %1643 = vmatpush.msra.mxu0 %v1574
    %1644 = vmatpush.msra.mxu0 %v1570
    %1645 = vmatpush.msra.mxu0 %v1566
    %1646 = vmatmul.f32.gmra.mxu0 %v1503
    %v1647 = vpop.f32.mrf.mxu0
    %v1648 = vadd.f32 0.0, %v1647
    %1649 = vdwg.mxu0
    %1650 = vmatpush.msra.mxu0 %v1627
    %1651 = vmatpush.msra.mxu0 %v1623
    %1652 = vmatpush.msra.mxu0 %v1619
    %1653 = vmatpush.msra.mxu0 %v1615
    %1654 = vmatpush.msra.mxu0 %v1611
    %1655 = vmatpush.msra.mxu0 %v1607
    %1656 = vmatpush.msra.mxu0 %v1603
    %1657 = vmatpush.msra.mxu0 %v1599
    %1658 = vmatpush.msra.mxu0 %v1595
    %1659 = vmatpush.msra.mxu0 %v1591
    %1660 = vmatpush.msra.mxu0 %v1587
    %1661 = vmatpush.msra.mxu0 %v1583
    %1662 = vmatpush.msra.mxu0 %v1579
    %1663 = vmatpush.msra.mxu0 %v1575
    %1664 = vmatpush.msra.mxu0 %v1571
    %1665 = vmatpush.msra.mxu0 %v1567
    %1666 = vmatmul.f32.gmra.mxu0 %v1503
    %v1667 = vpop.f32.mrf.mxu0
    %v1668 = vadd.f32 0.0, %v1667
    %1669 = vdwg.mxu0
    %1670 = vmatpush.msra.mxu0 %v1628
    %1671 = vmatpush.msra.mxu0 %v1624
    %1672 = vmatpush.msra.mxu0 %v1620
    %1673 = vmatpush.msra.mxu0 %v1616
    %1674 = vmatpush.msra.mxu0 %v1612
    %1675 = vmatpush.msra.mxu0 %v1608
    %1676 = vmatpush.msra.mxu0 %v1604
    %1677 = vmatpush.msra.mxu0 %v1600
    %1678 = vmatpush.msra.mxu0 %v1596
    %1679 = vmatpush.msra.mxu0 %v1592
    %1680 = vmatpush.msra.mxu0 %v1588
    %1681 = vmatpush.msra.mxu0 %v1584
    %1682 = vmatpush.msra.mxu0 %v1580
    %1683 = vmatpush.msra.mxu0 %v1576
    %1684 = vmatpush.msra.mxu0 %v1572
    %1685 = vmatpush.msra.mxu0 %v1568
    %1686 = vmatmul.f32.gmra.mxu0 %v1503
    %v1687 = vpop.f32.mrf.mxu0
    %v1688 = vadd.f32 0.0, %v1687
    %1689 = vdwg.mxu0
    %1690 = vmatpush.msra.mxu0 %v1629
    %1691 = vmatpush.msra.mxu0 %v1625
    %1692 = vmatpush.msra.mxu0 %v1621
    %1693 = vmatpush.msra.mxu0 %v1617
    %1694 = vmatpush.msra.mxu0 %v1613
    %1695 = vmatpush.msra.mxu0 %v1609
    %1696 = vmatpush.msra.mxu0 %v1605
    %1697 = vmatpush.msra.mxu0 %v1601
    %1698 = vmatpush.msra.mxu0 %v1597
    %1699 = vmatpush.msra.mxu0 %v1593
    %1700 = vmatpush.msra.mxu0 %v1589
    %1701 = vmatpush.msra.mxu0 %v1585
    %1702 = vmatpush.msra.mxu0 %v1581
    %1703 = vmatpush.msra.mxu0 %v1577
    %1704 = vmatpush.msra.mxu0 %v1573
    %1705 = vmatpush.msra.mxu0 %v1569
    %1706 = vmatmul.f32.gmra.mxu0 %v1503
    %v1707 = vpop.f32.mrf.mxu0
    %v1708 = vadd.f32 0.0, %v1707
    %1709 = vdwg.mxu0
    %v1711 = vsel %vm352, %v1549, 0
    %1713 = vmatpush.msra.mxu0 0.0
    %1714 = vmatpush.msra.mxu0 0.0
    %1715 = vmatpush.msra.mxu0 0.0
    %1716 = vmatpush.msra.mxu0 0.0
    %1717 = vmatpush.msra.mxu0 0.0
    %1718 = vmatpush.msra.mxu0 0.0
    %1719 = vmatpush.msra.mxu0 0.0
    %1720 = vmatpush.msra.mxu0 0.0
    %1721 = vmatpush.msra.mxu0 0.0
    %1722 = vmatpush.msra.mxu0 0.0
    %1723 = vmatpush.msra.mxu0 0.0
    %1724 = vmatpush.msra.mxu0 0.0
    %1725 = vmatpush.msra.mxu0 %v1562
    %1726 = vmatpush.msra.mxu0 %v1558
    %1727 = vmatpush.msra.mxu0 %v1554
    %1728 = vmatpush.msra.mxu0 %v1550
    %1729 = vmatmul.f32.gmra.mxu0 %v1711
    %v1730 = vpop.f32.mrf.mxu0
    %v1731 = vadd.f32 %v1648, %v1730
    %1732 = vdwg.mxu0
    %1733 = vmatpush.msra.mxu0 0.0
    %1734 = vmatpush.msra.mxu0 0.0
    %1735 = vmatpush.msra.mxu0 0.0
    %1736 = vmatpush.msra.mxu0 0.0
    %1737 = vmatpush.msra.mxu0 0.0
    %1738 = vmatpush.msra.mxu0 0.0
    %1739 = vmatpush.msra.mxu0 0.0
    %1740 = vmatpush.msra.mxu0 0.0
    %1741 = vmatpush.msra.mxu0 0.0
    %1742 = vmatpush.msra.mxu0 0.0
    %1743 = vmatpush.msra.mxu0 0.0
    %1744 = vmatpush.msra.mxu0 0.0
    %1745 = vmatpush.msra.mxu0 %v1563
    %1746 = vmatpush.msra.mxu0 %v1559
    %1747 = vmatpush.msra.mxu0 %v1555
    %1748 = vmatpush.msra.mxu0 %v1551
    %1749 = vmatmul.f32.gmra.mxu0 %v1711
    %v1750 = vpop.f32.mrf.mxu0
    %v1751 = vadd.f32 %v1668, %v1750
    %1752 = vdwg.mxu0
    %1753 = vmatpush.msra.mxu0 0.0
    %1754 = vmatpush.msra.mxu0 0.0
    %1755 = vmatpush.msra.mxu0 0.0
    %1756 = vmatpush.msra.mxu0 0.0
    %1757 = vmatpush.msra.mxu0 0.0
    %1758 = vmatpush.msra.mxu0 0.0
    %1759 = vmatpush.msra.mxu0 0.0
    %1760 = vmatpush.msra.mxu0 0.0
    %1761 = vmatpush.msra.mxu0 0.0
    %1762 = vmatpush.msra.mxu0 0.0
    %1763 = vmatpush.msra.mxu0 0.0
    %1764 = vmatpush.msra.mxu0 0.0
    %1765 = vmatpush.msra.mxu0 %v1564
    %1766 = vmatpush.msra.mxu0 %v1560
    %1767 = vmatpush.msra.mxu0 %v1556
    %1768 = vmatpush.msra.mxu0 %v1552
    %1769 = vmatmul.f32.gmra.mxu0 %v1711
    %v1770 = vpop.f32.mrf.mxu0
    %v1771 = vadd.f32 %v1688, %v1770
    %1772 = vdwg.mxu0
    %1773 = vmatpush.msra.mxu0 0.0
    %1774 = vmatpush.msra.mxu0 0.0
    %1775 = vmatpush.msra.mxu0 0.0
    %1776 = vmatpush.msra.mxu0 0.0
    %1777 = vmatpush.msra.mxu0 0.0
    %1778 = vmatpush.msra.mxu0 0.0
    %1779 = vmatpush.msra.mxu0 0.0
    %1780 = vmatpush.msra.mxu0 0.0
    %1781 = vmatpush.msra.mxu0 0.0
    %1782 = vmatpush.msra.mxu0 0.0
    %1783 = vmatpush.msra.mxu0 0.0
    %1784 = vmatpush.msra.mxu0 0.0
    %1785 = vmatpush.msra.mxu0 %v1565
    %1786 = vmatpush.msra.mxu0 %v1561
    %1787 = vmatpush.msra.mxu0 %v1557
    %1788 = vmatpush.msra.mxu0 %v1553
    %1789 = vmatmul.f32.gmra.mxu0 %v1711
    %v1790 = vpop.f32.mrf.mxu0
    %v1791 = vadd.f32 %v1708, %v1790
    %1792 = vdwg.mxu0
    %v1793 = vld [vmem:[%s10] sm:$0xf]
    %v1795 = vperm.slane %v1793, 0
    %v1796 = vperm.slane %v1793, 1
    %v1797 = vperm.slane %v1793, 2
    %v1798 = vperm.slane %v1793, 3
    %v1803 = vadd.f32 %v1731, %v1795
    %v1804 = vadd.f32 %v1751, %v1796
    %v1805 = vadd.f32 %v1771, %v1797
    %v1806 = vadd.f32 %v1791, %v1798
    %v1807 = vxor.u32 %v1803, 2147483648
    %v1808 = vmul.f32 %v1807, 1.442695
    %v1809 = vpow.pop %v1808
    %v1810 = vadd.f32 %v1809, 1.0
    %v1811 = vrcp.pop %v1810
    %v1812 = vmul.f32 %v1810, %v1811
    %v1813 = vsub.f32 1.0, %v1812
    %v1814 = vmul.f32 %v1811, %v1813
    %v1815 = vadd.f32 %v1811, %v1814
    %vm1816 = vweird.f32 %v1810
    %vm1817 = vweird.f32 %v1811
    %vm1818 = vmor %vm1816, %vm1817
    %v1819 = vsel %vm1818, %v1811, %v1815
    %v1820 = vand.u32 2147483647, %v1810
    %vm1821 = vcmp.eq.f32.partialorder %v1820, 8.507059e+37
    %v1822 = vand.u32 %v1810, 2147483648
    %v1823 = vor.u32 1.1754944e-38, %v1822
    %v1824 = vsel %vm1821, %v1823, %v1819
    %v1825 = vmul.f32 1.0, %v1824
    %v1826 = vxor.u32 %v1804, 2147483648
    %v1827 = vmul.f32 %v1826, 1.442695
    %v1828 = vpow.pop %v1827
    %v1829 = vadd.f32 %v1828, 1.0
    %v1830 = vrcp.pop %v1829
    %v1831 = vmul.f32 %v1829, %v1830
    %v1832 = vsub.f32 1.0, %v1831
    %v1833 = vmul.f32 %v1830, %v1832
    %v1834 = vadd.f32 %v1830, %v1833
    %vm1835 = vweird.f32 %v1829
    %vm1836 = vweird.f32 %v1830
    %vm1837 = vmor %vm1835, %vm1836
    %v1838 = vsel %vm1837, %v1830, %v1834
    %v1839 = vand.u32 2147483647, %v1829
    %vm1840 = vcmp.eq.f32.partialorder %v1839, 8.507059e+37
    %v1841 = vand.u32 %v1829, 2147483648
    %v1842 = vor.u32 1.1754944e-38, %v1841
    %v1843 = vsel %vm1840, %v1842, %v1838
    %v1844 = vmul.f32 1.0, %v1843
    %v1845 = vtanh.pop %v1805
    %v1846 = vxor.u32 %v1806, 2147483648
    %v1847 = vmul.f32 %v1846, 1.442695
    %v1848 = vpow.pop %v1847
    %v1849 = vadd.f32 %v1848, 1.0
    %v1850 = vrcp.pop %v1849
    %v1851 = vmul.f32 %v1849, %v1850
    %v1852 = vsub.f32 1.0, %v1851
    %v1853 = vmul.f32 %v1850, %v1852
    %v1854 = vadd.f32 %v1850, %v1853
    %vm1855 = vweird.f32 %v1849
    %vm1856 = vweird.f32 %v1850
    %vm1857 = vmor %vm1855, %vm1856
    %v1858 = vsel %vm1857, %v1850, %v1854
    %v1859 = vand.u32 2147483647, %v1849
    %vm1860 = vcmp.eq.f32.partialorder %v1859, 8.507059e+37
    %v1861 = vand.u32 %v1849, 2147483648
    %v1862 = vor.u32 1.1754944e-38, %v1861
    %v1863 = vsel %vm1860, %v1862, %v1858
    %v1864 = vmul.f32 1.0, %v1863
    %v1865 = vmul.f32 %v1844, %v1451
    %v1866 = vmul.f32 %v1825, %v1845
    %v1867 = vadd.f32 %v1865, %v1866
    %v1868 = vtanh.pop %v1867
    %v1869 = vmul.f32 %v1864, %v1868
    %v1870 = vld [vmem:[#allocation11] sm:$0xff]
    %v1871 = vld [vmem:[#allocation11 + $0x8] sm:$0xff]
    %v1872 = vld [vmem:[#allocation11 + $0x10] sm:$0xff]
    %v1873 = vld [vmem:[#allocation11 + $0x18] sm:$0xff]
    %v1874 = vld [vmem:[#allocation11 + $0x20] sm:$0xff]
    %v1875 = vld [vmem:[#allocation11 + $0x28] sm:$0xff]
    %v1876 = vld [vmem:[#allocation11 + $0x30] sm:$0xff]
    %v1877 = vld [vmem:[#allocation11 + $0x38] sm:$0xff]
    %v1878 = vld [vmem:[#allocation11 + $0x40] sm:$0xff]
    %v1879 = vld [vmem:[#allocation11 + $0x48] sm:$0xff]
    %v1880 = vld [vmem:[#allocation11 + $0x50] sm:$0xff]
    %v1881 = vld [vmem:[#allocation11 + $0x58] sm:$0xff]
    %v1882 = vld [vmem:[#allocation11 + $0x60] sm:$0xff]
    %v1883 = vld [vmem:[#allocation11 + $0x68] sm:$0xff]
    %v1884 = vld [vmem:[#allocation11 + $0x70] sm:$0xff]
    %v1885 = vld [vmem:[#allocation11 + $0x78] sm:$0xff]
    %v1886 = vld [vmem:[%s14] sm:$0x1]
    %v1888 = vperm.slane %v1886, 0
    %1890 = vmatpush.msra.mxu0 %v1885
    %1891 = vmatpush.msra.mxu0 %v1884
    %1892 = vmatpush.msra.mxu0 %v1883
    %1893 = vmatpush.msra.mxu0 %v1882
    %1894 = vmatpush.msra.mxu0 %v1881
    %1895 = vmatpush.msra.mxu0 %v1880
    %1896 = vmatpush.msra.mxu0 %v1879
    %1897 = vmatpush.msra.mxu0 %v1878
    %1898 = vmatpush.msra.mxu0 %v1877
    %1899 = vmatpush.msra.mxu0 %v1876
    %1900 = vmatpush.msra.mxu0 %v1875
    %1901 = vmatpush.msra.mxu0 %v1874
    %1902 = vmatpush.msra.mxu0 %v1873
    %1903 = vmatpush.msra.mxu0 %v1872
    %1904 = vmatpush.msra.mxu0 %v1871
    %1905 = vmatpush.msra.mxu0 %v1870
    %1906 = vmatmul.f32.gmra.mxu0 %v1869
    %v1907 = vpop.f32.mrf.mxu0
    %v1908 = vadd.f32 %v1888, %v1907
    %1909 = vdwg.mxu0
    %v1910 = vxor.u32 %v1908, 2147483648
    %v1911 = vmul.f32 %v1910, 1.442695
    %v1912 = vpow.pop %v1911
    %v1913 = vadd.f32 %v1912, 1.0
    %v1914 = vrcp.pop %v1913
    %v1915 = vmul.f32 %v1913, %v1914
    %v1916 = vsub.f32 1.0, %v1915
    %v1917 = vmul.f32 %v1914, %v1916
    %v1918 = vadd.f32 %v1914, %v1917
    %vm1919 = vweird.f32 %v1913
    %vm1920 = vweird.f32 %v1914
    %vm1921 = vmor %vm1919, %vm1920
    %v1922 = vsel %vm1921, %v1914, %v1918
    %v1923 = vand.u32 2147483647, %v1913
    %vm1924 = vcmp.eq.f32.partialorder %v1923, 8.507059e+37
    %v1925 = vand.u32 %v1913, 2147483648
    %v1926 = vor.u32 1.1754944e-38, %v1925
    %v1927 = vsel %vm1924, %v1926, %v1922
    %v1928 = vmul.f32 1.0, %v1927
    %v1929 = vmul.f32 %v1928, 0.2
    %v1930 = vadd.f32 %v1929, 0.01
    %v1931 = vmul.f32 %v1928, 0.7
    %v1932 = vsel %vm575, %v1930, %v1931
    %v1933 = vsel %vm574, %v1908, %v1932
    %v1934 = vsel %vm1516, 1, 0
    %1935 = vset.pattern.permute.xlu0 0
    %1936 = vperm.xlu0 %1935, %v1934
    %v1937 = vpop.permute.xlu0 %1936
    %vm1938 = vcmp.eq.s32.totalorder %v1937, 1
    %v1939 = vsel %vm1938, %v1869, %v1503
    %v1940 = vsel %vm1938, %v1867, %v1451
    %v1941 = vsel %vm1938, %v1933, nan
    %v1942 = vadd.f32 %v1453, %v1941
    %s1943 = scalar_lea.vmem [#allocation13], 24
    %1944 = vst [vmem:[%s1943] sm:$0xff] %v1941
    %s1945 = scalar_lea.vmem %s16, 24
    %1946 = vst.msk [vmem:[%s1945] sm:$0xff] %vm163, %v1942
    %s1947 = scalar_lea.vmem [#allocation14], 8
    %1948 = vst [vmem:[%s1947] sm:$0xff] %v1939
    %vm1949 = vcmp.ne.f32.partialorder %v1942, %v1942
    %vm1950 = vmor %vm1514, %vm1949
    %vm1951 = vmxor %vm1950, 1
    %v1952 = vsub.f32 %v1942, %v1453
    %v1953 = vld [vmem:[%s3] sm:$0x3]
    %v1954 = vld [vmem:[%s4] sm:$0x1]
    %v1956 = vperm.slane %v1954, 0
    %v1959 = vsel %vm163, %v1952, 0
    %v1962 = vsel %vm167, %v1953, 0
    %1964 = vmatpush.msra.mxu0 0.0
    %1965 = vmatpush.msra.mxu0 0.0
    %1966 = vmatpush.msra.mxu0 0.0
    %1967 = vmatpush.msra.mxu0 0.0
    %1968 = vmatpush.msra.mxu0 0.0
    %1969 = vmatpush.msra.mxu0 0.0
    %1970 = vmatpush.msra.mxu0 0.0
    %1971 = vmatpush.msra.mxu0 0.0
    %1972 = vmatpush.msra.mxu0 0.0
    %1973 = vmatpush.msra.mxu0 0.0
    %1974 = vmatpush.msra.mxu0 0.0
    %1975 = vmatpush.msra.mxu0 0.0
    %1976 = vmatpush.msra.mxu0 0.0
    %1977 = vmatpush.msra.mxu0 0.0
    %1978 = vmatpush.msra.mxu0 0.0
    %1979 = vmatpush.msra.mxu0 %v1962
    %1980 = vmatmul.f32.gmra.mxu0 %v1959
    %v1981 = vpop.f32.mrf.mxu0
    %v1982 = vadd.f32 %v1956, %v1981
    %1983 = vdwg.mxu0
    %v1984 = vmax.f32 %v1982, 0.0
    %v1985 = vld [vmem:[#allocation7] sm:$0xff]
    %v1986 = vld [vmem:[#allocation7 + $0x8] sm:$0xff]
    %v1987 = vld [vmem:[#allocation7 + $0x10] sm:$0xff]
    %v1988 = vld [vmem:[#allocation7 + $0x18] sm:$0xff]
    %v1989 = vld [vmem:[#allocation7 + $0x20] sm:$0xff]
    %v1990 = vld [vmem:[#allocation7 + $0x28] sm:$0xff]
    %v1991 = vld [vmem:[#allocation7 + $0x30] sm:$0xff]
    %v1992 = vld [vmem:[#allocation7 + $0x38] sm:$0xff]
    %v1993 = vld [vmem:[#allocation7 + $0x40] sm:$0xff]
    %v1994 = vld [vmem:[#allocation7 + $0x48] sm:$0xff]
    %v1995 = vld [vmem:[#allocation7 + $0x50] sm:$0xff]
    %v1996 = vld [vmem:[#allocation7 + $0x58] sm:$0xff]
    %v1997 = vld [vmem:[#allocation7 + $0x60] sm:$0xff]
    %v1998 = vld [vmem:[#allocation7 + $0x68] sm:$0xff]
    %v1999 = vld [vmem:[#allocation7 + $0x70] sm:$0xff]
    %v2000 = vld [vmem:[#allocation7 + $0x78] sm:$0xff]
    %v2001 = vld [vmem:[#allocation8] sm:$0xff]
    %v2002 = vld [vmem:[#allocation8 + $0x8] sm:$0xff]
    %v2003 = vld [vmem:[#allocation8 + $0x10] sm:$0xff]
    %v2004 = vld [vmem:[#allocation8 + $0x18] sm:$0xff]
    %v2005 = vld [vmem:[#allocation8 + $0x20] sm:$0xff]
    %v2006 = vld [vmem:[#allocation8 + $0x28] sm:$0xff]
    %v2007 = vld [vmem:[#allocation8 + $0x30] sm:$0xff]
    %v2008 = vld [vmem:[#allocation8 + $0x38] sm:$0xff]
    %v2009 = vld [vmem:[#allocation8 + $0x40] sm:$0xff]
    %v2010 = vld [vmem:[#allocation8 + $0x48] sm:$0xff]
    %v2011 = vld [vmem:[#allocation8 + $0x50] sm:$0xff]
    %v2012 = vld [vmem:[#allocation8 + $0x58] sm:$0xff]
    %v2013 = vld [vmem:[#allocation8 + $0x60] sm:$0xff]
    %v2014 = vld [vmem:[#allocation8 + $0x68] sm:$0xff]
    %v2015 = vld [vmem:[#allocation8 + $0x70] sm:$0xff]
    %v2016 = vld [vmem:[#allocation8 + $0x78] sm:$0xff]
    %v2017 = vld [vmem:[#allocation8 + $0x80] sm:$0xff]
    %v2018 = vld [vmem:[#allocation8 + $0x88] sm:$0xff]
    %v2019 = vld [vmem:[#allocation8 + $0x90] sm:$0xff]
    %v2020 = vld [vmem:[#allocation8 + $0x98] sm:$0xff]
    %v2021 = vld [vmem:[#allocation8 + $0xa0] sm:$0xff]
    %v2022 = vld [vmem:[#allocation8 + $0xa8] sm:$0xff]
    %v2023 = vld [vmem:[#allocation8 + $0xb0] sm:$0xff]
    %v2024 = vld [vmem:[#allocation8 + $0xb8] sm:$0xff]
    %v2025 = vld [vmem:[#allocation8 + $0xc0] sm:$0xff]
    %v2026 = vld [vmem:[#allocation8 + $0xc8] sm:$0xff]
    %v2027 = vld [vmem:[#allocation8 + $0xd0] sm:$0xff]
    %v2028 = vld [vmem:[#allocation8 + $0xd8] sm:$0xff]
    %v2029 = vld [vmem:[#allocation8 + $0xe0] sm:$0xff]
    %v2030 = vld [vmem:[#allocation8 + $0xe8] sm:$0xff]
    %v2031 = vld [vmem:[#allocation8 + $0xf0] sm:$0xff]
    %v2032 = vld [vmem:[#allocation8 + $0xf8] sm:$0xff]
    %v2033 = vld [vmem:[#allocation8 + $0x100] sm:$0xff]
    %v2034 = vld [vmem:[#allocation8 + $0x108] sm:$0xff]
    %v2035 = vld [vmem:[#allocation8 + $0x110] sm:$0xff]
    %v2036 = vld [vmem:[#allocation8 + $0x118] sm:$0xff]
    %v2037 = vld [vmem:[#allocation8 + $0x120] sm:$0xff]
    %v2038 = vld [vmem:[#allocation8 + $0x128] sm:$0xff]
    %v2039 = vld [vmem:[#allocation8 + $0x130] sm:$0xff]
    %v2040 = vld [vmem:[#allocation8 + $0x138] sm:$0xff]
    %v2041 = vld [vmem:[#allocation8 + $0x140] sm:$0xff]
    %v2042 = vld [vmem:[#allocation8 + $0x148] sm:$0xff]
    %v2043 = vld [vmem:[#allocation8 + $0x150] sm:$0xff]
    %v2044 = vld [vmem:[#allocation8 + $0x158] sm:$0xff]
    %v2045 = vld [vmem:[#allocation8 + $0x160] sm:$0xff]
    %v2046 = vld [vmem:[#allocation8 + $0x168] sm:$0xff]
    %v2047 = vld [vmem:[#allocation8 + $0x170] sm:$0xff]
    %v2048 = vld [vmem:[#allocation8 + $0x178] sm:$0xff]
    %v2049 = vld [vmem:[#allocation8 + $0x180] sm:$0xff]
    %v2050 = vld [vmem:[#allocation8 + $0x188] sm:$0xff]
    %v2051 = vld [vmem:[#allocation8 + $0x190] sm:$0xff]
    %v2052 = vld [vmem:[#allocation8 + $0x198] sm:$0xff]
    %v2053 = vld [vmem:[#allocation8 + $0x1a0] sm:$0xff]
    %v2054 = vld [vmem:[#allocation8 + $0x1a8] sm:$0xff]
    %v2055 = vld [vmem:[#allocation8 + $0x1b0] sm:$0xff]
    %v2056 = vld [vmem:[#allocation8 + $0x1b8] sm:$0xff]
    %v2057 = vld [vmem:[#allocation8 + $0x1c0] sm:$0xff]
    %v2058 = vld [vmem:[#allocation8 + $0x1c8] sm:$0xff]
    %v2059 = vld [vmem:[#allocation8 + $0x1d0] sm:$0xff]
    %v2060 = vld [vmem:[#allocation8 + $0x1d8] sm:$0xff]
    %v2061 = vld [vmem:[#allocation8 + $0x1e0] sm:$0xff]
    %v2062 = vld [vmem:[#allocation8 + $0x1e8] sm:$0xff]
    %v2063 = vld [vmem:[#allocation8 + $0x1f0] sm:$0xff]
    %v2064 = vld [vmem:[#allocation8 + $0x1f8] sm:$0xff]
    %2065 = vmatpush.msra.mxu0 %v2061
    %2066 = vmatpush.msra.mxu0 %v2057
    %2067 = vmatpush.msra.mxu0 %v2053
    %2068 = vmatpush.msra.mxu0 %v2049
    %2069 = vmatpush.msra.mxu0 %v2045
    %2070 = vmatpush.msra.mxu0 %v2041
    %2071 = vmatpush.msra.mxu0 %v2037
    %2072 = vmatpush.msra.mxu0 %v2033
    %2073 = vmatpush.msra.mxu0 %v2029
    %2074 = vmatpush.msra.mxu0 %v2025
    %2075 = vmatpush.msra.mxu0 %v2021
    %2076 = vmatpush.msra.mxu0 %v2017
    %2077 = vmatpush.msra.mxu0 %v2013
    %2078 = vmatpush.msra.mxu0 %v2009
    %2079 = vmatpush.msra.mxu0 %v2005
    %2080 = vmatpush.msra.mxu0 %v2001
    %2081 = vmatmul.f32.gmra.mxu0 %v1939
    %v2082 = vpop.f32.mrf.mxu0
    %v2083 = vadd.f32 0.0, %v2082
    %2084 = vdwg.mxu0
    %2085 = vmatpush.msra.mxu0 %v2062
    %2086 = vmatpush.msra.mxu0 %v2058
    %2087 = vmatpush.msra.mxu0 %v2054
    %2088 = vmatpush.msra.mxu0 %v2050
    %2089 = vmatpush.msra.mxu0 %v2046
    %2090 = vmatpush.msra.mxu0 %v2042
    %2091 = vmatpush.msra.mxu0 %v2038
    %2092 = vmatpush.msra.mxu0 %v2034
    %2093 = vmatpush.msra.mxu0 %v2030
    %2094 = vmatpush.msra.mxu0 %v2026
    %2095 = vmatpush.msra.mxu0 %v2022
    %2096 = vmatpush.msra.mxu0 %v2018
    %2097 = vmatpush.msra.mxu0 %v2014
    %2098 = vmatpush.msra.mxu0 %v2010
    %2099 = vmatpush.msra.mxu0 %v2006
    %2100 = vmatpush.msra.mxu0 %v2002
    %2101 = vmatmul.f32.gmra.mxu0 %v1939
    %v2102 = vpop.f32.mrf.mxu0
    %v2103 = vadd.f32 0.0, %v2102
    %2104 = vdwg.mxu0
    %2105 = vmatpush.msra.mxu0 %v2063
    %2106 = vmatpush.msra.mxu0 %v2059
    %2107 = vmatpush.msra.mxu0 %v2055
    %2108 = vmatpush.msra.mxu0 %v2051
    %2109 = vmatpush.msra.mxu0 %v2047
    %2110 = vmatpush.msra.mxu0 %v2043
    %2111 = vmatpush.msra.mxu0 %v2039
    %2112 = vmatpush.msra.mxu0 %v2035
    %2113 = vmatpush.msra.mxu0 %v2031
    %2114 = vmatpush.msra.mxu0 %v2027
    %2115 = vmatpush.msra.mxu0 %v2023
    %2116 = vmatpush.msra.mxu0 %v2019
    %2117 = vmatpush.msra.mxu0 %v2015
    %2118 = vmatpush.msra.mxu0 %v2011
    %2119 = vmatpush.msra.mxu0 %v2007
    %2120 = vmatpush.msra.mxu0 %v2003
    %2121 = vmatmul.f32.gmra.mxu0 %v1939
    %v2122 = vpop.f32.mrf.mxu0
    %v2123 = vadd.f32 0.0, %v2122
    %2124 = vdwg.mxu0
    %2125 = vmatpush.msra.mxu0 %v2064
    %2126 = vmatpush.msra.mxu0 %v2060
    %2127 = vmatpush.msra.mxu0 %v2056
    %2128 = vmatpush.msra.mxu0 %v2052
    %2129 = vmatpush.msra.mxu0 %v2048
    %2130 = vmatpush.msra.mxu0 %v2044
    %2131 = vmatpush.msra.mxu0 %v2040
    %2132 = vmatpush.msra.mxu0 %v2036
    %2133 = vmatpush.msra.mxu0 %v2032
    %2134 = vmatpush.msra.mxu0 %v2028
    %2135 = vmatpush.msra.mxu0 %v2024
    %2136 = vmatpush.msra.mxu0 %v2020
    %2137 = vmatpush.msra.mxu0 %v2016
    %2138 = vmatpush.msra.mxu0 %v2012
    %2139 = vmatpush.msra.mxu0 %v2008
    %2140 = vmatpush.msra.mxu0 %v2004
    %2141 = vmatmul.f32.gmra.mxu0 %v1939
    %v2142 = vpop.f32.mrf.mxu0
    %v2143 = vadd.f32 0.0, %v2142
    %2144 = vdwg.mxu0
    %v2146 = vsel %vm352, %v1984, 0
    %2148 = vmatpush.msra.mxu0 0.0
    %2149 = vmatpush.msra.mxu0 0.0
    %2150 = vmatpush.msra.mxu0 0.0
    %2151 = vmatpush.msra.mxu0 0.0
    %2152 = vmatpush.msra.mxu0 0.0
    %2153 = vmatpush.msra.mxu0 0.0
    %2154 = vmatpush.msra.mxu0 0.0
    %2155 = vmatpush.msra.mxu0 0.0
    %2156 = vmatpush.msra.mxu0 0.0
    %2157 = vmatpush.msra.mxu0 0.0
    %2158 = vmatpush.msra.mxu0 0.0
    %2159 = vmatpush.msra.mxu0 0.0
    %2160 = vmatpush.msra.mxu0 %v1997
    %2161 = vmatpush.msra.mxu0 %v1993
    %2162 = vmatpush.msra.mxu0 %v1989
    %2163 = vmatpush.msra.mxu0 %v1985
    %2164 = vmatmul.f32.gmra.mxu0 %v2146
    %v2165 = vpop.f32.mrf.mxu0
    %v2166 = vadd.f32 %v2083, %v2165
    %2167 = vdwg.mxu0
    %2168 = vmatpush.msra.mxu0 0.0
    %2169 = vmatpush.msra.mxu0 0.0
    %2170 = vmatpush.msra.mxu0 0.0
    %2171 = vmatpush.msra.mxu0 0.0
    %2172 = vmatpush.msra.mxu0 0.0
    %2173 = vmatpush.msra.mxu0 0.0
    %2174 = vmatpush.msra.mxu0 0.0
    %2175 = vmatpush.msra.mxu0 0.0
    %2176 = vmatpush.msra.mxu0 0.0
    %2177 = vmatpush.msra.mxu0 0.0
    %2178 = vmatpush.msra.mxu0 0.0
    %2179 = vmatpush.msra.mxu0 0.0
    %2180 = vmatpush.msra.mxu0 %v1998
    %2181 = vmatpush.msra.mxu0 %v1994
    %2182 = vmatpush.msra.mxu0 %v1990
    %2183 = vmatpush.msra.mxu0 %v1986
    %2184 = vmatmul.f32.gmra.mxu0 %v2146
    %v2185 = vpop.f32.mrf.mxu0
    %v2186 = vadd.f32 %v2103, %v2185
    %2187 = vdwg.mxu0
    %2188 = vmatpush.msra.mxu0 0.0
    %2189 = vmatpush.msra.mxu0 0.0
    %2190 = vmatpush.msra.mxu0 0.0
    %2191 = vmatpush.msra.mxu0 0.0
    %2192 = vmatpush.msra.mxu0 0.0
    %2193 = vmatpush.msra.mxu0 0.0
    %2194 = vmatpush.msra.mxu0 0.0
    %2195 = vmatpush.msra.mxu0 0.0
    %2196 = vmatpush.msra.mxu0 0.0
    %2197 = vmatpush.msra.mxu0 0.0
    %2198 = vmatpush.msra.mxu0 0.0
    %2199 = vmatpush.msra.mxu0 0.0
    %2200 = vmatpush.msra.mxu0 %v1999
    %2201 = vmatpush.msra.mxu0 %v1995
    %2202 = vmatpush.msra.mxu0 %v1991
    %2203 = vmatpush.msra.mxu0 %v1987
    %2204 = vmatmul.f32.gmra.mxu0 %v2146
    %v2205 = vpop.f32.mrf.mxu0
    %v2206 = vadd.f32 %v2123, %v2205
    %2207 = vdwg.mxu0
    %2208 = vmatpush.msra.mxu0 0.0
    %2209 = vmatpush.msra.mxu0 0.0
    %2210 = vmatpush.msra.mxu0 0.0
    %2211 = vmatpush.msra.mxu0 0.0
    %2212 = vmatpush.msra.mxu0 0.0
    %2213 = vmatpush.msra.mxu0 0.0
    %2214 = vmatpush.msra.mxu0 0.0
    %2215 = vmatpush.msra.mxu0 0.0
    %2216 = vmatpush.msra.mxu0 0.0
    %2217 = vmatpush.msra.mxu0 0.0
    %2218 = vmatpush.msra.mxu0 0.0
    %2219 = vmatpush.msra.mxu0 0.0
    %2220 = vmatpush.msra.mxu0 %v2000
    %2221 = vmatpush.msra.mxu0 %v1996
    %2222 = vmatpush.msra.mxu0 %v1992
    %2223 = vmatpush.msra.mxu0 %v1988
    %2224 = vmatmul.f32.gmra.mxu0 %v2146
    %v2225 = vpop.f32.mrf.mxu0
    %v2226 = vadd.f32 %v2143, %v2225
    %2227 = vdwg.mxu0
    %v2228 = vld [vmem:[%s10] sm:$0xf]
    %v2230 = vperm.slane %v2228, 0
    %v2231 = vperm.slane %v2228, 1
    %v2232 = vperm.slane %v2228, 2
    %v2233 = vperm.slane %v2228, 3
    %v2238 = vadd.f32 %v2166, %v2230
    %v2239 = vadd.f32 %v2186, %v2231
    %v2240 = vadd.f32 %v2206, %v2232
    %v2241 = vadd.f32 %v2226, %v2233
    %v2242 = vxor.u32 %v2238, 2147483648
    %v2243 = vmul.f32 %v2242, 1.442695
    %v2244 = vpow.pop %v2243
    %v2245 = vadd.f32 %v2244, 1.0
    %v2246 = vrcp.pop %v2245
    %v2247 = vmul.f32 %v2245, %v2246
    %v2248 = vsub.f32 1.0, %v2247
    %v2249 = vmul.f32 %v2246, %v2248
    %v2250 = vadd.f32 %v2246, %v2249
    %vm2251 = vweird.f32 %v2245
    %vm2252 = vweird.f32 %v2246
    %vm2253 = vmor %vm2251, %vm2252
    %v2254 = vsel %vm2253, %v2246, %v2250
    %v2255 = vand.u32 2147483647, %v2245
    %vm2256 = vcmp.eq.f32.partialorder %v2255, 8.507059e+37
    %v2257 = vand.u32 %v2245, 2147483648
    %v2258 = vor.u32 1.1754944e-38, %v2257
    %v2259 = vsel %vm2256, %v2258, %v2254
    %v2260 = vmul.f32 1.0, %v2259
    %v2261 = vxor.u32 %v2239, 2147483648
    %v2262 = vmul.f32 %v2261, 1.442695
    %v2263 = vpow.pop %v2262
    %v2264 = vadd.f32 %v2263, 1.0
    %v2265 = vrcp.pop %v2264
    %v2266 = vmul.f32 %v2264, %v2265
    %v2267 = vsub.f32 1.0, %v2266
    %v2268 = vmul.f32 %v2265, %v2267
    %v2269 = vadd.f32 %v2265, %v2268
    %vm2270 = vweird.f32 %v2264
    %vm2271 = vweird.f32 %v2265
    %vm2272 = vmor %vm2270, %vm2271
    %v2273 = vsel %vm2272, %v2265, %v2269
    %v2274 = vand.u32 2147483647, %v2264
    %vm2275 = vcmp.eq.f32.partialorder %v2274, 8.507059e+37
    %v2276 = vand.u32 %v2264, 2147483648
    %v2277 = vor.u32 1.1754944e-38, %v2276
    %v2278 = vsel %vm2275, %v2277, %v2273
    %v2279 = vmul.f32 1.0, %v2278
    %v2280 = vtanh.pop %v2240
    %v2281 = vxor.u32 %v2241, 2147483648
    %v2282 = vmul.f32 %v2281, 1.442695
    %v2283 = vpow.pop %v2282
    %v2284 = vadd.f32 %v2283, 1.0
    %v2285 = vrcp.pop %v2284
    %v2286 = vmul.f32 %v2284, %v2285
    %v2287 = vsub.f32 1.0, %v2286
    %v2288 = vmul.f32 %v2285, %v2287
    %v2289 = vadd.f32 %v2285, %v2288
    %vm2290 = vweird.f32 %v2284
    %vm2291 = vweird.f32 %v2285
    %vm2292 = vmor %vm2290, %vm2291
    %v2293 = vsel %vm2292, %v2285, %v2289
    %v2294 = vand.u32 2147483647, %v2284
    %vm2295 = vcmp.eq.f32.partialorder %v2294, 8.507059e+37
    %v2296 = vand.u32 %v2284, 2147483648
    %v2297 = vor.u32 1.1754944e-38, %v2296
    %v2298 = vsel %vm2295, %v2297, %v2293
    %v2299 = vmul.f32 1.0, %v2298
    %v2300 = vmul.f32 %v2279, %v1940
    %v2301 = vmul.f32 %v2260, %v2280
    %v2302 = vadd.f32 %v2300, %v2301
    %v2303 = vtanh.pop %v2302
    %v2304 = vmul.f32 %v2299, %v2303
    %v2305 = vld [vmem:[#allocation11] sm:$0xff]
    %v2306 = vld [vmem:[#allocation11 + $0x8] sm:$0xff]
    %v2307 = vld [vmem:[#allocation11 + $0x10] sm:$0xff]
    %v2308 = vld [vmem:[#allocation11 + $0x18] sm:$0xff]
    %v2309 = vld [vmem:[#allocation11 + $0x20] sm:$0xff]
    %v2310 = vld [vmem:[#allocation11 + $0x28] sm:$0xff]
    %v2311 = vld [vmem:[#allocation11 + $0x30] sm:$0xff]
    %v2312 = vld [vmem:[#allocation11 + $0x38] sm:$0xff]
    %v2313 = vld [vmem:[#allocation11 + $0x40] sm:$0xff]
    %v2314 = vld [vmem:[#allocation11 + $0x48] sm:$0xff]
    %v2315 = vld [vmem:[#allocation11 + $0x50] sm:$0xff]
    %v2316 = vld [vmem:[#allocation11 + $0x58] sm:$0xff]
    %v2317 = vld [vmem:[#allocation11 + $0x60] sm:$0xff]
    %v2318 = vld [vmem:[#allocation11 + $0x68] sm:$0xff]
    %v2319 = vld [vmem:[#allocation11 + $0x70] sm:$0xff]
    %v2320 = vld [vmem:[#allocation11 + $0x78] sm:$0xff]
    %v2321 = vld [vmem:[%s14] sm:$0x1]
    %v2323 = vperm.slane %v2321, 0
    %2325 = vmatpush.msra.mxu0 %v2320
    %2326 = vmatpush.msra.mxu0 %v2319
    %2327 = vmatpush.msra.mxu0 %v2318
    %2328 = vmatpush.msra.mxu0 %v2317
    %2329 = vmatpush.msra.mxu0 %v2316
    %2330 = vmatpush.msra.mxu0 %v2315
    %2331 = vmatpush.msra.mxu0 %v2314
    %2332 = vmatpush.msra.mxu0 %v2313
    %2333 = vmatpush.msra.mxu0 %v2312
    %2334 = vmatpush.msra.mxu0 %v2311
    %2335 = vmatpush.msra.mxu0 %v2310
    %2336 = vmatpush.msra.mxu0 %v2309
    %2337 = vmatpush.msra.mxu0 %v2308
    %2338 = vmatpush.msra.mxu0 %v2307
    %2339 = vmatpush.msra.mxu0 %v2306
    %2340 = vmatpush.msra.mxu0 %v2305
    %2341 = vmatmul.f32.gmra.mxu0 %v2304
    %v2342 = vpop.f32.mrf.mxu0
    %v2343 = vadd.f32 %v2323, %v2342
    %2344 = vdwg.mxu0
    %v2345 = vxor.u32 %v2343, 2147483648
    %v2346 = vmul.f32 %v2345, 1.442695
    %v2347 = vpow.pop %v2346
    %v2348 = vadd.f32 %v2347, 1.0
    %v2349 = vrcp.pop %v2348
    %v2350 = vmul.f32 %v2348, %v2349
    %v2351 = vsub.f32 1.0, %v2350
    %v2352 = vmul.f32 %v2349, %v2351
    %v2353 = vadd.f32 %v2349, %v2352
    %vm2354 = vweird.f32 %v2348
    %vm2355 = vweird.f32 %v2349
    %vm2356 = vmor %vm2354, %vm2355
    %v2357 = vsel %vm2356, %v2349, %v2353
    %v2358 = vand.u32 2147483647, %v2348
    %vm2359 = vcmp.eq.f32.partialorder %v2358, 8.507059e+37
    %v2360 = vand.u32 %v2348, 2147483648
    %v2361 = vor.u32 1.1754944e-38, %v2360
    %v2362 = vsel %vm2359, %v2361, %v2357
    %v2363 = vmul.f32 1.0, %v2362
    %v2364 = vmul.f32 %v2363, 0.2
    %v2365 = vadd.f32 %v2364, 0.01
    %v2366 = vmul.f32 %v2363, 0.7
    %v2367 = vsel %vm575, %v2365, %v2366
    %v2368 = vsel %vm574, %v2343, %v2367
    %v2369 = vsel %vm1951, 1, 0
    %2370 = vset.pattern.permute.xlu0 0
    %2371 = vperm.xlu0 %2370, %v2369
    %v2372 = vpop.permute.xlu0 %2371
    %vm2373 = vcmp.eq.s32.totalorder %v2372, 1
    %v2374 = vsel %vm2373, %v2304, %v1939
    %v2375 = vsel %vm2373, %v2368, nan
    %v2376 = vadd.f32 %v1942, %v2375
    %s2377 = scalar_lea.vmem [#allocation13], 32
    %2378 = vst [vmem:[%s2377] sm:$0xff] %v2375
    %s2379 = scalar_lea.vmem %s16, 32
    %2380 = vst.msk [vmem:[%s2379] sm:$0xff] %vm163, %v2376
    %s2381 = scalar_lea.vmem [#allocation14], 16
    %2382 = vst [vmem:[%s2381] sm:$0xff] %v2374
    // Predicated region
    $region86: #{tpu_custom_call.1} parent=1 // pred_check
      _
    $region87: #{tpu_custom_call.1} parent=1 // pred_check_branch
      %2384 = sbr.rel (0) target = $region89
    $region88: #{tpu_custom_call.1} parent=1 // pred_region
      %2386 = vsyncadd [#allocation4], 0
      %s2387 = sshll.u32 [#allocation13], 4
      %s2388 = int_to_ptr.vmem [resolvable:$true] %s2387
      %s2389 = sshll.u32 %s15, 4
      %s2390 = int_to_ptr.hbm [resolvable:$true] %s2389
      %2395 = dma.vmem_to_hbm [thread:$0]  %s2388, 640, %s2390, [#allocation4], 128, 128, 8
    $region89: #{tpu_custom_call.1} parent=1 // pred_fallthru
      _
    // Predicated region
    $region90: #{tpu_custom_call.1} parent=1 // pred_check
      _
    $region91: #{tpu_custom_call.1} parent=1 // pred_check_branch
      %2397 = sbr.rel (0) target = $region93
    $region92: #{tpu_custom_call.1} parent=1 // pred_region
      _
    $region93: #{tpu_custom_call.1} parent=1 // pred_fallthru
      _
    // Predicated region
    $region94: #{tpu_custom_call.1} parent=1 // pred_check
      _
    $region95: #{tpu_custom_call.1} parent=1 // pred_check_branch
      %2399 = sbr.rel (0) target = $region97
    $region96: #{tpu_custom_call.1} parent=1 // pred_region
      %2401 = vsyncadd [#allocation15], 0
      %s2402 = sshll.u32 [#allocation14], 4
      %s2403 = int_to_ptr.vmem [resolvable:$true] %s2402
      %s2404 = sshll.u32 %s17, 4
      %s2405 = int_to_ptr.hbm [resolvable:$true] %s2404
      %2410 = dma.vmem_to_hbm [thread:$0]  %s2403, 384, %s2405, [#allocation15], 128, 128, 8
    $region97: #{tpu_custom_call.1} parent=1 // pred_fallthru
      _
    // Predicated region
    $region98: #{tpu_custom_call.1} parent=1 // pred_check
      _
    $region99: #{tpu_custom_call.1} parent=1 // pred_check_branch
      %2412 = sbr.rel (0) target = $region101
    $region100: #{tpu_custom_call.1} parent=1 // pred_region
      %2414 = dma.done [#allocation4], 640
    $region101: #{tpu_custom_call.1} parent=1 // pred_fallthru
      _
    // Predicated region
    $region102: #{tpu_custom_call.1} parent=1 // pred_check
      _
    $region103: #{tpu_custom_call.1} parent=1 // pred_check_branch
      %2416 = sbr.rel (0) target = $region105
    $region104: #{tpu_custom_call.1} parent=1 // pred_region
      _
    $region105: #{tpu_custom_call.1} parent=1 // pred_fallthru
      _
    // Predicated region
    $region106: #{tpu_custom_call.1} parent=1 // pred_check
      _
    $region107: #{tpu_custom_call.1} parent=1 // pred_check_branch
      %2418 = sbr.rel (0) target = $region109
    $region108: #{tpu_custom_call.1} parent=1 // pred_region
      %2420 = dma.done [#allocation15], 384
    $region109: #{tpu_custom_call.1} parent=1 // pred_fallthru
      _
    %2421 = vsyncpa [#allocation3], 1
    %2422 = vsyncpa [#allocation6], 1
    %2423 = vsyncpa [#allocation9], 1
    %2424 = vsyncpa [#allocation12], 1
    %2425 = vsyncpa [#allocation4], 1
    %2426 = vsyncpa [#allocation15], 1

</llo_original>
